<compile_context>
chip_gen: v6e
topology: v6e:2x2x1
jax: 0.10.0
libtpu: 0.0.40
codegen_flags: <defaults>
</compile_context>

<pallas_src>
import functools
import math

import jax
import jax.numpy as jnp
from jax import lax
from jax.experimental import pallas as pl
from jax.experimental.pallas import tpu as pltpu


def _mdsc_kernel(xf_ref, w_ref, b_ref, o_ref, *, kmax, wpad, nout):
    """One batch element: fused dense conv via per-tap MXU accumulation.

    xf_ref: (C_in_pad, L)                  row-flattened zero-padded image
    w_ref : (kmax*kmax, C_out_pad, C_in_pad) fused per-tap weights
    b_ref : (C_out_pad, 1)                 fused bias
    o_ref : (C_out_pad, nout)              flat output rows (nout % 128 == 0)
    """
    x = xf_ref[...]                                      # loaded once (few vregs)
    acc = jnp.zeros(o_ref.shape, jnp.float32)            # lives in vregs
    for kh in range(kmax):
        for kw in range(kmax):
            t = kh * kmax + kw
            off = kh * wpad + kw
            a_tap = x[:, off:off + nout]                 # (C_in_pad, nout) static slice
            w_tap = w_ref[t]                             # (C_out_pad, C_in_pad)
            acc = acc + jnp.dot(w_tap, a_tap,
                                preferred_element_type=jnp.float32)
    o_ref[...] = (acc + b_ref[...]).astype(o_ref.dtype)  # bias in epilogue


def _fuse_weights(params, kernel_list, c_in, c_out, cin_pad, cout_pad,
                  dtype=jnp.float32):
    """Fold depthwise convs + concat + 1x1 conv into one dense conv (exact),
    zero-padded to (cout_pad, kmax, kmax, cin_pad)."""
    kmax = max(kernel_list)
    w_eff = jnp.zeros((cout_pad, kmax, kmax, cin_pad), dtype)
    b_eff = jnp.zeros((cout_pad,), dtype).at[:c_out].set(params["pw_b"].astype(dtype))
    w_pw = params["pw_w"].reshape(c_out, c_in * len(kernel_list)).astype(dtype)
    for idx, k in enumerate(kernel_list):
        w_dw = params[f"dw{k}_w"].reshape(c_in, k, k).astype(dtype)
        b_dw = params[f"dw{k}_b"].astype(dtype)
        w_pw_k = w_pw[:, idx * c_in:(idx + 1) * c_in]              # (C_out, C_in)
        # contrib[co, kh, kw, c] = w_pw_k[co, c] * w_dw[c, kh, kw]
        contrib = w_pw_k[:, None, None, :] * jnp.transpose(w_dw, (1, 2, 0))[None]
        off = (kmax - k) // 2
        w_eff = w_eff.at[:c_out, off:off + k, off:off + k, :c_in].add(contrib)
        b_eff = b_eff.at[:c_out].add(jnp.sum(w_pw_k * b_dw[None, :], axis=1))
    # per-tap layout: (kmax*kmax, C_out_pad, C_in_pad) -> leading-index loads
    w_taps = jnp.transpose(w_eff, (1, 2, 0, 3)).reshape(
        kmax * kmax, cout_pad, cin_pad)
    return w_taps, b_eff.reshape(cout_pad, 1)


def mdsc_forward(x_nchw, params, *, kernel_list=(3, 5)):
    n, c_in, h, w = x_nchw.shape
    c_out = params["pw_b"].shape[0]
    assert all(k % 2 == 1 for k in kernel_list), \
        "even kernel sizes need asymmetric 'same' padding"
    kmax = max(kernel_list)
    pad = (kmax - 1) // 2

    # --- alignment decisions (perf) ---
    cin_pad = pl.cdiv(c_in, 8) * 8            # full 8-sublane tap blocks
    cout_pad = pl.cdiv(c_out, 8) * 8          # sublane-aligned output rows
    wpad_min = w + 2 * pad
    step = 128 // math.gcd(h, 128)            # smallest wpad step with h*wpad % 128 == 0
    wpad = pl.cdiv(wpad_min, step) * step     # lane-dense output (unmasked vst)
    assert wpad >= kmax - 1, "tap in-bounds trick requires wpad >= kmax-1"
    hpad = h + 2 * pad + 1                    # +1 spare zero row: every tap slice of
    L = hpad * wpad                           #   the row tails stays in-bounds
    nout = h * wpad                           # flat outputs incl. junk right columns

    w_taps, b_eff = _fuse_weights(params, kernel_list, c_in, c_out,
                                  cin_pad, cout_pad)

    # Zero-pad once (channels -> cin_pad, spatial 'same' + alignment extras) and
    # row-flatten; stays NCHW, no transposes.
    xpad = jnp.pad(x_nchw.astype(jnp.float32),
                   ((0, 0), (0, cin_pad - c_in),
                    (pad, hpad - h - pad), (pad, wpad - w - pad)))
    xflat = xpad.reshape(n, cin_pad, L)

    kernel = functools.partial(_mdsc_kernel, kmax=kmax, wpad=wpad, nout=nout)

    out_flat = pl.pallas_call(
        kernel,
        out_shape=jax.ShapeDtypeStruct((n, cout_pad, nout), jnp.float32),
        grid=(n,),
        in_specs=[
            pl.BlockSpec((None, cin_pad, L), lambda b: (b, 0, 0)),
            pl.BlockSpec((kmax * kmax, cout_pad, cin_pad), lambda b: (0, 0, 0)),
            pl.BlockSpec((cout_pad, 1), lambda b: (0, 0)),
        ],
        out_specs=pl.BlockSpec((None, cout_pad, nout), lambda b: (b, 0, 0)),
        compiler_params=pltpu.CompilerParams(
            dimension_semantics=("parallel",)),
    )(xflat, w_taps, b_eff)

    # Drop padded output channels and junk columns; output is already NCHW.
    out = out_flat.reshape(n, cout_pad, h, wpad)[:, :c_out, :, :w]
    return out.astype(x_nchw.dtype)


def mdsc_reference(x_nchw, params, *, kernel_list=(3, 5)):
    """Pure-JAX reference matching the PyTorch MDSC forward exactly."""
    c_in = x_nchw.shape[1]
    outs = []
    for k in kernel_list:
        p = (k - 1) // 2
        o = lax.conv_general_dilated(
            x_nchw, params[f"dw{k}_w"], window_strides=(1, 1),
            padding=[(p, p), (p, p)],
            dimension_numbers=("NCHW", "OIHW", "NCHW"),
            feature_group_count=c_in, precision=lax.Precision.HIGHEST)
        outs.append(o + params[f"dw{k}_b"].reshape(1, -1, 1, 1))
    z = jnp.concatenate(outs, axis=1)
    o = lax.conv_general_dilated(
        z, params["pw_w"], window_strides=(1, 1), padding=[(0, 0), (0, 0)],
        dimension_numbers=("NCHW", "OIHW", "NCHW"),
        precision=lax.Precision.HIGHEST)
    return o + params["pw_b"].reshape(1, -1, 1, 1)


if __name__ == "__main__":
    N, C_in, C_out, H, W = 2, 4, 8, 16, 16
    kernel_list = (3, 5)

    keys = jax.random.split(jax.random.PRNGKey(0), 7)
    x = jax.random.normal(keys[0], (N, C_in, H, W), jnp.float32)
    params = {
        # shapes match the nn.Module exactly:
        #   depthwise Conv2d(C_in, C_in, k, groups=C_in): weight (C_in,1,k,k), bias (C_in,)
        #   pointwise Conv2d(2*C_in, C_out, 1):           weight (C_out,2*C_in,1,1), bias (C_out,)
        "dw3_w": 0.1 * jax.random.normal(keys[1], (C_in, 1, 3, 3), jnp.float32),
        "dw3_b": 0.1 * jax.random.normal(keys[2], (C_in,), jnp.float32),
        "dw5_w": 0.1 * jax.random.normal(keys[3], (C_in, 1, 5, 5), jnp.float32),
        "dw5_b": 0.1 * jax.random.normal(keys[4], (C_in,), jnp.float32),
        "pw_w": 0.1 * jax.random.normal(keys[5], (C_out, C_in * len(kernel_list), 1, 1),
                                        jnp.float32),
        "pw_b": 0.1 * jax.random.normal(keys[6], (C_out,), jnp.float32),
    }

    out = mdsc_forward(x, params, kernel_list=kernel_list)
    out = jax.block_until_ready(out)

    ref = mdsc_reference(x, params, kernel_list=kernel_list)
    assert out.shape == (N, C_out, H, W), out.shape
    assert jnp.allclose(out, ref, atol=1e-4, rtol=1e-4), \
        float(jnp.max(jnp.abs(out - ref)))
    print("KERNEL_OK")
</pallas_src>

<mosaic_0001>
module attributes {stable_mosaic.version = 11 : i64} {
  func.func @_mdsc_kernel(%arg0: i32, %arg1: memref<1x8x504xf32, #tpu.memory_space<vmem>>, %arg2: memref<25x8x8xf32, #tpu.memory_space<vmem>>, %arg3: memref<8x1xf32, #tpu.memory_space<vmem>>, %arg4: memref<1x8x384xf32, #tpu.memory_space<vmem>>) attributes {dimension_semantics = [#tpu.dimension_semantics<parallel>], iteration_bounds = array<i64: 2>, scalar_prefetch = 0 : i64, scratch_operands = 0 : i64, tpu.core_type = #tpu.core_type<tc>, window_params = [{transform_indices = @transform_0, window_bounds = array<i64: 1, 8, 504>}, {pipeline_mode = #tpu.pipeline_mode<synchronous>, transform_indices = @transform_1, window_bounds = array<i64: 25, 8, 8>}, {pipeline_mode = #tpu.pipeline_mode<synchronous>, transform_indices = @transform_2, window_bounds = array<i64: 8, 1>}, {transform_indices = @transform_3, window_bounds = array<i64: 1, 8, 384>}]} {
    %c0 = arith.constant 0 : index
    %c0_0 = arith.constant 0 : index
    %c0_1 = arith.constant 0 : index
    %0 = vector.load %arg1[%c0, %c0_0, %c0_1] : memref<1x8x504xf32, #tpu.memory_space<vmem>>, vector<1x8x504xf32>
    %1 = vector.shape_cast %0 : vector<1x8x504xf32> to vector<8x504xf32>
    %cst = arith.constant 0.000000e+00 : f32
    %2 = vector.broadcast %cst : f32 to vector<8x384xf32>
    %3 = vector.extract_strided_slice %1 {offsets = [0, 0], sizes = [8, 384], strides = [1, 1]} : vector<8x504xf32> to vector<8x384xf32>
    %c0_2 = arith.constant 0 : index
    %c0_3 = arith.constant 0 : index
    %c0_4 = arith.constant 0 : index
    %4 = vector.load %arg2[%c0_2, %c0_3, %c0_4] : memref<25x8x8xf32, #tpu.memory_space<vmem>>, vector<1x8x8xf32>
    %5 = vector.shape_cast %4 : vector<1x8x8xf32> to vector<8x8xf32>
    %cst_5 = arith.constant dense<0.000000e+00> : vector<8x384xf32>
    %6 = tpu.matmul %5, %3, %cst_5 {dimension_numbers = #tpu.dot_dimension_numbers<[1], [0], [0], [1], [0, 0, 1, 1], [], []>} : vector<8x8xf32>, vector<8x384xf32>, vector<8x384xf32> -> vector<8x384xf32>
    %7 = arith.addf %2, %6 : vector<8x384xf32>
    %8 = vector.extract_strided_slice %1 {offsets = [0, 1], sizes = [8, 384], strides = [1, 1]} : vector<8x504xf32> to vector<8x384xf32>
    %c1 = arith.constant 1 : index
    %c0_6 = arith.constant 0 : index
    %c0_7 = arith.constant 0 : index
    %9 = vector.load %arg2[%c1, %c0_6, %c0_7] : memref<25x8x8xf32, #tpu.memory_space<vmem>>, vector<1x8x8xf32>
    %10 = vector.shape_cast %9 : vector<1x8x8xf32> to vector<8x8xf32>
    %cst_8 = arith.constant dense<0.000000e+00> : vector<8x384xf32>
    %11 = tpu.matmul %10, %8, %cst_8 {dimension_numbers = #tpu.dot_dimension_numbers<[1], [0], [0], [1], [0, 0, 1, 1], [], []>} : vector<8x8xf32>, vector<8x384xf32>, vector<8x384xf32> -> vector<8x384xf32>
    %12 = arith.addf %7, %11 : vector<8x384xf32>
    %13 = vector.extract_strided_slice %1 {offsets = [0, 2], sizes = [8, 384], strides = [1, 1]} : vector<8x504xf32> to vector<8x384xf32>
    %c2 = arith.constant 2 : index
    %c0_9 = arith.constant 0 : index
    %c0_10 = arith.constant 0 : index
    %14 = vector.load %arg2[%c2, %c0_9, %c0_10] : memref<25x8x8xf32, #tpu.memory_space<vmem>>, vector<1x8x8xf32>
    %15 = vector.shape_cast %14 : vector<1x8x8xf32> to vector<8x8xf32>
    %cst_11 = arith.constant dense<0.000000e+00> : vector<8x384xf32>
    %16 = tpu.matmul %15, %13, %cst_11 {dimension_numbers = #tpu.dot_dimension_numbers<[1], [0], [0], [1], [0, 0, 1, 1], [], []>} : vector<8x8xf32>, vector<8x384xf32>, vector<8x384xf32> -> vector<8x384xf32>
    %17 = arith.addf %12, %16 : vector<8x384xf32>
    %18 = vector.extract_strided_slice %1 {offsets = [0, 3], sizes = [8, 384], strides = [1, 1]} : vector<8x504xf32> to vector<8x384xf32>
    %c3 = arith.constant 3 : index
    %c0_12 = arith.constant 0 : index
    %c0_13 = arith.constant 0 : index
    %19 = vector.load %arg2[%c3, %c0_12, %c0_13] : memref<25x8x8xf32, #tpu.memory_space<vmem>>, vector<1x8x8xf32>
    %20 = vector.shape_cast %19 : vector<1x8x8xf32> to vector<8x8xf32>
    %cst_14 = arith.constant dense<0.000000e+00> : vector<8x384xf32>
    %21 = tpu.matmul %20, %18, %cst_14 {dimension_numbers = #tpu.dot_dimension_numbers<[1], [0], [0], [1], [0, 0, 1, 1], [], []>} : vector<8x8xf32>, vector<8x384xf32>, vector<8x384xf32> -> vector<8x384xf32>
    %22 = arith.addf %17, %21 : vector<8x384xf32>
    %23 = vector.extract_strided_slice %1 {offsets = [0, 4], sizes = [8, 384], strides = [1, 1]} : vector<8x504xf32> to vector<8x384xf32>
    %c4 = arith.constant 4 : index
    %c0_15 = arith.constant 0 : index
    %c0_16 = arith.constant 0 : index
    %24 = vector.load %arg2[%c4, %c0_15, %c0_16] : memref<25x8x8xf32, #tpu.memory_space<vmem>>, vector<1x8x8xf32>
    %25 = vector.shape_cast %24 : vector<1x8x8xf32> to vector<8x8xf32>
    %cst_17 = arith.constant dense<0.000000e+00> : vector<8x384xf32>
    %26 = tpu.matmul %25, %23, %cst_17 {dimension_numbers = #tpu.dot_dimension_numbers<[1], [0], [0], [1], [0, 0, 1, 1], [], []>} : vector<8x8xf32>, vector<8x384xf32>, vector<8x384xf32> -> vector<8x384xf32>
    %27 = arith.addf %22, %26 : vector<8x384xf32>
    %28 = vector.extract_strided_slice %1 {offsets = [0, 24], sizes = [8, 384], strides = [1, 1]} : vector<8x504xf32> to vector<8x384xf32>
    %c5 = arith.constant 5 : index
    %c0_18 = arith.constant 0 : index
    %c0_19 = arith.constant 0 : index
    %29 = vector.load %arg2[%c5, %c0_18, %c0_19] : memref<25x8x8xf32, #tpu.memory_space<vmem>>, vector<1x8x8xf32>
    %30 = vector.shape_cast %29 : vector<1x8x8xf32> to vector<8x8xf32>
    %cst_20 = arith.constant dense<0.000000e+00> : vector<8x384xf32>
    %31 = tpu.matmul %30, %28, %cst_20 {dimension_numbers = #tpu.dot_dimension_numbers<[1], [0], [0], [1], [0, 0, 1, 1], [], []>} : vector<8x8xf32>, vector<8x384xf32>, vector<8x384xf32> -> vector<8x384xf32>
    %32 = arith.addf %27, %31 : vector<8x384xf32>
    %33 = vector.extract_strided_slice %1 {offsets = [0, 25], sizes = [8, 384], strides = [1, 1]} : vector<8x504xf32> to vector<8x384xf32>
    %c6 = arith.constant 6 : index
    %c0_21 = arith.constant 0 : index
    %c0_22 = arith.constant 0 : index
    %34 = vector.load %arg2[%c6, %c0_21, %c0_22] : memref<25x8x8xf32, #tpu.memory_space<vmem>>, vector<1x8x8xf32>
    %35 = vector.shape_cast %34 : vector<1x8x8xf32> to vector<8x8xf32>
    %cst_23 = arith.constant dense<0.000000e+00> : vector<8x384xf32>
    %36 = tpu.matmul %35, %33, %cst_23 {dimension_numbers = #tpu.dot_dimension_numbers<[1], [0], [0], [1], [0, 0, 1, 1], [], []>} : vector<8x8xf32>, vector<8x384xf32>, vector<8x384xf32> -> vector<8x384xf32>
    %37 = arith.addf %32, %36 : vector<8x384xf32>
    %38 = vector.extract_strided_slice %1 {offsets = [0, 26], sizes = [8, 384], strides = [1, 1]} : vector<8x504xf32> to vector<8x384xf32>
    %c7 = arith.constant 7 : index
    %c0_24 = arith.constant 0 : index
    %c0_25 = arith.constant 0 : index
    %39 = vector.load %arg2[%c7, %c0_24, %c0_25] : memref<25x8x8xf32, #tpu.memory_space<vmem>>, vector<1x8x8xf32>
    %40 = vector.shape_cast %39 : vector<1x8x8xf32> to vector<8x8xf32>
    %cst_26 = arith.constant dense<0.000000e+00> : vector<8x384xf32>
    %41 = tpu.matmul %40, %38, %cst_26 {dimension_numbers = #tpu.dot_dimension_numbers<[1], [0], [0], [1], [0, 0, 1, 1], [], []>} : vector<8x8xf32>, vector<8x384xf32>, vector<8x384xf32> -> vector<8x384xf32>
    %42 = arith.addf %37, %41 : vector<8x384xf32>
    %43 = vector.extract_strided_slice %1 {offsets = [0, 27], sizes = [8, 384], strides = [1, 1]} : vector<8x504xf32> to vector<8x384xf32>
    %c8 = arith.constant 8 : index
    %c0_27 = arith.constant 0 : index
    %c0_28 = arith.constant 0 : index
    %44 = vector.load %arg2[%c8, %c0_27, %c0_28] : memref<25x8x8xf32, #tpu.memory_space<vmem>>, vector<1x8x8xf32>
    %45 = vector.shape_cast %44 : vector<1x8x8xf32> to vector<8x8xf32>
    %cst_29 = arith.constant dense<0.000000e+00> : vector<8x384xf32>
    %46 = tpu.matmul %45, %43, %cst_29 {dimension_numbers = #tpu.dot_dimension_numbers<[1], [0], [0], [1], [0, 0, 1, 1], [], []>} : vector<8x8xf32>, vector<8x384xf32>, vector<8x384xf32> -> vector<8x384xf32>
    %47 = arith.addf %42, %46 : vector<8x384xf32>
    %48 = vector.extract_strided_slice %1 {offsets = [0, 28], sizes = [8, 384], strides = [1, 1]} : vector<8x504xf32> to vector<8x384xf32>
    %c9 = arith.constant 9 : index
    %c0_30 = arith.constant 0 : index
    %c0_31 = arith.constant 0 : index
    %49 = vector.load %arg2[%c9, %c0_30, %c0_31] : memref<25x8x8xf32, #tpu.memory_space<vmem>>, vector<1x8x8xf32>
    %50 = vector.shape_cast %49 : vector<1x8x8xf32> to vector<8x8xf32>
    %cst_32 = arith.constant dense<0.000000e+00> : vector<8x384xf32>
    %51 = tpu.matmul %50, %48, %cst_32 {dimension_numbers = #tpu.dot_dimension_numbers<[1], [0], [0], [1], [0, 0, 1, 1], [], []>} : vector<8x8xf32>, vector<8x384xf32>, vector<8x384xf32> -> vector<8x384xf32>
    %52 = arith.addf %47, %51 : vector<8x384xf32>
    %53 = vector.extract_strided_slice %1 {offsets = [0, 48], sizes = [8, 384], strides = [1, 1]} : vector<8x504xf32> to vector<8x384xf32>
    %c10 = arith.constant 10 : index
    %c0_33 = arith.constant 0 : index
    %c0_34 = arith.constant 0 : index
    %54 = vector.load %arg2[%c10, %c0_33, %c0_34] : memref<25x8x8xf32, #tpu.memory_space<vmem>>, vector<1x8x8xf32>
    %55 = vector.shape_cast %54 : vector<1x8x8xf32> to vector<8x8xf32>
    %cst_35 = arith.constant dense<0.000000e+00> : vector<8x384xf32>
    %56 = tpu.matmul %55, %53, %cst_35 {dimension_numbers = #tpu.dot_dimension_numbers<[1], [0], [0], [1], [0, 0, 1, 1], [], []>} : vector<8x8xf32>, vector<8x384xf32>, vector<8x384xf32> -> vector<8x384xf32>
    %57 = arith.addf %52, %56 : vector<8x384xf32>
    %58 = vector.extract_strided_slice %1 {offsets = [0, 49], sizes = [8, 384], strides = [1, 1]} : vector<8x504xf32> to vector<8x384xf32>
    %c11 = arith.constant 11 : index
    %c0_36 = arith.constant 0 : index
    %c0_37 = arith.constant 0 : index
    %59 = vector.load %arg2[%c11, %c0_36, %c0_37] : memref<25x8x8xf32, #tpu.memory_space<vmem>>, vector<1x8x8xf32>
    %60 = vector.shape_cast %59 : vector<1x8x8xf32> to vector<8x8xf32>
    %cst_38 = arith.constant dense<0.000000e+00> : vector<8x384xf32>
    %61 = tpu.matmul %60, %58, %cst_38 {dimension_numbers = #tpu.dot_dimension_numbers<[1], [0], [0], [1], [0, 0, 1, 1], [], []>} : vector<8x8xf32>, vector<8x384xf32>, vector<8x384xf32> -> vector<8x384xf32>
    %62 = arith.addf %57, %61 : vector<8x384xf32>
    %63 = vector.extract_strided_slice %1 {offsets = [0, 50], sizes = [8, 384], strides = [1, 1]} : vector<8x504xf32> to vector<8x384xf32>
    %c12 = arith.constant 12 : index
    %c0_39 = arith.constant 0 : index
    %c0_40 = arith.constant 0 : index
    %64 = vector.load %arg2[%c12, %c0_39, %c0_40] : memref<25x8x8xf32, #tpu.memory_space<vmem>>, vector<1x8x8xf32>
    %65 = vector.shape_cast %64 : vector<1x8x8xf32> to vector<8x8xf32>
    %cst_41 = arith.constant dense<0.000000e+00> : vector<8x384xf32>
    %66 = tpu.matmul %65, %63, %cst_41 {dimension_numbers = #tpu.dot_dimension_numbers<[1], [0], [0], [1], [0, 0, 1, 1], [], []>} : vector<8x8xf32>, vector<8x384xf32>, vector<8x384xf32> -> vector<8x384xf32>
    %67 = arith.addf %62, %66 : vector<8x384xf32>
    %68 = vector.extract_strided_slice %1 {offsets = [0, 51], sizes = [8, 384], strides = [1, 1]} : vector<8x504xf32> to vector<8x384xf32>
    %c13 = arith.constant 13 : index
    %c0_42 = arith.constant 0 : index
    %c0_43 = arith.constant 0 : index
    %69 = vector.load %arg2[%c13, %c0_42, %c0_43] : memref<25x8x8xf32, #tpu.memory_space<vmem>>, vector<1x8x8xf32>
    %70 = vector.shape_cast %69 : vector<1x8x8xf32> to vector<8x8xf32>
    %cst_44 = arith.constant dense<0.000000e+00> : vector<8x384xf32>
    %71 = tpu.matmul %70, %68, %cst_44 {dimension_numbers = #tpu.dot_dimension_numbers<[1], [0], [0], [1], [0, 0, 1, 1], [], []>} : vector<8x8xf32>, vector<8x384xf32>, vector<8x384xf32> -> vector<8x384xf32>
    %72 = arith.addf %67, %71 : vector<8x384xf32>
    %73 = vector.extract_strided_slice %1 {offsets = [0, 52], sizes = [8, 384], strides = [1, 1]} : vector<8x504xf32> to vector<8x384xf32>
    %c14 = arith.constant 14 : index
    %c0_45 = arith.constant 0 : index
    %c0_46 = arith.constant 0 : index
    %74 = vector.load %arg2[%c14, %c0_45, %c0_46] : memref<25x8x8xf32, #tpu.memory_space<vmem>>, vector<1x8x8xf32>
    %75 = vector.shape_cast %74 : vector<1x8x8xf32> to vector<8x8xf32>
    %cst_47 = arith.constant dense<0.000000e+00> : vector<8x384xf32>
    %76 = tpu.matmul %75, %73, %cst_47 {dimension_numbers = #tpu.dot_dimension_numbers<[1], [0], [0], [1], [0, 0, 1, 1], [], []>} : vector<8x8xf32>, vector<8x384xf32>, vector<8x384xf32> -> vector<8x384xf32>
    %77 = arith.addf %72, %76 : vector<8x384xf32>
    %78 = vector.extract_strided_slice %1 {offsets = [0, 72], sizes = [8, 384], strides = [1, 1]} : vector<8x504xf32> to vector<8x384xf32>
    %c15 = arith.constant 15 : index
    %c0_48 = arith.constant 0 : index
    %c0_49 = arith.constant 0 : index
    %79 = vector.load %arg2[%c15, %c0_48, %c0_49] : memref<25x8x8xf32, #tpu.memory_space<vmem>>, vector<1x8x8xf32>
    %80 = vector.shape_cast %79 : vector<1x8x8xf32> to vector<8x8xf32>
    %cst_50 = arith.constant dense<0.000000e+00> : vector<8x384xf32>
    %81 = tpu.matmul %80, %78, %cst_50 {dimension_numbers = #tpu.dot_dimension_numbers<[1], [0], [0], [1], [0, 0, 1, 1], [], []>} : vector<8x8xf32>, vector<8x384xf32>, vector<8x384xf32> -> vector<8x384xf32>
    %82 = arith.addf %77, %81 : vector<8x384xf32>
    %83 = vector.extract_strided_slice %1 {offsets = [0, 73], sizes = [8, 384], strides = [1, 1]} : vector<8x504xf32> to vector<8x384xf32>
    %c16 = arith.constant 16 : index
    %c0_51 = arith.constant 0 : index
    %c0_52 = arith.constant 0 : index
    %84 = vector.load %arg2[%c16, %c0_51, %c0_52] : memref<25x8x8xf32, #tpu.memory_space<vmem>>, vector<1x8x8xf32>
    %85 = vector.shape_cast %84 : vector<1x8x8xf32> to vector<8x8xf32>
    %cst_53 = arith.constant dense<0.000000e+00> : vector<8x384xf32>
    %86 = tpu.matmul %85, %83, %cst_53 {dimension_numbers = #tpu.dot_dimension_numbers<[1], [0], [0], [1], [0, 0, 1, 1], [], []>} : vector<8x8xf32>, vector<8x384xf32>, vector<8x384xf32> -> vector<8x384xf32>
    %87 = arith.addf %82, %86 : vector<8x384xf32>
    %88 = vector.extract_strided_slice %1 {offsets = [0, 74], sizes = [8, 384], strides = [1, 1]} : vector<8x504xf32> to vector<8x384xf32>
    %c17 = arith.constant 17 : index
    %c0_54 = arith.constant 0 : index
    %c0_55 = arith.constant 0 : index
    %89 = vector.load %arg2[%c17, %c0_54, %c0_55] : memref<25x8x8xf32, #tpu.memory_space<vmem>>, vector<1x8x8xf32>
    %90 = vector.shape_cast %89 : vector<1x8x8xf32> to vector<8x8xf32>
    %cst_56 = arith.constant dense<0.000000e+00> : vector<8x384xf32>
    %91 = tpu.matmul %90, %88, %cst_56 {dimension_numbers = #tpu.dot_dimension_numbers<[1], [0], [0], [1], [0, 0, 1, 1], [], []>} : vector<8x8xf32>, vector<8x384xf32>, vector<8x384xf32> -> vector<8x384xf32>
    %92 = arith.addf %87, %91 : vector<8x384xf32>
    %93 = vector.extract_strided_slice %1 {offsets = [0, 75], sizes = [8, 384], strides = [1, 1]} : vector<8x504xf32> to vector<8x384xf32>
    %c18 = arith.constant 18 : index
    %c0_57 = arith.constant 0 : index
    %c0_58 = arith.constant 0 : index
    %94 = vector.load %arg2[%c18, %c0_57, %c0_58] : memref<25x8x8xf32, #tpu.memory_space<vmem>>, vector<1x8x8xf32>
    %95 = vector.shape_cast %94 : vector<1x8x8xf32> to vector<8x8xf32>
    %cst_59 = arith.constant dense<0.000000e+00> : vector<8x384xf32>
    %96 = tpu.matmul %95, %93, %cst_59 {dimension_numbers = #tpu.dot_dimension_numbers<[1], [0], [0], [1], [0, 0, 1, 1], [], []>} : vector<8x8xf32>, vector<8x384xf32>, vector<8x384xf32> -> vector<8x384xf32>
    %97 = arith.addf %92, %96 : vector<8x384xf32>
    %98 = vector.extract_strided_slice %1 {offsets = [0, 76], sizes = [8, 384], strides = [1, 1]} : vector<8x504xf32> to vector<8x384xf32>
    %c19 = arith.constant 19 : index
    %c0_60 = arith.constant 0 : index
    %c0_61 = arith.constant 0 : index
    %99 = vector.load %arg2[%c19, %c0_60, %c0_61] : memref<25x8x8xf32, #tpu.memory_space<vmem>>, vector<1x8x8xf32>
    %100 = vector.shape_cast %99 : vector<1x8x8xf32> to vector<8x8xf32>
    %cst_62 = arith.constant dense<0.000000e+00> : vector<8x384xf32>
    %101 = tpu.matmul %100, %98, %cst_62 {dimension_numbers = #tpu.dot_dimension_numbers<[1], [0], [0], [1], [0, 0, 1, 1], [], []>} : vector<8x8xf32>, vector<8x384xf32>, vector<8x384xf32> -> vector<8x384xf32>
    %102 = arith.addf %97, %101 : vector<8x384xf32>
    %103 = vector.extract_strided_slice %1 {offsets = [0, 96], sizes = [8, 384], strides = [1, 1]} : vector<8x504xf32> to vector<8x384xf32>
    %c20 = arith.constant 20 : index
    %c0_63 = arith.constant 0 : index
    %c0_64 = arith.constant 0 : index
    %104 = vector.load %arg2[%c20, %c0_63, %c0_64] : memref<25x8x8xf32, #tpu.memory_space<vmem>>, vector<1x8x8xf32>
    %105 = vector.shape_cast %104 : vector<1x8x8xf32> to vector<8x8xf32>
    %cst_65 = arith.constant dense<0.000000e+00> : vector<8x384xf32>
    %106 = tpu.matmul %105, %103, %cst_65 {dimension_numbers = #tpu.dot_dimension_numbers<[1], [0], [0], [1], [0, 0, 1, 1], [], []>} : vector<8x8xf32>, vector<8x384xf32>, vector<8x384xf32> -> vector<8x384xf32>
    %107 = arith.addf %102, %106 : vector<8x384xf32>
    %108 = vector.extract_strided_slice %1 {offsets = [0, 97], sizes = [8, 384], strides = [1, 1]} : vector<8x504xf32> to vector<8x384xf32>
    %c21 = arith.constant 21 : index
    %c0_66 = arith.constant 0 : index
    %c0_67 = arith.constant 0 : index
    %109 = vector.load %arg2[%c21, %c0_66, %c0_67] : memref<25x8x8xf32, #tpu.memory_space<vmem>>, vector<1x8x8xf32>
    %110 = vector.shape_cast %109 : vector<1x8x8xf32> to vector<8x8xf32>
    %cst_68 = arith.constant dense<0.000000e+00> : vector<8x384xf32>
    %111 = tpu.matmul %110, %108, %cst_68 {dimension_numbers = #tpu.dot_dimension_numbers<[1], [0], [0], [1], [0, 0, 1, 1], [], []>} : vector<8x8xf32>, vector<8x384xf32>, vector<8x384xf32> -> vector<8x384xf32>
    %112 = arith.addf %107, %111 : vector<8x384xf32>
    %113 = vector.extract_strided_slice %1 {offsets = [0, 98], sizes = [8, 384], strides = [1, 1]} : vector<8x504xf32> to vector<8x384xf32>
    %c22 = arith.constant 22 : index
    %c0_69 = arith.constant 0 : index
    %c0_70 = arith.constant 0 : index
    %114 = vector.load %arg2[%c22, %c0_69, %c0_70] : memref<25x8x8xf32, #tpu.memory_space<vmem>>, vector<1x8x8xf32>
    %115 = vector.shape_cast %114 : vector<1x8x8xf32> to vector<8x8xf32>
    %cst_71 = arith.constant dense<0.000000e+00> : vector<8x384xf32>
    %116 = tpu.matmul %115, %113, %cst_71 {dimension_numbers = #tpu.dot_dimension_numbers<[1], [0], [0], [1], [0, 0, 1, 1], [], []>} : vector<8x8xf32>, vector<8x384xf32>, vector<8x384xf32> -> vector<8x384xf32>
    %117 = arith.addf %112, %116 : vector<8x384xf32>
    %118 = vector.extract_strided_slice %1 {offsets = [0, 99], sizes = [8, 384], strides = [1, 1]} : vector<8x504xf32> to vector<8x384xf32>
    %c23 = arith.constant 23 : index
    %c0_72 = arith.constant 0 : index
    %c0_73 = arith.constant 0 : index
    %119 = vector.load %arg2[%c23, %c0_72, %c0_73] : memref<25x8x8xf32, #tpu.memory_space<vmem>>, vector<1x8x8xf32>
    %120 = vector.shape_cast %119 : vector<1x8x8xf32> to vector<8x8xf32>
    %cst_74 = arith.constant dense<0.000000e+00> : vector<8x384xf32>
    %121 = tpu.matmul %120, %118, %cst_74 {dimension_numbers = #tpu.dot_dimension_numbers<[1], [0], [0], [1], [0, 0, 1, 1], [], []>} : vector<8x8xf32>, vector<8x384xf32>, vector<8x384xf32> -> vector<8x384xf32>
    %122 = arith.addf %117, %121 : vector<8x384xf32>
    %123 = vector.extract_strided_slice %1 {offsets = [0, 100], sizes = [8, 384], strides = [1, 1]} : vector<8x504xf32> to vector<8x384xf32>
    %c24 = arith.constant 24 : index
    %c0_75 = arith.constant 0 : index
    %c0_76 = arith.constant 0 : index
    %124 = vector.load %arg2[%c24, %c0_75, %c0_76] : memref<25x8x8xf32, #tpu.memory_space<vmem>>, vector<1x8x8xf32>
    %125 = vector.shape_cast %124 : vector<1x8x8xf32> to vector<8x8xf32>
    %cst_77 = arith.constant dense<0.000000e+00> : vector<8x384xf32>
    %126 = tpu.matmul %125, %123, %cst_77 {dimension_numbers = #tpu.dot_dimension_numbers<[1], [0], [0], [1], [0, 0, 1, 1], [], []>} : vector<8x8xf32>, vector<8x384xf32>, vector<8x384xf32> -> vector<8x384xf32>
    %127 = arith.addf %122, %126 : vector<8x384xf32>
    %c0_78 = arith.constant 0 : index
    %c0_79 = arith.constant 0 : index
    %128 = vector.load %arg3[%c0_78, %c0_79] : memref<8x1xf32, #tpu.memory_space<vmem>>, vector<8x1xf32>
    %129 = vector.broadcast %128 : vector<8x1xf32> to vector<8x384xf32>
    %130 = arith.addf %127, %129 : vector<8x384xf32>
    %c0_80 = arith.constant 0 : index
    %c0_81 = arith.constant 0 : index
    %c0_82 = arith.constant 0 : index
    %131 = vector.load %arg4[%c0_80, %c0_81, %c0_82] : memref<1x8x384xf32, #tpu.memory_space<vmem>>, vector<1x8x384xf32>
    %132 = vector.shape_cast %131 : vector<1x8x384xf32> to vector<8x384xf32>
    %133 = vector.shape_cast %130 : vector<8x384xf32> to vector<1x8x384xf32>
    tpu.vector_store %arg4[%c0_80, %c0_81, %c0_82], %133 {strides = array<i32>} : memref<1x8x384xf32, #tpu.memory_space<vmem>>, vector<1x8x384xf32>,
    return
  }
  func.func @transform_0(%arg0: i32) -> (i32, i32, i32) {
    %c0_i32 = arith.constant 0 : i32
    %c0_i32_0 = arith.constant 0 : i32
    %c0_i32_1 = arith.constant 0 : i32
    return %arg0, %c0_i32, %c0_i32_0 : i32, i32, i32
  }
  func.func @transform_1(%arg0: i32) -> (i32, i32, i32) {
    %c0_i32 = arith.constant 0 : i32
    %c0_i32_0 = arith.constant 0 : i32
    %c0_i32_1 = arith.constant 0 : i32
    %c0_i32_2 = arith.constant 0 : i32
    return %c0_i32, %c0_i32_0, %c0_i32_1 : i32, i32, i32
  }
  func.func @transform_2(%arg0: i32) -> (i32, i32) {
    %c0_i32 = arith.constant 0 : i32
    %c0_i32_0 = arith.constant 0 : i32
    %c0_i32_1 = arith.constant 0 : i32
    return %c0_i32, %c0_i32_0 : i32, i32
  }
  func.func @transform_3(%arg0: i32) -> (i32, i32, i32) {
    %c0_i32 = arith.constant 0 : i32
    %c0_i32_0 = arith.constant 0 : i32
    %c0_i32_1 = arith.constant 0 : i32
    return %arg0, %c0_i32, %c0_i32_0 : i32, i32, i32
  }
}

</mosaic_0001>

<llo_original>
// kernel: tpu_custom_call.1
$region0: #{tpu_custom_call.1}
  #allocation0 [shape = 'u32[]', space=smem, size = 0x4, offset = 0x4, fixed_abs, tag = 'smem constant byte address 0x4 - core index']
  #allocation1 [shape = 'u32[144,128]{1,0:T(1,128)}', space=vmem, size = 0x12000, scoped, tag = 'internal scratch']
  %s0 = inlined_call_operand.vmem [shape: f32[2,8,504], index: 0, kind: input, shape index: {}]
  %s1 = inlined_call_operand.vmem [shape: f32[25,8,8], index: 1, kind: input, shape index: {}]
  %s2 = inlined_call_operand.vmem [shape: f32[8,1], index: 2, kind: input, shape index: {}]
  %s3 = inlined_call_operand.hbm [shape: f32[2,8,384], index: 3, kind: output, shape index: {}]
  %s4 = sld [smem:[#allocation0]]
  $region45: #{tpu_custom_call.1} parent=0
    _
  %s6 = ssub.s32 1, %s4
  %s7 = scalar_select 0, %s6, %s4
  $region1: #{tpu_custom_call.1} parent=0
    #allocation2 [shape = 'u8[24576]{0}', space=vmem, size = 0x6000, scoped, tag = 'output window, operand 0']
    #allocation3 [shape = 's32[2]{0}', space=sflag, size = 0x8, scoped, tag = 'scoped memory for tpu_custom_call.1']
    %8 = vsyncpa [#allocation3], 0
    %s9 = scalar_lea.sflag [#allocation3], 1
    %10 = vsyncpa %s9, 0
    loop: start=0, step=1, limit=4
    $region2: #{tpu_custom_call.1} parent=1 // loop_pre_header
      _
    $region3: #{tpu_custom_call.1} parent=1 // loop_header
      %s12 = sphi 0, %s16
      %p13 = scmp.ge.s32.totalorder %s12, 4
      %s22 = sphi 0, %s24
      %s25 = sphi 0, %s22
      %s26 = sphi 0, %s25
      %s42 = sphi 0, %s26
      %s46 = sphi 0, %s46
      %s48 = sphi 0, %s46
      %s49 = sphi 0, %s48
      %s63 = sphi 0, %s49
      %s67 = sphi 0, %s67
      %s69 = sphi 0, %s67
      %s70 = sphi 0, %s69
      %s84 = sphi 0, %s70
      %s90 = sphi 0, %s92
      %s93 = sphi 0, %s90
      %s94 = sphi 0, %s93
      %s110 = sphi 0, %s94
    $region4: #{tpu_custom_call.1} parent=1 // loop_header_branch
      %15 = sbr.rel (%p13) target = $region8
    $region5: #{tpu_custom_call.1} parent=1 // loop_body
      %s17 = ssub.s32 %s12, 1
      %s18 = ssub.s32 %s12, 2
      %s19 = sadd.s32 %s12, 1
      %s20 = ssub.s32 %s12, %s19
      %p21 = scmp.eq.s32.totalorder %s20, 0
      %s23 = sadd.s32 %s22, 1
      %s24 = scalar_select %p21, %s22, %s23
      %p27 = pneg %p21
      %p28 = scmp.eq.s32.totalorder %s12, 1
      %p29 = por %p27, %p28
      %p30 = scmp.ne.s32.totalorder %s22, %s25
      %p31 = scmp.eq.s32.totalorder %s12, 0
      %p32 = por %p30, %p31
      %p33 = scmp.ne.s32.totalorder %s22, %s25
      %p34 = scmp.eq.s32.totalorder %s17, 1
      %p35 = por %p33, %p34
      %p36 = scmp.ne.s32.totalorder %s25, %s26
      %p37 = scmp.eq.s32.totalorder %s17, 0
      %p38 = por %p36, %p37
      %p39 = scmp.ne.s32.totalorder %s25, %s26
      %p40 = scmp.eq.s32.totalorder %s18, 1
      %p41 = por %p39, %p40
      %p43 = scmp.ne.s32.totalorder %s26, %s42
      %p44 = scmp.eq.s32.totalorder %s18, 0
      %p45 = por %p43, %p44
      %s47 = sadd.s32 %s46, 1
      %p50 = scmp.eq.s32.totalorder %s12, 1
      %p51 = scmp.ne.s32.totalorder %s46, %s48
      %p52 = scmp.eq.s32.totalorder %s12, 0
      %p53 = por %p51, %p52
      %p54 = scmp.ne.s32.totalorder %s46, %s48
      %p55 = scmp.eq.s32.totalorder %s17, 1
      %p56 = por %p54, %p55
      %p57 = scmp.ne.s32.totalorder %s48, %s49
      %p58 = scmp.eq.s32.totalorder %s17, 0
      %p59 = por %p57, %p58
      %p60 = scmp.ne.s32.totalorder %s48, %s49
      %p61 = scmp.eq.s32.totalorder %s18, 1
      %p62 = por %p60, %p61
      %p64 = scmp.ne.s32.totalorder %s49, %s63
      %p65 = scmp.eq.s32.totalorder %s18, 0
      %p66 = por %p64, %p65
      %s68 = sadd.s32 %s67, 1
      %p71 = scmp.eq.s32.totalorder %s12, 1
      %p72 = scmp.ne.s32.totalorder %s67, %s69
      %p73 = scmp.eq.s32.totalorder %s12, 0
      %p74 = por %p72, %p73
      %p75 = scmp.ne.s32.totalorder %s67, %s69
      %p76 = scmp.eq.s32.totalorder %s17, 1
      %p77 = por %p75, %p76
      %p78 = scmp.ne.s32.totalorder %s69, %s70
      %p79 = scmp.eq.s32.totalorder %s17, 0
      %p80 = por %p78, %p79
      %p81 = scmp.ne.s32.totalorder %s69, %s70
      %p82 = scmp.eq.s32.totalorder %s18, 1
      %p83 = por %p81, %p82
      %p85 = scmp.ne.s32.totalorder %s70, %s84
      %p86 = scmp.eq.s32.totalorder %s18, 0
      %p87 = por %p85, %p86
      %s88 = ssub.s32 %s12, %s19
      %p89 = scmp.eq.s32.totalorder %s88, 0
      %s91 = sadd.s32 %s90, 1
      %s92 = scalar_select %p89, %s90, %s91
      %p95 = pneg %p89
      %p96 = scmp.eq.s32.totalorder %s12, 1
      %p97 = por %p95, %p96
      %p98 = scmp.ne.s32.totalorder %s90, %s93
      %p99 = scmp.eq.s32.totalorder %s12, 0
      %p100 = por %p98, %p99
      %p101 = scmp.ne.s32.totalorder %s90, %s93
      %p102 = scmp.eq.s32.totalorder %s17, 1
      %p103 = por %p101, %p102
      %p104 = scmp.ne.s32.totalorder %s93, %s94
      %p105 = scmp.eq.s32.totalorder %s17, 0
      %p106 = por %p104, %p105
      %p107 = scmp.ne.s32.totalorder %s93, %s94
      %p108 = scmp.eq.s32.totalorder %s18, 1
      %p109 = por %p107, %p108
      %p111 = scmp.ne.s32.totalorder %s94, %s110
      %p112 = scmp.eq.s32.totalorder %s18, 0
      %p113 = por %p111, %p112
      %p114 = scmp.le.s32.totalorder 1, %s12
      %p115 = scmp.lt.s32.totalorder %s12, 3
      %p116 = pnand %p114, %p115
      %p117 = pneg %p116
      // Predicated region
      $region9: #{tpu_custom_call.1} parent=5 // pred_check
        _
      $region10: #{tpu_custom_call.1} parent=5 // pred_check_branch
        %119 = sbr.rel (%p116) target = $region12
      $region11: #{tpu_custom_call.1} parent=5 // pred_region
        %s120 = ssub.s32 %s12, 1
        // Predicated region
        $region13: #{tpu_custom_call.1} parent=11 // pred_check
          %p121 = pneg %p59
        $region14: #{tpu_custom_call.1} parent=11 // pred_check_branch
          %123 = sbr.rel (%p121) target = $region16
        $region15: #{tpu_custom_call.1} parent=11 // pred_region
          _
        $region16: #{tpu_custom_call.1} parent=11 // pred_fallthru
          _
        // Predicated region
        $region17: #{tpu_custom_call.1} parent=11 // pred_check
          %p124 = pneg %p80
        $region18: #{tpu_custom_call.1} parent=11 // pred_check_branch
          %126 = sbr.rel (%p124) target = $region20
        $region19: #{tpu_custom_call.1} parent=11 // pred_region
          _
        $region20: #{tpu_custom_call.1} parent=11 // pred_fallthru
          _
      $region12: #{tpu_custom_call.1} parent=5 // pred_fallthru
        _
      %p127 = scmp.lt.s32.totalorder %s12, 2
      // Predicated region
      $region21: #{tpu_custom_call.1} parent=5 // pred_check
        %p128 = pneg %p127
      $region22: #{tpu_custom_call.1} parent=5 // pred_check_branch
        %130 = sbr.rel (%p128) target = $region24
      $region23: #{tpu_custom_call.1} parent=5 // pred_region
        // Predicated region
        $region25: #{tpu_custom_call.1} parent=23 // pred_check
          %p131 = pneg %p32
        $region26: #{tpu_custom_call.1} parent=23 // pred_check_branch
          %133 = sbr.rel (%p131) target = $region28
        $region27: #{tpu_custom_call.1} parent=23 // pred_region
          %p134 = scmp.lt.s32.totalorder %s12, 1
          %s135 = scalar_select %p134, %s12, 1
          %s136 = smul.addr %s135, 4
          %s137 = smul.addr %s136, 8
          %s138 = scalar_lea.vmem %s0, %s137
        $region28: #{tpu_custom_call.1} parent=23 // pred_fallthru
          _
      $region24: #{tpu_custom_call.1} parent=5 // pred_fallthru
        _
      %p139 = scmp.le.s32.totalorder 1, %s12
      %p140 = scmp.lt.s32.totalorder %s12, 3
      %p141 = pnand %p139, %p140
      %p142 = pneg %p141
      // Predicated region
      $region29: #{tpu_custom_call.1} parent=5 // pred_check
        _
      $region30: #{tpu_custom_call.1} parent=5 // pred_check_branch
        %144 = sbr.rel (%p141) target = $region32
      $region31: #{tpu_custom_call.1} parent=5 // pred_region
        %s145 = ssub.s32 %s12, 1
        %p146 = scmp.lt.s32.totalorder %s17, 1
        %s147 = scalar_select %p146, %s17, 1
        %s148 = smul.addr %s147, 4
        %s149 = smul.addr %s148, 8
        %s150 = scalar_lea.vmem %s0, %s149
        %p151 = pneg %p38
        %p152 = pneg %p35
        %p153 = pneg %p59
        %p154 = pneg %p56
        %p155 = pneg %p80
        %p156 = pneg %p77
        %p157 = pneg %p106
        %p158 = pneg %p103
        %s159 = sand.u32 %s93, 1
        %s160 = scalar_lea.sflag [#allocation3], %s159
        %s161 = sand.u32 %s93, 1
        %s162 = smul.addr %s161, 24
        %s163 = scalar_lea.vmem [#allocation2], %s162
        %p164 = scmp.lt.s32.totalorder %s17, 1
        %s165 = scalar_select %p164, %s17, 1
        %s166 = smul.addr %s165, 4
        %s167 = smul.addr %s166, 8
        %s168 = scalar_lea.vmem %s0, %s167
        %v169 = vld [vmem:[%s168] sm:$0xff]
        %v170 = vld [vmem:[%s168 + $0x8] sm:$0xff]
        %v171 = vld [vmem:[%s168 + $0x10] sm:$0xff]
        %v172 = vld [vmem:[%s168 + $0x18] sm:$0xff]
        %v173 = vld [vmem:[%s1] sm:$0xff]
        %s174 = scalar_lea.vmem %s1, 8
        %v175 = vld [vmem:[%s174] sm:$0xff]
        %180 = vrot.lane.b32.xlu0 %v169, 127
        %v181 = vpop.permute.xlu0 %180
        %182 = vrot.lane.b32.xlu0 %v170, 127
        %v183 = vpop.permute.xlu0 %182
        %184 = vrot.lane.b32.xlu0 %v171, 127
        %v185 = vpop.permute.xlu0 %184
        %186 = vrot.lane.b32.xlu0 %v172, 127
        %v187 = vpop.permute.xlu0 %186
        %vm188 = vcmask 1039360
        %v189 = vsel %vm188, %v181, %v183
        %v190 = vsel %vm188, %v183, %v185
        %v191 = vsel %vm188, %v185, %v187
        %vm195 = vcmask 64512
        %v197 = vsel %vm195, %v175, 0
        %199 = vmatprep.subr.mxu0 0.0
        %200 = vmatpush1.msra.mxu0 0.0
        %201 = vmatprep.subr.mxu0 0.0
        %202 = vmatpush1.msra.mxu0 0.0
        %203 = vmatprep.subr.mxu0 0.0
        %204 = vmatpush1.msra.mxu0 0.0
        %205 = vmatprep.subr.mxu0 0.0
        %206 = vmatpush1.msra.mxu0 0.0
        %207 = vmatprep.subr.mxu0 0.0
        %208 = vmatpush1.msra.mxu0 0.0
        %209 = vmatprep.subr.mxu0 0.0
        %210 = vmatpush1.msra.mxu0 0.0
        %211 = vmatprep.subr.mxu0 0.0
        %212 = vmatpush1.msra.mxu0 0.0
        %213 = vmatprep.subr.mxu0 0.0
        %214 = vmatpush1.msra.mxu0 0.0
        %215 = vmatprep.subr.mxu0 0.0
        %216 = vmatpush1.msra.mxu0 0.0
        %217 = vmatprep.subr.mxu0 0.0
        %218 = vmatpush1.msra.mxu0 0.0
        %219 = vmatprep.subr.mxu0 0.0
        %220 = vmatpush1.msra.mxu0 0.0
        %221 = vmatprep.subr.mxu0 0.0
        %222 = vmatpush1.msra.mxu0 0.0
        %223 = vmatprep.subr.mxu0 0.0
        %224 = vmatpush1.msra.mxu0 0.0
        %225 = vmatprep.subr.mxu0 0.0
        %226 = vmatpush1.msra.mxu0 0.0
        %227 = vmatprep.subr.mxu0 0.0
        %228 = vmatpush1.msra.mxu0 0.0
        %229 = vmatprep.subr.mxu0 %v190
        %230 = vmatpush1.msra.mxu0 %v189
        %231 = vmatprep.subr.mxu0 0.0
        %232 = vmatpush2.msra.mxu0 0.0
        %233 = vmatprep.subr.mxu0 0.0
        %234 = vmatpush2.msra.mxu0 0.0
        %235 = vmatprep.subr.mxu0 0.0
        %236 = vmatpush2.msra.mxu0 0.0
        %237 = vmatprep.subr.mxu0 0.0
        %238 = vmatpush2.msra.mxu0 0.0
        %239 = vmatprep.subr.mxu0 0.0
        %240 = vmatpush2.msra.mxu0 0.0
        %241 = vmatprep.subr.mxu0 0.0
        %242 = vmatpush2.msra.mxu0 0.0
        %243 = vmatprep.subr.mxu0 0.0
        %244 = vmatpush2.msra.mxu0 0.0
        %245 = vmatprep.subr.mxu0 0.0
        %246 = vmatpush2.msra.mxu0 0.0
        %247 = vmatprep.subr.mxu0 0.0
        %248 = vmatpush2.msra.mxu0 0.0
        %249 = vmatprep.subr.mxu0 0.0
        %250 = vmatpush2.msra.mxu0 0.0
        %251 = vmatprep.subr.mxu0 0.0
        %252 = vmatpush2.msra.mxu0 0.0
        %253 = vmatprep.subr.mxu0 0.0
        %254 = vmatpush2.msra.mxu0 0.0
        %255 = vmatprep.subr.mxu0 0.0
        %256 = vmatpush2.msra.mxu0 0.0
        %257 = vmatprep.subr.mxu0 0.0
        %258 = vmatpush2.msra.mxu0 0.0
        %259 = vmatprep.subr.mxu0 0.0
        %260 = vmatpush2.msra.mxu0 0.0
        %261 = vmatprep.subr.mxu0 0.0
        %262 = vmatpush2.msra.mxu0 0.0
        %263 = vmatprep.mubr.f32.mxu0 0.0
        %264 = vmatmul.mubr.f32.gmra.mxu0 %v197
        %v265 = vpop.f32.mrf.mxu0
        %v266 = vadd.f32 0.0, %v265
        %v267 = vpop.f32.mrf.mxu0
        %v268 = vadd.f32 0.0, %v267
        %269 = vdwg.mxu0
        %270 = vmatprep.subr.mxu0 0.0
        %271 = vmatpush1.msra.mxu0 0.0
        %272 = vmatprep.subr.mxu0 0.0
        %273 = vmatpush1.msra.mxu0 0.0
        %274 = vmatprep.subr.mxu0 0.0
        %275 = vmatpush1.msra.mxu0 0.0
        %276 = vmatprep.subr.mxu0 0.0
        %277 = vmatpush1.msra.mxu0 0.0
        %278 = vmatprep.subr.mxu0 0.0
        %279 = vmatpush1.msra.mxu0 0.0
        %280 = vmatprep.subr.mxu0 0.0
        %281 = vmatpush1.msra.mxu0 0.0
        %282 = vmatprep.subr.mxu0 0.0
        %283 = vmatpush1.msra.mxu0 0.0
        %284 = vmatprep.subr.mxu0 0.0
        %285 = vmatpush1.msra.mxu0 0.0
        %286 = vmatprep.subr.mxu0 0.0
        %287 = vmatpush1.msra.mxu0 0.0
        %288 = vmatprep.subr.mxu0 0.0
        %289 = vmatpush1.msra.mxu0 0.0
        %290 = vmatprep.subr.mxu0 0.0
        %291 = vmatpush1.msra.mxu0 0.0
        %292 = vmatprep.subr.mxu0 0.0
        %293 = vmatpush1.msra.mxu0 0.0
        %294 = vmatprep.subr.mxu0 0.0
        %295 = vmatpush1.msra.mxu0 0.0
        %296 = vmatprep.subr.mxu0 0.0
        %297 = vmatpush1.msra.mxu0 0.0
        %298 = vmatprep.subr.mxu0 0.0
        %299 = vmatpush1.msra.mxu0 0.0
        %300 = vmatprep.subr.mxu0 0.0
        %301 = vmatpush1.msra.mxu0 %v191
        %302 = vmatprep.subr.mxu0 0.0
        %303 = vmatpush2.msra.mxu0 0.0
        %304 = vmatprep.subr.mxu0 0.0
        %305 = vmatpush2.msra.mxu0 0.0
        %306 = vmatprep.subr.mxu0 0.0
        %307 = vmatpush2.msra.mxu0 0.0
        %308 = vmatprep.subr.mxu0 0.0
        %309 = vmatpush2.msra.mxu0 0.0
        %310 = vmatprep.subr.mxu0 0.0
        %311 = vmatpush2.msra.mxu0 0.0
        %312 = vmatprep.subr.mxu0 0.0
        %313 = vmatpush2.msra.mxu0 0.0
        %314 = vmatprep.subr.mxu0 0.0
        %315 = vmatpush2.msra.mxu0 0.0
        %316 = vmatprep.subr.mxu0 0.0
        %317 = vmatpush2.msra.mxu0 0.0
        %318 = vmatprep.subr.mxu0 0.0
        %319 = vmatpush2.msra.mxu0 0.0
        %320 = vmatprep.subr.mxu0 0.0
        %321 = vmatpush2.msra.mxu0 0.0
        %322 = vmatprep.subr.mxu0 0.0
        %323 = vmatpush2.msra.mxu0 0.0
        %324 = vmatprep.subr.mxu0 0.0
        %325 = vmatpush2.msra.mxu0 0.0
        %326 = vmatprep.subr.mxu0 0.0
        %327 = vmatpush2.msra.mxu0 0.0
        %328 = vmatprep.subr.mxu0 0.0
        %329 = vmatpush2.msra.mxu0 0.0
        %330 = vmatprep.subr.mxu0 0.0
        %331 = vmatpush2.msra.mxu0 0.0
        %332 = vmatprep.subr.mxu0 0.0
        %333 = vmatpush2.msra.mxu0 0.0
        %334 = vmatprep.mubr.f32.mxu0 0.0
        %335 = vmatmul.mubr.f32.gmra.mxu0 %v197
        %v336 = vpop.f32.mrf.mxu0
        %v337 = vadd.f32 0.0, %v336
        %v338 = vpop.f32.mrf.mxu0
        %339 = vdwg.mxu0
        %v341 = vsel %vm195, %v173, 0
        %343 = vmatprep.subr.mxu0 0.0
        %344 = vmatpush1.msra.mxu0 0.0
        %345 = vmatprep.subr.mxu0 0.0
        %346 = vmatpush1.msra.mxu0 0.0
        %347 = vmatprep.subr.mxu0 0.0
        %348 = vmatpush1.msra.mxu0 0.0
        %349 = vmatprep.subr.mxu0 0.0
        %350 = vmatpush1.msra.mxu0 0.0
        %351 = vmatprep.subr.mxu0 0.0
        %352 = vmatpush1.msra.mxu0 0.0
        %353 = vmatprep.subr.mxu0 0.0
        %354 = vmatpush1.msra.mxu0 0.0
        %355 = vmatprep.subr.mxu0 0.0
        %356 = vmatpush1.msra.mxu0 0.0
        %357 = vmatprep.subr.mxu0 0.0
        %358 = vmatpush1.msra.mxu0 0.0
        %359 = vmatprep.subr.mxu0 0.0
        %360 = vmatpush1.msra.mxu0 0.0
        %361 = vmatprep.subr.mxu0 0.0
        %362 = vmatpush1.msra.mxu0 0.0
        %363 = vmatprep.subr.mxu0 0.0
        %364 = vmatpush1.msra.mxu0 0.0
        %365 = vmatprep.subr.mxu0 0.0
        %366 = vmatpush1.msra.mxu0 0.0
        %367 = vmatprep.subr.mxu0 0.0
        %368 = vmatpush1.msra.mxu0 0.0
        %369 = vmatprep.subr.mxu0 0.0
        %370 = vmatpush1.msra.mxu0 0.0
        %371 = vmatprep.subr.mxu0 0.0
        %372 = vmatpush1.msra.mxu0 0.0
        %373 = vmatprep.subr.mxu0 %v170
        %374 = vmatpush1.msra.mxu0 %v169
        %375 = vmatprep.subr.mxu0 0.0
        %376 = vmatpush2.msra.mxu0 0.0
        %377 = vmatprep.subr.mxu0 0.0
        %378 = vmatpush2.msra.mxu0 0.0
        %379 = vmatprep.subr.mxu0 0.0
        %380 = vmatpush2.msra.mxu0 0.0
        %381 = vmatprep.subr.mxu0 0.0
        %382 = vmatpush2.msra.mxu0 0.0
        %383 = vmatprep.subr.mxu0 0.0
        %384 = vmatpush2.msra.mxu0 0.0
        %385 = vmatprep.subr.mxu0 0.0
        %386 = vmatpush2.msra.mxu0 0.0
        %387 = vmatprep.subr.mxu0 0.0
        %388 = vmatpush2.msra.mxu0 0.0
        %389 = vmatprep.subr.mxu0 0.0
        %390 = vmatpush2.msra.mxu0 0.0
        %391 = vmatprep.subr.mxu0 0.0
        %392 = vmatpush2.msra.mxu0 0.0
        %393 = vmatprep.subr.mxu0 0.0
        %394 = vmatpush2.msra.mxu0 0.0
        %395 = vmatprep.subr.mxu0 0.0
        %396 = vmatpush2.msra.mxu0 0.0
        %397 = vmatprep.subr.mxu0 0.0
        %398 = vmatpush2.msra.mxu0 0.0
        %399 = vmatprep.subr.mxu0 0.0
        %400 = vmatpush2.msra.mxu0 0.0
        %401 = vmatprep.subr.mxu0 0.0
        %402 = vmatpush2.msra.mxu0 0.0
        %403 = vmatprep.subr.mxu0 0.0
        %404 = vmatpush2.msra.mxu0 0.0
        %405 = vmatprep.subr.mxu0 0.0
        %406 = vmatpush2.msra.mxu0 0.0
        %407 = vmatprep.mubr.f32.mxu0 0.0
        %408 = vmatmul.mubr.f32.gmra.mxu0 %v341
        %v409 = vpop.f32.mrf.mxu0
        %v410 = vadd.f32 %v266, %v409
        %v411 = vpop.f32.mrf.mxu0
        %v412 = vadd.f32 %v268, %v411
        %413 = vdwg.mxu0
        %414 = vmatprep.subr.mxu0 0.0
        %415 = vmatpush1.msra.mxu0 0.0
        %416 = vmatprep.subr.mxu0 0.0
        %417 = vmatpush1.msra.mxu0 0.0
        %418 = vmatprep.subr.mxu0 0.0
        %419 = vmatpush1.msra.mxu0 0.0
        %420 = vmatprep.subr.mxu0 0.0
        %421 = vmatpush1.msra.mxu0 0.0
        %422 = vmatprep.subr.mxu0 0.0
        %423 = vmatpush1.msra.mxu0 0.0
        %424 = vmatprep.subr.mxu0 0.0
        %425 = vmatpush1.msra.mxu0 0.0
        %426 = vmatprep.subr.mxu0 0.0
        %427 = vmatpush1.msra.mxu0 0.0
        %428 = vmatprep.subr.mxu0 0.0
        %429 = vmatpush1.msra.mxu0 0.0
        %430 = vmatprep.subr.mxu0 0.0
        %431 = vmatpush1.msra.mxu0 0.0
        %432 = vmatprep.subr.mxu0 0.0
        %433 = vmatpush1.msra.mxu0 0.0
        %434 = vmatprep.subr.mxu0 0.0
        %435 = vmatpush1.msra.mxu0 0.0
        %436 = vmatprep.subr.mxu0 0.0
        %437 = vmatpush1.msra.mxu0 0.0
        %438 = vmatprep.subr.mxu0 0.0
        %439 = vmatpush1.msra.mxu0 0.0
        %440 = vmatprep.subr.mxu0 0.0
        %441 = vmatpush1.msra.mxu0 0.0
        %442 = vmatprep.subr.mxu0 0.0
        %443 = vmatpush1.msra.mxu0 0.0
        %444 = vmatprep.subr.mxu0 0.0
        %445 = vmatpush1.msra.mxu0 %v171
        %446 = vmatprep.subr.mxu0 0.0
        %447 = vmatpush2.msra.mxu0 0.0
        %448 = vmatprep.subr.mxu0 0.0
        %449 = vmatpush2.msra.mxu0 0.0
        %450 = vmatprep.subr.mxu0 0.0
        %451 = vmatpush2.msra.mxu0 0.0
        %452 = vmatprep.subr.mxu0 0.0
        %453 = vmatpush2.msra.mxu0 0.0
        %454 = vmatprep.subr.mxu0 0.0
        %455 = vmatpush2.msra.mxu0 0.0
        %456 = vmatprep.subr.mxu0 0.0
        %457 = vmatpush2.msra.mxu0 0.0
        %458 = vmatprep.subr.mxu0 0.0
        %459 = vmatpush2.msra.mxu0 0.0
        %460 = vmatprep.subr.mxu0 0.0
        %461 = vmatpush2.msra.mxu0 0.0
        %462 = vmatprep.subr.mxu0 0.0
        %463 = vmatpush2.msra.mxu0 0.0
        %464 = vmatprep.subr.mxu0 0.0
        %465 = vmatpush2.msra.mxu0 0.0
        %466 = vmatprep.subr.mxu0 0.0
        %467 = vmatpush2.msra.mxu0 0.0
        %468 = vmatprep.subr.mxu0 0.0
        %469 = vmatpush2.msra.mxu0 0.0
        %470 = vmatprep.subr.mxu0 0.0
        %471 = vmatpush2.msra.mxu0 0.0
        %472 = vmatprep.subr.mxu0 0.0
        %473 = vmatpush2.msra.mxu0 0.0
        %474 = vmatprep.subr.mxu0 0.0
        %475 = vmatpush2.msra.mxu0 0.0
        %476 = vmatprep.subr.mxu0 0.0
        %477 = vmatpush2.msra.mxu0 0.0
        %478 = vmatprep.mubr.f32.mxu0 0.0
        %479 = vmatmul.mubr.f32.gmra.mxu0 %v341
        %v480 = vpop.f32.mrf.mxu0
        %v481 = vadd.f32 %v337, %v480
        %v482 = vpop.f32.mrf.mxu0
        %483 = vdwg.mxu0
        %s484 = scalar_lea.vmem %s1, 16
        %v485 = vld [vmem:[%s484] sm:$0xff]
        %486 = vrot.lane.b32.xlu0 %v169, 126
        %v487 = vpop.permute.xlu0 %486
        %488 = vrot.lane.b32.xlu0 %v170, 126
        %v489 = vpop.permute.xlu0 %488
        %490 = vrot.lane.b32.xlu0 %v171, 126
        %v491 = vpop.permute.xlu0 %490
        %492 = vrot.lane.b32.xlu0 %v172, 126
        %v493 = vpop.permute.xlu0 %492
        %vm494 = vcmask 1031168
        %v495 = vsel %vm494, %v487, %v489
        %v496 = vsel %vm494, %v489, %v491
        %v497 = vsel %vm494, %v491, %v493
        %v502 = vsel %vm195, %v485, 0
        %504 = vmatprep.subr.mxu0 0.0
        %505 = vmatpush1.msra.mxu0 0.0
        %506 = vmatprep.subr.mxu0 0.0
        %507 = vmatpush1.msra.mxu0 0.0
        %508 = vmatprep.subr.mxu0 0.0
        %509 = vmatpush1.msra.mxu0 0.0
        %510 = vmatprep.subr.mxu0 0.0
        %511 = vmatpush1.msra.mxu0 0.0
        %512 = vmatprep.subr.mxu0 0.0
        %513 = vmatpush1.msra.mxu0 0.0
        %514 = vmatprep.subr.mxu0 0.0
        %515 = vmatpush1.msra.mxu0 0.0
        %516 = vmatprep.subr.mxu0 0.0
        %517 = vmatpush1.msra.mxu0 0.0
        %518 = vmatprep.subr.mxu0 0.0
        %519 = vmatpush1.msra.mxu0 0.0
        %520 = vmatprep.subr.mxu0 0.0
        %521 = vmatpush1.msra.mxu0 0.0
        %522 = vmatprep.subr.mxu0 0.0
        %523 = vmatpush1.msra.mxu0 0.0
        %524 = vmatprep.subr.mxu0 0.0
        %525 = vmatpush1.msra.mxu0 0.0
        %526 = vmatprep.subr.mxu0 0.0
        %527 = vmatpush1.msra.mxu0 0.0
        %528 = vmatprep.subr.mxu0 0.0
        %529 = vmatpush1.msra.mxu0 0.0
        %530 = vmatprep.subr.mxu0 0.0
        %531 = vmatpush1.msra.mxu0 0.0
        %532 = vmatprep.subr.mxu0 0.0
        %533 = vmatpush1.msra.mxu0 0.0
        %534 = vmatprep.subr.mxu0 %v496
        %535 = vmatpush1.msra.mxu0 %v495
        %536 = vmatprep.subr.mxu0 0.0
        %537 = vmatpush2.msra.mxu0 0.0
        %538 = vmatprep.subr.mxu0 0.0
        %539 = vmatpush2.msra.mxu0 0.0
        %540 = vmatprep.subr.mxu0 0.0
        %541 = vmatpush2.msra.mxu0 0.0
        %542 = vmatprep.subr.mxu0 0.0
        %543 = vmatpush2.msra.mxu0 0.0
        %544 = vmatprep.subr.mxu0 0.0
        %545 = vmatpush2.msra.mxu0 0.0
        %546 = vmatprep.subr.mxu0 0.0
        %547 = vmatpush2.msra.mxu0 0.0
        %548 = vmatprep.subr.mxu0 0.0
        %549 = vmatpush2.msra.mxu0 0.0
        %550 = vmatprep.subr.mxu0 0.0
        %551 = vmatpush2.msra.mxu0 0.0
        %552 = vmatprep.subr.mxu0 0.0
        %553 = vmatpush2.msra.mxu0 0.0
        %554 = vmatprep.subr.mxu0 0.0
        %555 = vmatpush2.msra.mxu0 0.0
        %556 = vmatprep.subr.mxu0 0.0
        %557 = vmatpush2.msra.mxu0 0.0
        %558 = vmatprep.subr.mxu0 0.0
        %559 = vmatpush2.msra.mxu0 0.0
        %560 = vmatprep.subr.mxu0 0.0
        %561 = vmatpush2.msra.mxu0 0.0
        %562 = vmatprep.subr.mxu0 0.0
        %563 = vmatpush2.msra.mxu0 0.0
        %564 = vmatprep.subr.mxu0 0.0
        %565 = vmatpush2.msra.mxu0 0.0
        %566 = vmatprep.subr.mxu0 0.0
        %567 = vmatpush2.msra.mxu0 0.0
        %568 = vmatprep.mubr.f32.mxu0 0.0
        %569 = vmatmul.mubr.f32.gmra.mxu0 %v502
        %v570 = vpop.f32.mrf.mxu0
        %v571 = vadd.f32 0.0, %v570
        %v572 = vpop.f32.mrf.mxu0
        %v573 = vadd.f32 0.0, %v572
        %574 = vdwg.mxu0
        %575 = vmatprep.subr.mxu0 0.0
        %576 = vmatpush1.msra.mxu0 0.0
        %577 = vmatprep.subr.mxu0 0.0
        %578 = vmatpush1.msra.mxu0 0.0
        %579 = vmatprep.subr.mxu0 0.0
        %580 = vmatpush1.msra.mxu0 0.0
        %581 = vmatprep.subr.mxu0 0.0
        %582 = vmatpush1.msra.mxu0 0.0
        %583 = vmatprep.subr.mxu0 0.0
        %584 = vmatpush1.msra.mxu0 0.0
        %585 = vmatprep.subr.mxu0 0.0
        %586 = vmatpush1.msra.mxu0 0.0
        %587 = vmatprep.subr.mxu0 0.0
        %588 = vmatpush1.msra.mxu0 0.0
        %589 = vmatprep.subr.mxu0 0.0
        %590 = vmatpush1.msra.mxu0 0.0
        %591 = vmatprep.subr.mxu0 0.0
        %592 = vmatpush1.msra.mxu0 0.0
        %593 = vmatprep.subr.mxu0 0.0
        %594 = vmatpush1.msra.mxu0 0.0
        %595 = vmatprep.subr.mxu0 0.0
        %596 = vmatpush1.msra.mxu0 0.0
        %597 = vmatprep.subr.mxu0 0.0
        %598 = vmatpush1.msra.mxu0 0.0
        %599 = vmatprep.subr.mxu0 0.0
        %600 = vmatpush1.msra.mxu0 0.0
        %601 = vmatprep.subr.mxu0 0.0
        %602 = vmatpush1.msra.mxu0 0.0
        %603 = vmatprep.subr.mxu0 0.0
        %604 = vmatpush1.msra.mxu0 0.0
        %605 = vmatprep.subr.mxu0 0.0
        %606 = vmatpush1.msra.mxu0 %v497
        %607 = vmatprep.subr.mxu0 0.0
        %608 = vmatpush2.msra.mxu0 0.0
        %609 = vmatprep.subr.mxu0 0.0
        %610 = vmatpush2.msra.mxu0 0.0
        %611 = vmatprep.subr.mxu0 0.0
        %612 = vmatpush2.msra.mxu0 0.0
        %613 = vmatprep.subr.mxu0 0.0
        %614 = vmatpush2.msra.mxu0 0.0
        %615 = vmatprep.subr.mxu0 0.0
        %616 = vmatpush2.msra.mxu0 0.0
        %617 = vmatprep.subr.mxu0 0.0
        %618 = vmatpush2.msra.mxu0 0.0
        %619 = vmatprep.subr.mxu0 0.0
        %620 = vmatpush2.msra.mxu0 0.0
        %621 = vmatprep.subr.mxu0 0.0
        %622 = vmatpush2.msra.mxu0 0.0
        %623 = vmatprep.subr.mxu0 0.0
        %624 = vmatpush2.msra.mxu0 0.0
        %625 = vmatprep.subr.mxu0 0.0
        %626 = vmatpush2.msra.mxu0 0.0
        %627 = vmatprep.subr.mxu0 0.0
        %628 = vmatpush2.msra.mxu0 0.0
        %629 = vmatprep.subr.mxu0 0.0
        %630 = vmatpush2.msra.mxu0 0.0
        %631 = vmatprep.subr.mxu0 0.0
        %632 = vmatpush2.msra.mxu0 0.0
        %633 = vmatprep.subr.mxu0 0.0
        %634 = vmatpush2.msra.mxu0 0.0
        %635 = vmatprep.subr.mxu0 0.0
        %636 = vmatpush2.msra.mxu0 0.0
        %637 = vmatprep.subr.mxu0 0.0
        %638 = vmatpush2.msra.mxu0 0.0
        %639 = vmatprep.mubr.f32.mxu0 0.0
        %640 = vmatmul.mubr.f32.gmra.mxu0 %v502
        %v641 = vpop.f32.mrf.mxu0
        %v642 = vadd.f32 0.0, %v641
        %v643 = vpop.f32.mrf.mxu0
        %644 = vdwg.mxu0
        %v645 = vadd.f32 %v410, %v571
        %v646 = vadd.f32 %v412, %v573
        %v647 = vadd.f32 %v481, %v642
        %s648 = scalar_lea.vmem %s1, 24
        %v649 = vld [vmem:[%s648] sm:$0xff]
        %650 = vrot.lane.b32.xlu0 %v169, 125
        %v651 = vpop.permute.xlu0 %650
        %652 = vrot.lane.b32.xlu0 %v170, 125
        %v653 = vpop.permute.xlu0 %652
        %654 = vrot.lane.b32.xlu0 %v171, 125
        %v655 = vpop.permute.xlu0 %654
        %656 = vrot.lane.b32.xlu0 %v172, 125
        %v657 = vpop.permute.xlu0 %656
        %vm658 = vcmask 1022976
        %v659 = vsel %vm658, %v651, %v653
        %v660 = vsel %vm658, %v653, %v655
        %v661 = vsel %vm658, %v655, %v657
        %v666 = vsel %vm195, %v649, 0
        %668 = vmatprep.subr.mxu0 0.0
        %669 = vmatpush1.msra.mxu0 0.0
        %670 = vmatprep.subr.mxu0 0.0
        %671 = vmatpush1.msra.mxu0 0.0
        %672 = vmatprep.subr.mxu0 0.0
        %673 = vmatpush1.msra.mxu0 0.0
        %674 = vmatprep.subr.mxu0 0.0
        %675 = vmatpush1.msra.mxu0 0.0
        %676 = vmatprep.subr.mxu0 0.0
        %677 = vmatpush1.msra.mxu0 0.0
        %678 = vmatprep.subr.mxu0 0.0
        %679 = vmatpush1.msra.mxu0 0.0
        %680 = vmatprep.subr.mxu0 0.0
        %681 = vmatpush1.msra.mxu0 0.0
        %682 = vmatprep.subr.mxu0 0.0
        %683 = vmatpush1.msra.mxu0 0.0
        %684 = vmatprep.subr.mxu0 0.0
        %685 = vmatpush1.msra.mxu0 0.0
        %686 = vmatprep.subr.mxu0 0.0
        %687 = vmatpush1.msra.mxu0 0.0
        %688 = vmatprep.subr.mxu0 0.0
        %689 = vmatpush1.msra.mxu0 0.0
        %690 = vmatprep.subr.mxu0 0.0
        %691 = vmatpush1.msra.mxu0 0.0
        %692 = vmatprep.subr.mxu0 0.0
        %693 = vmatpush1.msra.mxu0 0.0
        %694 = vmatprep.subr.mxu0 0.0
        %695 = vmatpush1.msra.mxu0 0.0
        %696 = vmatprep.subr.mxu0 0.0
        %697 = vmatpush1.msra.mxu0 0.0
        %698 = vmatprep.subr.mxu0 %v660
        %699 = vmatpush1.msra.mxu0 %v659
        %700 = vmatprep.subr.mxu0 0.0
        %701 = vmatpush2.msra.mxu0 0.0
        %702 = vmatprep.subr.mxu0 0.0
        %703 = vmatpush2.msra.mxu0 0.0
        %704 = vmatprep.subr.mxu0 0.0
        %705 = vmatpush2.msra.mxu0 0.0
        %706 = vmatprep.subr.mxu0 0.0
        %707 = vmatpush2.msra.mxu0 0.0
        %708 = vmatprep.subr.mxu0 0.0
        %709 = vmatpush2.msra.mxu0 0.0
        %710 = vmatprep.subr.mxu0 0.0
        %711 = vmatpush2.msra.mxu0 0.0
        %712 = vmatprep.subr.mxu0 0.0
        %713 = vmatpush2.msra.mxu0 0.0
        %714 = vmatprep.subr.mxu0 0.0
        %715 = vmatpush2.msra.mxu0 0.0
        %716 = vmatprep.subr.mxu0 0.0
        %717 = vmatpush2.msra.mxu0 0.0
        %718 = vmatprep.subr.mxu0 0.0
        %719 = vmatpush2.msra.mxu0 0.0
        %720 = vmatprep.subr.mxu0 0.0
        %721 = vmatpush2.msra.mxu0 0.0
        %722 = vmatprep.subr.mxu0 0.0
        %723 = vmatpush2.msra.mxu0 0.0
        %724 = vmatprep.subr.mxu0 0.0
        %725 = vmatpush2.msra.mxu0 0.0
        %726 = vmatprep.subr.mxu0 0.0
        %727 = vmatpush2.msra.mxu0 0.0
        %728 = vmatprep.subr.mxu0 0.0
        %729 = vmatpush2.msra.mxu0 0.0
        %730 = vmatprep.subr.mxu0 0.0
        %731 = vmatpush2.msra.mxu0 0.0
        %732 = vmatprep.mubr.f32.mxu0 0.0
        %733 = vmatmul.mubr.f32.gmra.mxu0 %v666
        %v734 = vpop.f32.mrf.mxu0
        %v735 = vadd.f32 0.0, %v734
        %v736 = vpop.f32.mrf.mxu0
        %v737 = vadd.f32 0.0, %v736
        %738 = vdwg.mxu0
        %739 = vmatprep.subr.mxu0 0.0
        %740 = vmatpush1.msra.mxu0 0.0
        %741 = vmatprep.subr.mxu0 0.0
        %742 = vmatpush1.msra.mxu0 0.0
        %743 = vmatprep.subr.mxu0 0.0
        %744 = vmatpush1.msra.mxu0 0.0
        %745 = vmatprep.subr.mxu0 0.0
        %746 = vmatpush1.msra.mxu0 0.0
        %747 = vmatprep.subr.mxu0 0.0
        %748 = vmatpush1.msra.mxu0 0.0
        %749 = vmatprep.subr.mxu0 0.0
        %750 = vmatpush1.msra.mxu0 0.0
        %751 = vmatprep.subr.mxu0 0.0
        %752 = vmatpush1.msra.mxu0 0.0
        %753 = vmatprep.subr.mxu0 0.0
        %754 = vmatpush1.msra.mxu0 0.0
        %755 = vmatprep.subr.mxu0 0.0
        %756 = vmatpush1.msra.mxu0 0.0
        %757 = vmatprep.subr.mxu0 0.0
        %758 = vmatpush1.msra.mxu0 0.0
        %759 = vmatprep.subr.mxu0 0.0
        %760 = vmatpush1.msra.mxu0 0.0
        %761 = vmatprep.subr.mxu0 0.0
        %762 = vmatpush1.msra.mxu0 0.0
        %763 = vmatprep.subr.mxu0 0.0
        %764 = vmatpush1.msra.mxu0 0.0
        %765 = vmatprep.subr.mxu0 0.0
        %766 = vmatpush1.msra.mxu0 0.0
        %767 = vmatprep.subr.mxu0 0.0
        %768 = vmatpush1.msra.mxu0 0.0
        %769 = vmatprep.subr.mxu0 0.0
        %770 = vmatpush1.msra.mxu0 %v661
        %771 = vmatprep.subr.mxu0 0.0
        %772 = vmatpush2.msra.mxu0 0.0
        %773 = vmatprep.subr.mxu0 0.0
        %774 = vmatpush2.msra.mxu0 0.0
        %775 = vmatprep.subr.mxu0 0.0
        %776 = vmatpush2.msra.mxu0 0.0
        %777 = vmatprep.subr.mxu0 0.0
        %778 = vmatpush2.msra.mxu0 0.0
        %779 = vmatprep.subr.mxu0 0.0
        %780 = vmatpush2.msra.mxu0 0.0
        %781 = vmatprep.subr.mxu0 0.0
        %782 = vmatpush2.msra.mxu0 0.0
        %783 = vmatprep.subr.mxu0 0.0
        %784 = vmatpush2.msra.mxu0 0.0
        %785 = vmatprep.subr.mxu0 0.0
        %786 = vmatpush2.msra.mxu0 0.0
        %787 = vmatprep.subr.mxu0 0.0
        %788 = vmatpush2.msra.mxu0 0.0
        %789 = vmatprep.subr.mxu0 0.0
        %790 = vmatpush2.msra.mxu0 0.0
        %791 = vmatprep.subr.mxu0 0.0
        %792 = vmatpush2.msra.mxu0 0.0
        %793 = vmatprep.subr.mxu0 0.0
        %794 = vmatpush2.msra.mxu0 0.0
        %795 = vmatprep.subr.mxu0 0.0
        %796 = vmatpush2.msra.mxu0 0.0
        %797 = vmatprep.subr.mxu0 0.0
        %798 = vmatpush2.msra.mxu0 0.0
        %799 = vmatprep.subr.mxu0 0.0
        %800 = vmatpush2.msra.mxu0 0.0
        %801 = vmatprep.subr.mxu0 0.0
        %802 = vmatpush2.msra.mxu0 0.0
        %803 = vmatprep.mubr.f32.mxu0 0.0
        %804 = vmatmul.mubr.f32.gmra.mxu0 %v666
        %v805 = vpop.f32.mrf.mxu0
        %v806 = vadd.f32 0.0, %v805
        %v807 = vpop.f32.mrf.mxu0
        %808 = vdwg.mxu0
        %v809 = vadd.f32 %v645, %v735
        %v810 = vadd.f32 %v646, %v737
        %v811 = vadd.f32 %v647, %v806
        %s812 = scalar_lea.vmem %s1, 32
        %v813 = vld [vmem:[%s812] sm:$0xff]
        %814 = vrot.lane.b32.xlu0 %v169, 124
        %v815 = vpop.permute.xlu0 %814
        %816 = vrot.lane.b32.xlu0 %v170, 124
        %v817 = vpop.permute.xlu0 %816
        %818 = vrot.lane.b32.xlu0 %v171, 124
        %v819 = vpop.permute.xlu0 %818
        %820 = vrot.lane.b32.xlu0 %v172, 124
        %v821 = vpop.permute.xlu0 %820
        %vm822 = vcmask 1014784
        %v823 = vsel %vm822, %v815, %v817
        %v824 = vsel %vm822, %v817, %v819
        %v825 = vsel %vm822, %v819, %v821
        %v830 = vsel %vm195, %v813, 0
        %832 = vmatprep.subr.mxu0 0.0
        %833 = vmatpush1.msra.mxu0 0.0
        %834 = vmatprep.subr.mxu0 0.0
        %835 = vmatpush1.msra.mxu0 0.0
        %836 = vmatprep.subr.mxu0 0.0
        %837 = vmatpush1.msra.mxu0 0.0
        %838 = vmatprep.subr.mxu0 0.0
        %839 = vmatpush1.msra.mxu0 0.0
        %840 = vmatprep.subr.mxu0 0.0
        %841 = vmatpush1.msra.mxu0 0.0
        %842 = vmatprep.subr.mxu0 0.0
        %843 = vmatpush1.msra.mxu0 0.0
        %844 = vmatprep.subr.mxu0 0.0
        %845 = vmatpush1.msra.mxu0 0.0
        %846 = vmatprep.subr.mxu0 0.0
        %847 = vmatpush1.msra.mxu0 0.0
        %848 = vmatprep.subr.mxu0 0.0
        %849 = vmatpush1.msra.mxu0 0.0
        %850 = vmatprep.subr.mxu0 0.0
        %851 = vmatpush1.msra.mxu0 0.0
        %852 = vmatprep.subr.mxu0 0.0
        %853 = vmatpush1.msra.mxu0 0.0
        %854 = vmatprep.subr.mxu0 0.0
        %855 = vmatpush1.msra.mxu0 0.0
        %856 = vmatprep.subr.mxu0 0.0
        %857 = vmatpush1.msra.mxu0 0.0
        %858 = vmatprep.subr.mxu0 0.0
        %859 = vmatpush1.msra.mxu0 0.0
        %860 = vmatprep.subr.mxu0 0.0
        %861 = vmatpush1.msra.mxu0 0.0
        %862 = vmatprep.subr.mxu0 %v824
        %863 = vmatpush1.msra.mxu0 %v823
        %864 = vmatprep.subr.mxu0 0.0
        %865 = vmatpush2.msra.mxu0 0.0
        %866 = vmatprep.subr.mxu0 0.0
        %867 = vmatpush2.msra.mxu0 0.0
        %868 = vmatprep.subr.mxu0 0.0
        %869 = vmatpush2.msra.mxu0 0.0
        %870 = vmatprep.subr.mxu0 0.0
        %871 = vmatpush2.msra.mxu0 0.0
        %872 = vmatprep.subr.mxu0 0.0
        %873 = vmatpush2.msra.mxu0 0.0
        %874 = vmatprep.subr.mxu0 0.0
        %875 = vmatpush2.msra.mxu0 0.0
        %876 = vmatprep.subr.mxu0 0.0
        %877 = vmatpush2.msra.mxu0 0.0
        %878 = vmatprep.subr.mxu0 0.0
        %879 = vmatpush2.msra.mxu0 0.0
        %880 = vmatprep.subr.mxu0 0.0
        %881 = vmatpush2.msra.mxu0 0.0
        %882 = vmatprep.subr.mxu0 0.0
        %883 = vmatpush2.msra.mxu0 0.0
        %884 = vmatprep.subr.mxu0 0.0
        %885 = vmatpush2.msra.mxu0 0.0
        %886 = vmatprep.subr.mxu0 0.0
        %887 = vmatpush2.msra.mxu0 0.0
        %888 = vmatprep.subr.mxu0 0.0
        %889 = vmatpush2.msra.mxu0 0.0
        %890 = vmatprep.subr.mxu0 0.0
        %891 = vmatpush2.msra.mxu0 0.0
        %892 = vmatprep.subr.mxu0 0.0
        %893 = vmatpush2.msra.mxu0 0.0
        %894 = vmatprep.subr.mxu0 0.0
        %895 = vmatpush2.msra.mxu0 0.0
        %896 = vmatprep.mubr.f32.mxu0 0.0
        %897 = vmatmul.mubr.f32.gmra.mxu0 %v830
        %v898 = vpop.f32.mrf.mxu0
        %v899 = vadd.f32 0.0, %v898
        %v900 = vpop.f32.mrf.mxu0
        %v901 = vadd.f32 0.0, %v900
        %902 = vdwg.mxu0
        %903 = vmatprep.subr.mxu0 0.0
        %904 = vmatpush1.msra.mxu0 0.0
        %905 = vmatprep.subr.mxu0 0.0
        %906 = vmatpush1.msra.mxu0 0.0
        %907 = vmatprep.subr.mxu0 0.0
        %908 = vmatpush1.msra.mxu0 0.0
        %909 = vmatprep.subr.mxu0 0.0
        %910 = vmatpush1.msra.mxu0 0.0
        %911 = vmatprep.subr.mxu0 0.0
        %912 = vmatpush1.msra.mxu0 0.0
        %913 = vmatprep.subr.mxu0 0.0
        %914 = vmatpush1.msra.mxu0 0.0
        %915 = vmatprep.subr.mxu0 0.0
        %916 = vmatpush1.msra.mxu0 0.0
        %917 = vmatprep.subr.mxu0 0.0
        %918 = vmatpush1.msra.mxu0 0.0
        %919 = vmatprep.subr.mxu0 0.0
        %920 = vmatpush1.msra.mxu0 0.0
        %921 = vmatprep.subr.mxu0 0.0
        %922 = vmatpush1.msra.mxu0 0.0
        %923 = vmatprep.subr.mxu0 0.0
        %924 = vmatpush1.msra.mxu0 0.0
        %925 = vmatprep.subr.mxu0 0.0
        %926 = vmatpush1.msra.mxu0 0.0
        %927 = vmatprep.subr.mxu0 0.0
        %928 = vmatpush1.msra.mxu0 0.0
        %929 = vmatprep.subr.mxu0 0.0
        %930 = vmatpush1.msra.mxu0 0.0
        %931 = vmatprep.subr.mxu0 0.0
        %932 = vmatpush1.msra.mxu0 0.0
        %933 = vmatprep.subr.mxu0 0.0
        %934 = vmatpush1.msra.mxu0 %v825
        %935 = vmatprep.subr.mxu0 0.0
        %936 = vmatpush2.msra.mxu0 0.0
        %937 = vmatprep.subr.mxu0 0.0
        %938 = vmatpush2.msra.mxu0 0.0
        %939 = vmatprep.subr.mxu0 0.0
        %940 = vmatpush2.msra.mxu0 0.0
        %941 = vmatprep.subr.mxu0 0.0
        %942 = vmatpush2.msra.mxu0 0.0
        %943 = vmatprep.subr.mxu0 0.0
        %944 = vmatpush2.msra.mxu0 0.0
        %945 = vmatprep.subr.mxu0 0.0
        %946 = vmatpush2.msra.mxu0 0.0
        %947 = vmatprep.subr.mxu0 0.0
        %948 = vmatpush2.msra.mxu0 0.0
        %949 = vmatprep.subr.mxu0 0.0
        %950 = vmatpush2.msra.mxu0 0.0
        %951 = vmatprep.subr.mxu0 0.0
        %952 = vmatpush2.msra.mxu0 0.0
        %953 = vmatprep.subr.mxu0 0.0
        %954 = vmatpush2.msra.mxu0 0.0
        %955 = vmatprep.subr.mxu0 0.0
        %956 = vmatpush2.msra.mxu0 0.0
        %957 = vmatprep.subr.mxu0 0.0
        %958 = vmatpush2.msra.mxu0 0.0
        %959 = vmatprep.subr.mxu0 0.0
        %960 = vmatpush2.msra.mxu0 0.0
        %961 = vmatprep.subr.mxu0 0.0
        %962 = vmatpush2.msra.mxu0 0.0
        %963 = vmatprep.subr.mxu0 0.0
        %964 = vmatpush2.msra.mxu0 0.0
        %965 = vmatprep.subr.mxu0 0.0
        %966 = vmatpush2.msra.mxu0 0.0
        %967 = vmatprep.mubr.f32.mxu0 0.0
        %968 = vmatmul.mubr.f32.gmra.mxu0 %v830
        %v969 = vpop.f32.mrf.mxu0
        %v970 = vadd.f32 0.0, %v969
        %v971 = vpop.f32.mrf.mxu0
        %972 = vdwg.mxu0
        %v973 = vadd.f32 %v809, %v899
        %v974 = vadd.f32 %v810, %v901
        %v975 = vadd.f32 %v811, %v970
        %s976 = scalar_lea.vmem %s1, 40
        %v977 = vld [vmem:[%s976] sm:$0xff]
        %978 = vrot.lane.b32.xlu0 %v169, 104
        %v979 = vpop.permute.xlu0 %978
        %980 = vrot.lane.b32.xlu0 %v170, 104
        %v981 = vpop.permute.xlu0 %980
        %982 = vrot.lane.b32.xlu0 %v171, 104
        %v983 = vpop.permute.xlu0 %982
        %984 = vrot.lane.b32.xlu0 %v172, 104
        %v985 = vpop.permute.xlu0 %984
        %vm986 = vcmask 850944
        %v987 = vsel %vm986, %v979, %v981
        %v988 = vsel %vm986, %v981, %v983
        %v989 = vsel %vm986, %v983, %v985
        %v994 = vsel %vm195, %v977, 0
        %996 = vmatprep.subr.mxu0 0.0
        %997 = vmatpush1.msra.mxu0 0.0
        %998 = vmatprep.subr.mxu0 0.0
        %999 = vmatpush1.msra.mxu0 0.0
        %1000 = vmatprep.subr.mxu0 0.0
        %1001 = vmatpush1.msra.mxu0 0.0
        %1002 = vmatprep.subr.mxu0 0.0
        %1003 = vmatpush1.msra.mxu0 0.0
        %1004 = vmatprep.subr.mxu0 0.0
        %1005 = vmatpush1.msra.mxu0 0.0
        %1006 = vmatprep.subr.mxu0 0.0
        %1007 = vmatpush1.msra.mxu0 0.0
        %1008 = vmatprep.subr.mxu0 0.0
        %1009 = vmatpush1.msra.mxu0 0.0
        %1010 = vmatprep.subr.mxu0 0.0
        %1011 = vmatpush1.msra.mxu0 0.0
        %1012 = vmatprep.subr.mxu0 0.0
        %1013 = vmatpush1.msra.mxu0 0.0
        %1014 = vmatprep.subr.mxu0 0.0
        %1015 = vmatpush1.msra.mxu0 0.0
        %1016 = vmatprep.subr.mxu0 0.0
        %1017 = vmatpush1.msra.mxu0 0.0
        %1018 = vmatprep.subr.mxu0 0.0
        %1019 = vmatpush1.msra.mxu0 0.0
        %1020 = vmatprep.subr.mxu0 0.0
        %1021 = vmatpush1.msra.mxu0 0.0
        %1022 = vmatprep.subr.mxu0 0.0
        %1023 = vmatpush1.msra.mxu0 0.0
        %1024 = vmatprep.subr.mxu0 0.0
        %1025 = vmatpush1.msra.mxu0 0.0
        %1026 = vmatprep.subr.mxu0 %v988
        %1027 = vmatpush1.msra.mxu0 %v987
        %1028 = vmatprep.subr.mxu0 0.0
        %1029 = vmatpush2.msra.mxu0 0.0
        %1030 = vmatprep.subr.mxu0 0.0
        %1031 = vmatpush2.msra.mxu0 0.0
        %1032 = vmatprep.subr.mxu0 0.0
        %1033 = vmatpush2.msra.mxu0 0.0
        %1034 = vmatprep.subr.mxu0 0.0
        %1035 = vmatpush2.msra.mxu0 0.0
        %1036 = vmatprep.subr.mxu0 0.0
        %1037 = vmatpush2.msra.mxu0 0.0
        %1038 = vmatprep.subr.mxu0 0.0
        %1039 = vmatpush2.msra.mxu0 0.0
        %1040 = vmatprep.subr.mxu0 0.0
        %1041 = vmatpush2.msra.mxu0 0.0
        %1042 = vmatprep.subr.mxu0 0.0
        %1043 = vmatpush2.msra.mxu0 0.0
        %1044 = vmatprep.subr.mxu0 0.0
        %1045 = vmatpush2.msra.mxu0 0.0
        %1046 = vmatprep.subr.mxu0 0.0
        %1047 = vmatpush2.msra.mxu0 0.0
        %1048 = vmatprep.subr.mxu0 0.0
        %1049 = vmatpush2.msra.mxu0 0.0
        %1050 = vmatprep.subr.mxu0 0.0
        %1051 = vmatpush2.msra.mxu0 0.0
        %1052 = vmatprep.subr.mxu0 0.0
        %1053 = vmatpush2.msra.mxu0 0.0
        %1054 = vmatprep.subr.mxu0 0.0
        %1055 = vmatpush2.msra.mxu0 0.0
        %1056 = vmatprep.subr.mxu0 0.0
        %1057 = vmatpush2.msra.mxu0 0.0
        %1058 = vmatprep.subr.mxu0 0.0
        %1059 = vmatpush2.msra.mxu0 0.0
        %1060 = vmatprep.mubr.f32.mxu0 0.0
        %1061 = vmatmul.mubr.f32.gmra.mxu0 %v994
        %v1062 = vpop.f32.mrf.mxu0
        %v1063 = vadd.f32 0.0, %v1062
        %v1064 = vpop.f32.mrf.mxu0
        %v1065 = vadd.f32 0.0, %v1064
        %1066 = vdwg.mxu0
        %1067 = vmatprep.subr.mxu0 0.0
        %1068 = vmatpush1.msra.mxu0 0.0
        %1069 = vmatprep.subr.mxu0 0.0
        %1070 = vmatpush1.msra.mxu0 0.0
        %1071 = vmatprep.subr.mxu0 0.0
        %1072 = vmatpush1.msra.mxu0 0.0
        %1073 = vmatprep.subr.mxu0 0.0
        %1074 = vmatpush1.msra.mxu0 0.0
        %1075 = vmatprep.subr.mxu0 0.0
        %1076 = vmatpush1.msra.mxu0 0.0
        %1077 = vmatprep.subr.mxu0 0.0
        %1078 = vmatpush1.msra.mxu0 0.0
        %1079 = vmatprep.subr.mxu0 0.0
        %1080 = vmatpush1.msra.mxu0 0.0
        %1081 = vmatprep.subr.mxu0 0.0
        %1082 = vmatpush1.msra.mxu0 0.0
        %1083 = vmatprep.subr.mxu0 0.0
        %1084 = vmatpush1.msra.mxu0 0.0
        %1085 = vmatprep.subr.mxu0 0.0
        %1086 = vmatpush1.msra.mxu0 0.0
        %1087 = vmatprep.subr.mxu0 0.0
        %1088 = vmatpush1.msra.mxu0 0.0
        %1089 = vmatprep.subr.mxu0 0.0
        %1090 = vmatpush1.msra.mxu0 0.0
        %1091 = vmatprep.subr.mxu0 0.0
        %1092 = vmatpush1.msra.mxu0 0.0
        %1093 = vmatprep.subr.mxu0 0.0
        %1094 = vmatpush1.msra.mxu0 0.0
        %1095 = vmatprep.subr.mxu0 0.0
        %1096 = vmatpush1.msra.mxu0 0.0
        %1097 = vmatprep.subr.mxu0 0.0
        %1098 = vmatpush1.msra.mxu0 %v989
        %1099 = vmatprep.subr.mxu0 0.0
        %1100 = vmatpush2.msra.mxu0 0.0
        %1101 = vmatprep.subr.mxu0 0.0
        %1102 = vmatpush2.msra.mxu0 0.0
        %1103 = vmatprep.subr.mxu0 0.0
        %1104 = vmatpush2.msra.mxu0 0.0
        %1105 = vmatprep.subr.mxu0 0.0
        %1106 = vmatpush2.msra.mxu0 0.0
        %1107 = vmatprep.subr.mxu0 0.0
        %1108 = vmatpush2.msra.mxu0 0.0
        %1109 = vmatprep.subr.mxu0 0.0
        %1110 = vmatpush2.msra.mxu0 0.0
        %1111 = vmatprep.subr.mxu0 0.0
        %1112 = vmatpush2.msra.mxu0 0.0
        %1113 = vmatprep.subr.mxu0 0.0
        %1114 = vmatpush2.msra.mxu0 0.0
        %1115 = vmatprep.subr.mxu0 0.0
        %1116 = vmatpush2.msra.mxu0 0.0
        %1117 = vmatprep.subr.mxu0 0.0
        %1118 = vmatpush2.msra.mxu0 0.0
        %1119 = vmatprep.subr.mxu0 0.0
        %1120 = vmatpush2.msra.mxu0 0.0
        %1121 = vmatprep.subr.mxu0 0.0
        %1122 = vmatpush2.msra.mxu0 0.0
        %1123 = vmatprep.subr.mxu0 0.0
        %1124 = vmatpush2.msra.mxu0 0.0
        %1125 = vmatprep.subr.mxu0 0.0
        %1126 = vmatpush2.msra.mxu0 0.0
        %1127 = vmatprep.subr.mxu0 0.0
        %1128 = vmatpush2.msra.mxu0 0.0
        %1129 = vmatprep.subr.mxu0 0.0
        %1130 = vmatpush2.msra.mxu0 0.0
        %1131 = vmatprep.mubr.f32.mxu0 0.0
        %1132 = vmatmul.mubr.f32.gmra.mxu0 %v994
        %v1133 = vpop.f32.mrf.mxu0
        %v1134 = vadd.f32 0.0, %v1133
        %v1135 = vpop.f32.mrf.mxu0
        %1136 = vdwg.mxu0
        %v1137 = vadd.f32 %v973, %v1063
        %v1138 = vadd.f32 %v974, %v1065
        %v1139 = vadd.f32 %v975, %v1134
        %s1140 = scalar_lea.vmem %s1, 48
        %v1141 = vld [vmem:[%s1140] sm:$0xff]
        %1142 = vrot.lane.b32.xlu0 %v169, 103
        %v1143 = vpop.permute.xlu0 %1142
        %1144 = vrot.lane.b32.xlu0 %v170, 103
        %v1145 = vpop.permute.xlu0 %1144
        %1146 = vrot.lane.b32.xlu0 %v171, 103
        %v1147 = vpop.permute.xlu0 %1146
        %1148 = vrot.lane.b32.xlu0 %v172, 103
        %v1149 = vpop.permute.xlu0 %1148
        %vm1150 = vcmask 842752
        %v1151 = vsel %vm1150, %v1143, %v1145
        %v1152 = vsel %vm1150, %v1145, %v1147
        %v1153 = vsel %vm1150, %v1147, %v1149
        %v1158 = vsel %vm195, %v1141, 0
        %1160 = vmatprep.subr.mxu0 0.0
        %1161 = vmatpush1.msra.mxu0 0.0
        %1162 = vmatprep.subr.mxu0 0.0
        %1163 = vmatpush1.msra.mxu0 0.0
        %1164 = vmatprep.subr.mxu0 0.0
        %1165 = vmatpush1.msra.mxu0 0.0
        %1166 = vmatprep.subr.mxu0 0.0
        %1167 = vmatpush1.msra.mxu0 0.0
        %1168 = vmatprep.subr.mxu0 0.0
        %1169 = vmatpush1.msra.mxu0 0.0
        %1170 = vmatprep.subr.mxu0 0.0
        %1171 = vmatpush1.msra.mxu0 0.0
        %1172 = vmatprep.subr.mxu0 0.0
        %1173 = vmatpush1.msra.mxu0 0.0
        %1174 = vmatprep.subr.mxu0 0.0
        %1175 = vmatpush1.msra.mxu0 0.0
        %1176 = vmatprep.subr.mxu0 0.0
        %1177 = vmatpush1.msra.mxu0 0.0
        %1178 = vmatprep.subr.mxu0 0.0
        %1179 = vmatpush1.msra.mxu0 0.0
        %1180 = vmatprep.subr.mxu0 0.0
        %1181 = vmatpush1.msra.mxu0 0.0
        %1182 = vmatprep.subr.mxu0 0.0
        %1183 = vmatpush1.msra.mxu0 0.0
        %1184 = vmatprep.subr.mxu0 0.0
        %1185 = vmatpush1.msra.mxu0 0.0
        %1186 = vmatprep.subr.mxu0 0.0
        %1187 = vmatpush1.msra.mxu0 0.0
        %1188 = vmatprep.subr.mxu0 0.0
        %1189 = vmatpush1.msra.mxu0 0.0
        %1190 = vmatprep.subr.mxu0 %v1152
        %1191 = vmatpush1.msra.mxu0 %v1151
        %1192 = vmatprep.subr.mxu0 0.0
        %1193 = vmatpush2.msra.mxu0 0.0
        %1194 = vmatprep.subr.mxu0 0.0
        %1195 = vmatpush2.msra.mxu0 0.0
        %1196 = vmatprep.subr.mxu0 0.0
        %1197 = vmatpush2.msra.mxu0 0.0
        %1198 = vmatprep.subr.mxu0 0.0
        %1199 = vmatpush2.msra.mxu0 0.0
        %1200 = vmatprep.subr.mxu0 0.0
        %1201 = vmatpush2.msra.mxu0 0.0
        %1202 = vmatprep.subr.mxu0 0.0
        %1203 = vmatpush2.msra.mxu0 0.0
        %1204 = vmatprep.subr.mxu0 0.0
        %1205 = vmatpush2.msra.mxu0 0.0
        %1206 = vmatprep.subr.mxu0 0.0
        %1207 = vmatpush2.msra.mxu0 0.0
        %1208 = vmatprep.subr.mxu0 0.0
        %1209 = vmatpush2.msra.mxu0 0.0
        %1210 = vmatprep.subr.mxu0 0.0
        %1211 = vmatpush2.msra.mxu0 0.0
        %1212 = vmatprep.subr.mxu0 0.0
        %1213 = vmatpush2.msra.mxu0 0.0
        %1214 = vmatprep.subr.mxu0 0.0
        %1215 = vmatpush2.msra.mxu0 0.0
        %1216 = vmatprep.subr.mxu0 0.0
        %1217 = vmatpush2.msra.mxu0 0.0
        %1218 = vmatprep.subr.mxu0 0.0
        %1219 = vmatpush2.msra.mxu0 0.0
        %1220 = vmatprep.subr.mxu0 0.0
        %1221 = vmatpush2.msra.mxu0 0.0
        %1222 = vmatprep.subr.mxu0 0.0
        %1223 = vmatpush2.msra.mxu0 0.0
        %1224 = vmatprep.mubr.f32.mxu0 0.0
        %1225 = vmatmul.mubr.f32.gmra.mxu0 %v1158
        %v1226 = vpop.f32.mrf.mxu0
        %v1227 = vadd.f32 0.0, %v1226
        %v1228 = vpop.f32.mrf.mxu0
        %v1229 = vadd.f32 0.0, %v1228
        %1230 = vdwg.mxu0
        %1231 = vmatprep.subr.mxu0 0.0
        %1232 = vmatpush1.msra.mxu0 0.0
        %1233 = vmatprep.subr.mxu0 0.0
        %1234 = vmatpush1.msra.mxu0 0.0
        %1235 = vmatprep.subr.mxu0 0.0
        %1236 = vmatpush1.msra.mxu0 0.0
        %1237 = vmatprep.subr.mxu0 0.0
        %1238 = vmatpush1.msra.mxu0 0.0
        %1239 = vmatprep.subr.mxu0 0.0
        %1240 = vmatpush1.msra.mxu0 0.0
        %1241 = vmatprep.subr.mxu0 0.0
        %1242 = vmatpush1.msra.mxu0 0.0
        %1243 = vmatprep.subr.mxu0 0.0
        %1244 = vmatpush1.msra.mxu0 0.0
        %1245 = vmatprep.subr.mxu0 0.0
        %1246 = vmatpush1.msra.mxu0 0.0
        %1247 = vmatprep.subr.mxu0 0.0
        %1248 = vmatpush1.msra.mxu0 0.0
        %1249 = vmatprep.subr.mxu0 0.0
        %1250 = vmatpush1.msra.mxu0 0.0
        %1251 = vmatprep.subr.mxu0 0.0
        %1252 = vmatpush1.msra.mxu0 0.0
        %1253 = vmatprep.subr.mxu0 0.0
        %1254 = vmatpush1.msra.mxu0 0.0
        %1255 = vmatprep.subr.mxu0 0.0
        %1256 = vmatpush1.msra.mxu0 0.0
        %1257 = vmatprep.subr.mxu0 0.0
        %1258 = vmatpush1.msra.mxu0 0.0
        %1259 = vmatprep.subr.mxu0 0.0
        %1260 = vmatpush1.msra.mxu0 0.0
        %1261 = vmatprep.subr.mxu0 0.0
        %1262 = vmatpush1.msra.mxu0 %v1153
        %1263 = vmatprep.subr.mxu0 0.0
        %1264 = vmatpush2.msra.mxu0 0.0
        %1265 = vmatprep.subr.mxu0 0.0
        %1266 = vmatpush2.msra.mxu0 0.0
        %1267 = vmatprep.subr.mxu0 0.0
        %1268 = vmatpush2.msra.mxu0 0.0
        %1269 = vmatprep.subr.mxu0 0.0
        %1270 = vmatpush2.msra.mxu0 0.0
        %1271 = vmatprep.subr.mxu0 0.0
        %1272 = vmatpush2.msra.mxu0 0.0
        %1273 = vmatprep.subr.mxu0 0.0
        %1274 = vmatpush2.msra.mxu0 0.0
        %1275 = vmatprep.subr.mxu0 0.0
        %1276 = vmatpush2.msra.mxu0 0.0
        %1277 = vmatprep.subr.mxu0 0.0
        %1278 = vmatpush2.msra.mxu0 0.0
        %1279 = vmatprep.subr.mxu0 0.0
        %1280 = vmatpush2.msra.mxu0 0.0
        %1281 = vmatprep.subr.mxu0 0.0
        %1282 = vmatpush2.msra.mxu0 0.0
        %1283 = vmatprep.subr.mxu0 0.0
        %1284 = vmatpush2.msra.mxu0 0.0
        %1285 = vmatprep.subr.mxu0 0.0
        %1286 = vmatpush2.msra.mxu0 0.0
        %1287 = vmatprep.subr.mxu0 0.0
        %1288 = vmatpush2.msra.mxu0 0.0
        %1289 = vmatprep.subr.mxu0 0.0
        %1290 = vmatpush2.msra.mxu0 0.0
        %1291 = vmatprep.subr.mxu0 0.0
        %1292 = vmatpush2.msra.mxu0 0.0
        %1293 = vmatprep.subr.mxu0 0.0
        %1294 = vmatpush2.msra.mxu0 0.0
        %1295 = vmatprep.mubr.f32.mxu0 0.0
        %1296 = vmatmul.mubr.f32.gmra.mxu0 %v1158
        %v1297 = vpop.f32.mrf.mxu0
        %v1298 = vadd.f32 0.0, %v1297
        %v1299 = vpop.f32.mrf.mxu0
        %1300 = vdwg.mxu0
        %v1301 = vadd.f32 %v1137, %v1227
        %v1302 = vadd.f32 %v1138, %v1229
        %v1303 = vadd.f32 %v1139, %v1298
        %s1304 = scalar_lea.vmem %s1, 56
        %v1305 = vld [vmem:[%s1304] sm:$0xff]
        %1306 = vrot.lane.b32.xlu0 %v169, 102
        %v1307 = vpop.permute.xlu0 %1306
        %1308 = vrot.lane.b32.xlu0 %v170, 102
        %v1309 = vpop.permute.xlu0 %1308
        %1310 = vrot.lane.b32.xlu0 %v171, 102
        %v1311 = vpop.permute.xlu0 %1310
        %1312 = vrot.lane.b32.xlu0 %v172, 102
        %v1313 = vpop.permute.xlu0 %1312
        %vm1314 = vcmask 834560
        %v1315 = vsel %vm1314, %v1307, %v1309
        %v1316 = vsel %vm1314, %v1309, %v1311
        %v1317 = vsel %vm1314, %v1311, %v1313
        %v1322 = vsel %vm195, %v1305, 0
        %1324 = vmatprep.subr.mxu0 0.0
        %1325 = vmatpush1.msra.mxu0 0.0
        %1326 = vmatprep.subr.mxu0 0.0
        %1327 = vmatpush1.msra.mxu0 0.0
        %1328 = vmatprep.subr.mxu0 0.0
        %1329 = vmatpush1.msra.mxu0 0.0
        %1330 = vmatprep.subr.mxu0 0.0
        %1331 = vmatpush1.msra.mxu0 0.0
        %1332 = vmatprep.subr.mxu0 0.0
        %1333 = vmatpush1.msra.mxu0 0.0
        %1334 = vmatprep.subr.mxu0 0.0
        %1335 = vmatpush1.msra.mxu0 0.0
        %1336 = vmatprep.subr.mxu0 0.0
        %1337 = vmatpush1.msra.mxu0 0.0
        %1338 = vmatprep.subr.mxu0 0.0
        %1339 = vmatpush1.msra.mxu0 0.0
        %1340 = vmatprep.subr.mxu0 0.0
        %1341 = vmatpush1.msra.mxu0 0.0
        %1342 = vmatprep.subr.mxu0 0.0
        %1343 = vmatpush1.msra.mxu0 0.0
        %1344 = vmatprep.subr.mxu0 0.0
        %1345 = vmatpush1.msra.mxu0 0.0
        %1346 = vmatprep.subr.mxu0 0.0
        %1347 = vmatpush1.msra.mxu0 0.0
        %1348 = vmatprep.subr.mxu0 0.0
        %1349 = vmatpush1.msra.mxu0 0.0
        %1350 = vmatprep.subr.mxu0 0.0
        %1351 = vmatpush1.msra.mxu0 0.0
        %1352 = vmatprep.subr.mxu0 0.0
        %1353 = vmatpush1.msra.mxu0 0.0
        %1354 = vmatprep.subr.mxu0 %v1316
        %1355 = vmatpush1.msra.mxu0 %v1315
        %1356 = vmatprep.subr.mxu0 0.0
        %1357 = vmatpush2.msra.mxu0 0.0
        %1358 = vmatprep.subr.mxu0 0.0
        %1359 = vmatpush2.msra.mxu0 0.0
        %1360 = vmatprep.subr.mxu0 0.0
        %1361 = vmatpush2.msra.mxu0 0.0
        %1362 = vmatprep.subr.mxu0 0.0
        %1363 = vmatpush2.msra.mxu0 0.0
        %1364 = vmatprep.subr.mxu0 0.0
        %1365 = vmatpush2.msra.mxu0 0.0
        %1366 = vmatprep.subr.mxu0 0.0
        %1367 = vmatpush2.msra.mxu0 0.0
        %1368 = vmatprep.subr.mxu0 0.0
        %1369 = vmatpush2.msra.mxu0 0.0
        %1370 = vmatprep.subr.mxu0 0.0
        %1371 = vmatpush2.msra.mxu0 0.0
        %1372 = vmatprep.subr.mxu0 0.0
        %1373 = vmatpush2.msra.mxu0 0.0
        %1374 = vmatprep.subr.mxu0 0.0
        %1375 = vmatpush2.msra.mxu0 0.0
        %1376 = vmatprep.subr.mxu0 0.0
        %1377 = vmatpush2.msra.mxu0 0.0
        %1378 = vmatprep.subr.mxu0 0.0
        %1379 = vmatpush2.msra.mxu0 0.0
        %1380 = vmatprep.subr.mxu0 0.0
        %1381 = vmatpush2.msra.mxu0 0.0
        %1382 = vmatprep.subr.mxu0 0.0
        %1383 = vmatpush2.msra.mxu0 0.0
        %1384 = vmatprep.subr.mxu0 0.0
        %1385 = vmatpush2.msra.mxu0 0.0
        %1386 = vmatprep.subr.mxu0 0.0
        %1387 = vmatpush2.msra.mxu0 0.0
        %1388 = vmatprep.mubr.f32.mxu0 0.0
        %1389 = vmatmul.mubr.f32.gmra.mxu0 %v1322
        %v1390 = vpop.f32.mrf.mxu0
        %v1391 = vadd.f32 0.0, %v1390
        %v1392 = vpop.f32.mrf.mxu0
        %v1393 = vadd.f32 0.0, %v1392
        %1394 = vdwg.mxu0
        %1395 = vmatprep.subr.mxu0 0.0
        %1396 = vmatpush1.msra.mxu0 0.0
        %1397 = vmatprep.subr.mxu0 0.0
        %1398 = vmatpush1.msra.mxu0 0.0
        %1399 = vmatprep.subr.mxu0 0.0
        %1400 = vmatpush1.msra.mxu0 0.0
        %1401 = vmatprep.subr.mxu0 0.0
        %1402 = vmatpush1.msra.mxu0 0.0
        %1403 = vmatprep.subr.mxu0 0.0
        %1404 = vmatpush1.msra.mxu0 0.0
        %1405 = vmatprep.subr.mxu0 0.0
        %1406 = vmatpush1.msra.mxu0 0.0
        %1407 = vmatprep.subr.mxu0 0.0
        %1408 = vmatpush1.msra.mxu0 0.0
        %1409 = vmatprep.subr.mxu0 0.0
        %1410 = vmatpush1.msra.mxu0 0.0
        %1411 = vmatprep.subr.mxu0 0.0
        %1412 = vmatpush1.msra.mxu0 0.0
        %1413 = vmatprep.subr.mxu0 0.0
        %1414 = vmatpush1.msra.mxu0 0.0
        %1415 = vmatprep.subr.mxu0 0.0
        %1416 = vmatpush1.msra.mxu0 0.0
        %1417 = vmatprep.subr.mxu0 0.0
        %1418 = vmatpush1.msra.mxu0 0.0
        %1419 = vmatprep.subr.mxu0 0.0
        %1420 = vmatpush1.msra.mxu0 0.0
        %1421 = vmatprep.subr.mxu0 0.0
        %1422 = vmatpush1.msra.mxu0 0.0
        %1423 = vmatprep.subr.mxu0 0.0
        %1424 = vmatpush1.msra.mxu0 0.0
        %1425 = vmatprep.subr.mxu0 0.0
        %1426 = vmatpush1.msra.mxu0 %v1317
        %1427 = vmatprep.subr.mxu0 0.0
        %1428 = vmatpush2.msra.mxu0 0.0
        %1429 = vmatprep.subr.mxu0 0.0
        %1430 = vmatpush2.msra.mxu0 0.0
        %1431 = vmatprep.subr.mxu0 0.0
        %1432 = vmatpush2.msra.mxu0 0.0
        %1433 = vmatprep.subr.mxu0 0.0
        %1434 = vmatpush2.msra.mxu0 0.0
        %1435 = vmatprep.subr.mxu0 0.0
        %1436 = vmatpush2.msra.mxu0 0.0
        %1437 = vmatprep.subr.mxu0 0.0
        %1438 = vmatpush2.msra.mxu0 0.0
        %1439 = vmatprep.subr.mxu0 0.0
        %1440 = vmatpush2.msra.mxu0 0.0
        %1441 = vmatprep.subr.mxu0 0.0
        %1442 = vmatpush2.msra.mxu0 0.0
        %1443 = vmatprep.subr.mxu0 0.0
        %1444 = vmatpush2.msra.mxu0 0.0
        %1445 = vmatprep.subr.mxu0 0.0
        %1446 = vmatpush2.msra.mxu0 0.0
        %1447 = vmatprep.subr.mxu0 0.0
        %1448 = vmatpush2.msra.mxu0 0.0
        %1449 = vmatprep.subr.mxu0 0.0
        %1450 = vmatpush2.msra.mxu0 0.0
        %1451 = vmatprep.subr.mxu0 0.0
        %1452 = vmatpush2.msra.mxu0 0.0
        %1453 = vmatprep.subr.mxu0 0.0
        %1454 = vmatpush2.msra.mxu0 0.0
        %1455 = vmatprep.subr.mxu0 0.0
        %1456 = vmatpush2.msra.mxu0 0.0
        %1457 = vmatprep.subr.mxu0 0.0
        %1458 = vmatpush2.msra.mxu0 0.0
        %1459 = vmatprep.mubr.f32.mxu0 0.0
        %1460 = vmatmul.mubr.f32.gmra.mxu0 %v1322
        %v1461 = vpop.f32.mrf.mxu0
        %v1462 = vadd.f32 0.0, %v1461
        %v1463 = vpop.f32.mrf.mxu0
        %1464 = vdwg.mxu0
        %v1465 = vadd.f32 %v1301, %v1391
        %v1466 = vadd.f32 %v1302, %v1393
        %v1467 = vadd.f32 %v1303, %v1462
        %s1468 = scalar_lea.vmem %s1, 64
        %v1469 = vld [vmem:[%s1468] sm:$0xff]
        %1470 = vrot.lane.b32.xlu0 %v169, 101
        %v1471 = vpop.permute.xlu0 %1470
        %1472 = vrot.lane.b32.xlu0 %v170, 101
        %v1473 = vpop.permute.xlu0 %1472
        %1474 = vrot.lane.b32.xlu0 %v171, 101
        %v1475 = vpop.permute.xlu0 %1474
        %1476 = vrot.lane.b32.xlu0 %v172, 101
        %v1477 = vpop.permute.xlu0 %1476
        %vm1478 = vcmask 826368
        %v1479 = vsel %vm1478, %v1471, %v1473
        %v1480 = vsel %vm1478, %v1473, %v1475
        %v1481 = vsel %vm1478, %v1475, %v1477
        %v1486 = vsel %vm195, %v1469, 0
        %1488 = vmatprep.subr.mxu0 0.0
        %1489 = vmatpush1.msra.mxu0 0.0
        %1490 = vmatprep.subr.mxu0 0.0
        %1491 = vmatpush1.msra.mxu0 0.0
        %1492 = vmatprep.subr.mxu0 0.0
        %1493 = vmatpush1.msra.mxu0 0.0
        %1494 = vmatprep.subr.mxu0 0.0
        %1495 = vmatpush1.msra.mxu0 0.0
        %1496 = vmatprep.subr.mxu0 0.0
        %1497 = vmatpush1.msra.mxu0 0.0
        %1498 = vmatprep.subr.mxu0 0.0
        %1499 = vmatpush1.msra.mxu0 0.0
        %1500 = vmatprep.subr.mxu0 0.0
        %1501 = vmatpush1.msra.mxu0 0.0
        %1502 = vmatprep.subr.mxu0 0.0
        %1503 = vmatpush1.msra.mxu0 0.0
        %1504 = vmatprep.subr.mxu0 0.0
        %1505 = vmatpush1.msra.mxu0 0.0
        %1506 = vmatprep.subr.mxu0 0.0
        %1507 = vmatpush1.msra.mxu0 0.0
        %1508 = vmatprep.subr.mxu0 0.0
        %1509 = vmatpush1.msra.mxu0 0.0
        %1510 = vmatprep.subr.mxu0 0.0
        %1511 = vmatpush1.msra.mxu0 0.0
        %1512 = vmatprep.subr.mxu0 0.0
        %1513 = vmatpush1.msra.mxu0 0.0
        %1514 = vmatprep.subr.mxu0 0.0
        %1515 = vmatpush1.msra.mxu0 0.0
        %1516 = vmatprep.subr.mxu0 0.0
        %1517 = vmatpush1.msra.mxu0 0.0
        %1518 = vmatprep.subr.mxu0 %v1480
        %1519 = vmatpush1.msra.mxu0 %v1479
        %1520 = vmatprep.subr.mxu0 0.0
        %1521 = vmatpush2.msra.mxu0 0.0
        %1522 = vmatprep.subr.mxu0 0.0
        %1523 = vmatpush2.msra.mxu0 0.0
        %1524 = vmatprep.subr.mxu0 0.0
        %1525 = vmatpush2.msra.mxu0 0.0
        %1526 = vmatprep.subr.mxu0 0.0
        %1527 = vmatpush2.msra.mxu0 0.0
        %1528 = vmatprep.subr.mxu0 0.0
        %1529 = vmatpush2.msra.mxu0 0.0
        %1530 = vmatprep.subr.mxu0 0.0
        %1531 = vmatpush2.msra.mxu0 0.0
        %1532 = vmatprep.subr.mxu0 0.0
        %1533 = vmatpush2.msra.mxu0 0.0
        %1534 = vmatprep.subr.mxu0 0.0
        %1535 = vmatpush2.msra.mxu0 0.0
        %1536 = vmatprep.subr.mxu0 0.0
        %1537 = vmatpush2.msra.mxu0 0.0
        %1538 = vmatprep.subr.mxu0 0.0
        %1539 = vmatpush2.msra.mxu0 0.0
        %1540 = vmatprep.subr.mxu0 0.0
        %1541 = vmatpush2.msra.mxu0 0.0
        %1542 = vmatprep.subr.mxu0 0.0
        %1543 = vmatpush2.msra.mxu0 0.0
        %1544 = vmatprep.subr.mxu0 0.0
        %1545 = vmatpush2.msra.mxu0 0.0
        %1546 = vmatprep.subr.mxu0 0.0
        %1547 = vmatpush2.msra.mxu0 0.0
        %1548 = vmatprep.subr.mxu0 0.0
        %1549 = vmatpush2.msra.mxu0 0.0
        %1550 = vmatprep.subr.mxu0 0.0
        %1551 = vmatpush2.msra.mxu0 0.0
        %1552 = vmatprep.mubr.f32.mxu0 0.0
        %1553 = vmatmul.mubr.f32.gmra.mxu0 %v1486
        %v1554 = vpop.f32.mrf.mxu0
        %v1555 = vadd.f32 0.0, %v1554
        %v1556 = vpop.f32.mrf.mxu0
        %v1557 = vadd.f32 0.0, %v1556
        %1558 = vdwg.mxu0
        %1559 = vmatprep.subr.mxu0 0.0
        %1560 = vmatpush1.msra.mxu0 0.0
        %1561 = vmatprep.subr.mxu0 0.0
        %1562 = vmatpush1.msra.mxu0 0.0
        %1563 = vmatprep.subr.mxu0 0.0
        %1564 = vmatpush1.msra.mxu0 0.0
        %1565 = vmatprep.subr.mxu0 0.0
        %1566 = vmatpush1.msra.mxu0 0.0
        %1567 = vmatprep.subr.mxu0 0.0
        %1568 = vmatpush1.msra.mxu0 0.0
        %1569 = vmatprep.subr.mxu0 0.0
        %1570 = vmatpush1.msra.mxu0 0.0
        %1571 = vmatprep.subr.mxu0 0.0
        %1572 = vmatpush1.msra.mxu0 0.0
        %1573 = vmatprep.subr.mxu0 0.0
        %1574 = vmatpush1.msra.mxu0 0.0
        %1575 = vmatprep.subr.mxu0 0.0
        %1576 = vmatpush1.msra.mxu0 0.0
        %1577 = vmatprep.subr.mxu0 0.0
        %1578 = vmatpush1.msra.mxu0 0.0
        %1579 = vmatprep.subr.mxu0 0.0
        %1580 = vmatpush1.msra.mxu0 0.0
        %1581 = vmatprep.subr.mxu0 0.0
        %1582 = vmatpush1.msra.mxu0 0.0
        %1583 = vmatprep.subr.mxu0 0.0
        %1584 = vmatpush1.msra.mxu0 0.0
        %1585 = vmatprep.subr.mxu0 0.0
        %1586 = vmatpush1.msra.mxu0 0.0
        %1587 = vmatprep.subr.mxu0 0.0
        %1588 = vmatpush1.msra.mxu0 0.0
        %1589 = vmatprep.subr.mxu0 0.0
        %1590 = vmatpush1.msra.mxu0 %v1481
        %1591 = vmatprep.subr.mxu0 0.0
        %1592 = vmatpush2.msra.mxu0 0.0
        %1593 = vmatprep.subr.mxu0 0.0
        %1594 = vmatpush2.msra.mxu0 0.0
        %1595 = vmatprep.subr.mxu0 0.0
        %1596 = vmatpush2.msra.mxu0 0.0
        %1597 = vmatprep.subr.mxu0 0.0
        %1598 = vmatpush2.msra.mxu0 0.0
        %1599 = vmatprep.subr.mxu0 0.0
        %1600 = vmatpush2.msra.mxu0 0.0
        %1601 = vmatprep.subr.mxu0 0.0
        %1602 = vmatpush2.msra.mxu0 0.0
        %1603 = vmatprep.subr.mxu0 0.0
        %1604 = vmatpush2.msra.mxu0 0.0
        %1605 = vmatprep.subr.mxu0 0.0
        %1606 = vmatpush2.msra.mxu0 0.0
        %1607 = vmatprep.subr.mxu0 0.0
        %1608 = vmatpush2.msra.mxu0 0.0
        %1609 = vmatprep.subr.mxu0 0.0
        %1610 = vmatpush2.msra.mxu0 0.0
        %1611 = vmatprep.subr.mxu0 0.0
        %1612 = vmatpush2.msra.mxu0 0.0
        %1613 = vmatprep.subr.mxu0 0.0
        %1614 = vmatpush2.msra.mxu0 0.0
        %1615 = vmatprep.subr.mxu0 0.0
        %1616 = vmatpush2.msra.mxu0 0.0
        %1617 = vmatprep.subr.mxu0 0.0
        %1618 = vmatpush2.msra.mxu0 0.0
        %1619 = vmatprep.subr.mxu0 0.0
        %1620 = vmatpush2.msra.mxu0 0.0
        %1621 = vmatprep.subr.mxu0 0.0
        %1622 = vmatpush2.msra.mxu0 0.0
        %1623 = vmatprep.mubr.f32.mxu0 0.0
        %1624 = vmatmul.mubr.f32.gmra.mxu0 %v1486
        %v1625 = vpop.f32.mrf.mxu0
        %v1626 = vadd.f32 0.0, %v1625
        %v1627 = vpop.f32.mrf.mxu0
        %1628 = vdwg.mxu0
        %v1629 = vadd.f32 %v1465, %v1555
        %v1630 = vadd.f32 %v1466, %v1557
        %v1631 = vadd.f32 %v1467, %v1626
        %s1632 = scalar_lea.vmem %s1, 72
        %v1633 = vld [vmem:[%s1632] sm:$0xff]
        %1634 = vrot.lane.b32.xlu0 %v169, 100
        %v1635 = vpop.permute.xlu0 %1634
        %1636 = vrot.lane.b32.xlu0 %v170, 100
        %v1637 = vpop.permute.xlu0 %1636
        %1638 = vrot.lane.b32.xlu0 %v171, 100
        %v1639 = vpop.permute.xlu0 %1638
        %1640 = vrot.lane.b32.xlu0 %v172, 100
        %v1641 = vpop.permute.xlu0 %1640
        %vm1642 = vcmask 818176
        %v1643 = vsel %vm1642, %v1635, %v1637
        %v1644 = vsel %vm1642, %v1637, %v1639
        %v1645 = vsel %vm1642, %v1639, %v1641
        %v1650 = vsel %vm195, %v1633, 0
        %1652 = vmatprep.subr.mxu0 0.0
        %1653 = vmatpush1.msra.mxu0 0.0
        %1654 = vmatprep.subr.mxu0 0.0
        %1655 = vmatpush1.msra.mxu0 0.0
        %1656 = vmatprep.subr.mxu0 0.0
        %1657 = vmatpush1.msra.mxu0 0.0
        %1658 = vmatprep.subr.mxu0 0.0
        %1659 = vmatpush1.msra.mxu0 0.0
        %1660 = vmatprep.subr.mxu0 0.0
        %1661 = vmatpush1.msra.mxu0 0.0
        %1662 = vmatprep.subr.mxu0 0.0
        %1663 = vmatpush1.msra.mxu0 0.0
        %1664 = vmatprep.subr.mxu0 0.0
        %1665 = vmatpush1.msra.mxu0 0.0
        %1666 = vmatprep.subr.mxu0 0.0
        %1667 = vmatpush1.msra.mxu0 0.0
        %1668 = vmatprep.subr.mxu0 0.0
        %1669 = vmatpush1.msra.mxu0 0.0
        %1670 = vmatprep.subr.mxu0 0.0
        %1671 = vmatpush1.msra.mxu0 0.0
        %1672 = vmatprep.subr.mxu0 0.0
        %1673 = vmatpush1.msra.mxu0 0.0
        %1674 = vmatprep.subr.mxu0 0.0
        %1675 = vmatpush1.msra.mxu0 0.0
        %1676 = vmatprep.subr.mxu0 0.0
        %1677 = vmatpush1.msra.mxu0 0.0
        %1678 = vmatprep.subr.mxu0 0.0
        %1679 = vmatpush1.msra.mxu0 0.0
        %1680 = vmatprep.subr.mxu0 0.0
        %1681 = vmatpush1.msra.mxu0 0.0
        %1682 = vmatprep.subr.mxu0 %v1644
        %1683 = vmatpush1.msra.mxu0 %v1643
        %1684 = vmatprep.subr.mxu0 0.0
        %1685 = vmatpush2.msra.mxu0 0.0
        %1686 = vmatprep.subr.mxu0 0.0
        %1687 = vmatpush2.msra.mxu0 0.0
        %1688 = vmatprep.subr.mxu0 0.0
        %1689 = vmatpush2.msra.mxu0 0.0
        %1690 = vmatprep.subr.mxu0 0.0
        %1691 = vmatpush2.msra.mxu0 0.0
        %1692 = vmatprep.subr.mxu0 0.0
        %1693 = vmatpush2.msra.mxu0 0.0
        %1694 = vmatprep.subr.mxu0 0.0
        %1695 = vmatpush2.msra.mxu0 0.0
        %1696 = vmatprep.subr.mxu0 0.0
        %1697 = vmatpush2.msra.mxu0 0.0
        %1698 = vmatprep.subr.mxu0 0.0
        %1699 = vmatpush2.msra.mxu0 0.0
        %1700 = vmatprep.subr.mxu0 0.0
        %1701 = vmatpush2.msra.mxu0 0.0
        %1702 = vmatprep.subr.mxu0 0.0
        %1703 = vmatpush2.msra.mxu0 0.0
        %1704 = vmatprep.subr.mxu0 0.0
        %1705 = vmatpush2.msra.mxu0 0.0
        %1706 = vmatprep.subr.mxu0 0.0
        %1707 = vmatpush2.msra.mxu0 0.0
        %1708 = vmatprep.subr.mxu0 0.0
        %1709 = vmatpush2.msra.mxu0 0.0
        %1710 = vmatprep.subr.mxu0 0.0
        %1711 = vmatpush2.msra.mxu0 0.0
        %1712 = vmatprep.subr.mxu0 0.0
        %1713 = vmatpush2.msra.mxu0 0.0
        %1714 = vmatprep.subr.mxu0 0.0
        %1715 = vmatpush2.msra.mxu0 0.0
        %1716 = vmatprep.mubr.f32.mxu0 0.0
        %1717 = vmatmul.mubr.f32.gmra.mxu0 %v1650
        %v1718 = vpop.f32.mrf.mxu0
        %v1719 = vadd.f32 0.0, %v1718
        %v1720 = vpop.f32.mrf.mxu0
        %v1721 = vadd.f32 0.0, %v1720
        %1722 = vdwg.mxu0
        %1723 = vmatprep.subr.mxu0 0.0
        %1724 = vmatpush1.msra.mxu0 0.0
        %1725 = vmatprep.subr.mxu0 0.0
        %1726 = vmatpush1.msra.mxu0 0.0
        %1727 = vmatprep.subr.mxu0 0.0
        %1728 = vmatpush1.msra.mxu0 0.0
        %1729 = vmatprep.subr.mxu0 0.0
        %1730 = vmatpush1.msra.mxu0 0.0
        %1731 = vmatprep.subr.mxu0 0.0
        %1732 = vmatpush1.msra.mxu0 0.0
        %1733 = vmatprep.subr.mxu0 0.0
        %1734 = vmatpush1.msra.mxu0 0.0
        %1735 = vmatprep.subr.mxu0 0.0
        %1736 = vmatpush1.msra.mxu0 0.0
        %1737 = vmatprep.subr.mxu0 0.0
        %1738 = vmatpush1.msra.mxu0 0.0
        %1739 = vmatprep.subr.mxu0 0.0
        %1740 = vmatpush1.msra.mxu0 0.0
        %1741 = vmatprep.subr.mxu0 0.0
        %1742 = vmatpush1.msra.mxu0 0.0
        %1743 = vmatprep.subr.mxu0 0.0
        %1744 = vmatpush1.msra.mxu0 0.0
        %1745 = vmatprep.subr.mxu0 0.0
        %1746 = vmatpush1.msra.mxu0 0.0
        %1747 = vmatprep.subr.mxu0 0.0
        %1748 = vmatpush1.msra.mxu0 0.0
        %1749 = vmatprep.subr.mxu0 0.0
        %1750 = vmatpush1.msra.mxu0 0.0
        %1751 = vmatprep.subr.mxu0 0.0
        %1752 = vmatpush1.msra.mxu0 0.0
        %1753 = vmatprep.subr.mxu0 0.0
        %1754 = vmatpush1.msra.mxu0 %v1645
        %1755 = vmatprep.subr.mxu0 0.0
        %1756 = vmatpush2.msra.mxu0 0.0
        %1757 = vmatprep.subr.mxu0 0.0
        %1758 = vmatpush2.msra.mxu0 0.0
        %1759 = vmatprep.subr.mxu0 0.0
        %1760 = vmatpush2.msra.mxu0 0.0
        %1761 = vmatprep.subr.mxu0 0.0
        %1762 = vmatpush2.msra.mxu0 0.0
        %1763 = vmatprep.subr.mxu0 0.0
        %1764 = vmatpush2.msra.mxu0 0.0
        %1765 = vmatprep.subr.mxu0 0.0
        %1766 = vmatpush2.msra.mxu0 0.0
        %1767 = vmatprep.subr.mxu0 0.0
        %1768 = vmatpush2.msra.mxu0 0.0
        %1769 = vmatprep.subr.mxu0 0.0
        %1770 = vmatpush2.msra.mxu0 0.0
        %1771 = vmatprep.subr.mxu0 0.0
        %1772 = vmatpush2.msra.mxu0 0.0
        %1773 = vmatprep.subr.mxu0 0.0
        %1774 = vmatpush2.msra.mxu0 0.0
        %1775 = vmatprep.subr.mxu0 0.0
        %1776 = vmatpush2.msra.mxu0 0.0
        %1777 = vmatprep.subr.mxu0 0.0
        %1778 = vmatpush2.msra.mxu0 0.0
        %1779 = vmatprep.subr.mxu0 0.0
        %1780 = vmatpush2.msra.mxu0 0.0
        %1781 = vmatprep.subr.mxu0 0.0
        %1782 = vmatpush2.msra.mxu0 0.0
        %1783 = vmatprep.subr.mxu0 0.0
        %1784 = vmatpush2.msra.mxu0 0.0
        %1785 = vmatprep.subr.mxu0 0.0
        %1786 = vmatpush2.msra.mxu0 0.0
        %1787 = vmatprep.mubr.f32.mxu0 0.0
        %1788 = vmatmul.mubr.f32.gmra.mxu0 %v1650
        %v1789 = vpop.f32.mrf.mxu0
        %v1790 = vadd.f32 0.0, %v1789
        %v1791 = vpop.f32.mrf.mxu0
        %1792 = vdwg.mxu0
        %v1793 = vadd.f32 %v1629, %v1719
        %v1794 = vadd.f32 %v1630, %v1721
        %v1795 = vadd.f32 %v1631, %v1790
        %s1796 = scalar_lea.vmem %s1, 80
        %v1797 = vld [vmem:[%s1796] sm:$0xff]
        %1798 = vrot.lane.b32.xlu0 %v169, 80
        %v1799 = vpop.permute.xlu0 %1798
        %1800 = vrot.lane.b32.xlu0 %v170, 80
        %v1801 = vpop.permute.xlu0 %1800
        %1802 = vrot.lane.b32.xlu0 %v171, 80
        %v1803 = vpop.permute.xlu0 %1802
        %1804 = vrot.lane.b32.xlu0 %v172, 80
        %v1805 = vpop.permute.xlu0 %1804
        %vm1806 = vcmask 654336
        %v1807 = vsel %vm1806, %v1799, %v1801
        %v1808 = vsel %vm1806, %v1801, %v1803
        %v1809 = vsel %vm1806, %v1803, %v1805
        %v1814 = vsel %vm195, %v1797, 0
        %1816 = vmatprep.subr.mxu0 0.0
        %1817 = vmatpush1.msra.mxu0 0.0
        %1818 = vmatprep.subr.mxu0 0.0
        %1819 = vmatpush1.msra.mxu0 0.0
        %1820 = vmatprep.subr.mxu0 0.0
        %1821 = vmatpush1.msra.mxu0 0.0
        %1822 = vmatprep.subr.mxu0 0.0
        %1823 = vmatpush1.msra.mxu0 0.0
        %1824 = vmatprep.subr.mxu0 0.0
        %1825 = vmatpush1.msra.mxu0 0.0
        %1826 = vmatprep.subr.mxu0 0.0
        %1827 = vmatpush1.msra.mxu0 0.0
        %1828 = vmatprep.subr.mxu0 0.0
        %1829 = vmatpush1.msra.mxu0 0.0
        %1830 = vmatprep.subr.mxu0 0.0
        %1831 = vmatpush1.msra.mxu0 0.0
        %1832 = vmatprep.subr.mxu0 0.0
        %1833 = vmatpush1.msra.mxu0 0.0
        %1834 = vmatprep.subr.mxu0 0.0
        %1835 = vmatpush1.msra.mxu0 0.0
        %1836 = vmatprep.subr.mxu0 0.0
        %1837 = vmatpush1.msra.mxu0 0.0
        %1838 = vmatprep.subr.mxu0 0.0
        %1839 = vmatpush1.msra.mxu0 0.0
        %1840 = vmatprep.subr.mxu0 0.0
        %1841 = vmatpush1.msra.mxu0 0.0
        %1842 = vmatprep.subr.mxu0 0.0
        %1843 = vmatpush1.msra.mxu0 0.0
        %1844 = vmatprep.subr.mxu0 0.0
        %1845 = vmatpush1.msra.mxu0 0.0
        %1846 = vmatprep.subr.mxu0 %v1808
        %1847 = vmatpush1.msra.mxu0 %v1807
        %1848 = vmatprep.subr.mxu0 0.0
        %1849 = vmatpush2.msra.mxu0 0.0
        %1850 = vmatprep.subr.mxu0 0.0
        %1851 = vmatpush2.msra.mxu0 0.0
        %1852 = vmatprep.subr.mxu0 0.0
        %1853 = vmatpush2.msra.mxu0 0.0
        %1854 = vmatprep.subr.mxu0 0.0
        %1855 = vmatpush2.msra.mxu0 0.0
        %1856 = vmatprep.subr.mxu0 0.0
        %1857 = vmatpush2.msra.mxu0 0.0
        %1858 = vmatprep.subr.mxu0 0.0
        %1859 = vmatpush2.msra.mxu0 0.0
        %1860 = vmatprep.subr.mxu0 0.0
        %1861 = vmatpush2.msra.mxu0 0.0
        %1862 = vmatprep.subr.mxu0 0.0
        %1863 = vmatpush2.msra.mxu0 0.0
        %1864 = vmatprep.subr.mxu0 0.0
        %1865 = vmatpush2.msra.mxu0 0.0
        %1866 = vmatprep.subr.mxu0 0.0
        %1867 = vmatpush2.msra.mxu0 0.0
        %1868 = vmatprep.subr.mxu0 0.0
        %1869 = vmatpush2.msra.mxu0 0.0
        %1870 = vmatprep.subr.mxu0 0.0
        %1871 = vmatpush2.msra.mxu0 0.0
        %1872 = vmatprep.subr.mxu0 0.0
        %1873 = vmatpush2.msra.mxu0 0.0
        %1874 = vmatprep.subr.mxu0 0.0
        %1875 = vmatpush2.msra.mxu0 0.0
        %1876 = vmatprep.subr.mxu0 0.0
        %1877 = vmatpush2.msra.mxu0 0.0
        %1878 = vmatprep.subr.mxu0 0.0
        %1879 = vmatpush2.msra.mxu0 0.0
        %1880 = vmatprep.mubr.f32.mxu0 0.0
        %1881 = vmatmul.mubr.f32.gmra.mxu0 %v1814
        %v1882 = vpop.f32.mrf.mxu0
        %v1883 = vadd.f32 0.0, %v1882
        %v1884 = vpop.f32.mrf.mxu0
        %v1885 = vadd.f32 0.0, %v1884
        %1886 = vdwg.mxu0
        %1887 = vmatprep.subr.mxu0 0.0
        %1888 = vmatpush1.msra.mxu0 0.0
        %1889 = vmatprep.subr.mxu0 0.0
        %1890 = vmatpush1.msra.mxu0 0.0
        %1891 = vmatprep.subr.mxu0 0.0
        %1892 = vmatpush1.msra.mxu0 0.0
        %1893 = vmatprep.subr.mxu0 0.0
        %1894 = vmatpush1.msra.mxu0 0.0
        %1895 = vmatprep.subr.mxu0 0.0
        %1896 = vmatpush1.msra.mxu0 0.0
        %1897 = vmatprep.subr.mxu0 0.0
        %1898 = vmatpush1.msra.mxu0 0.0
        %1899 = vmatprep.subr.mxu0 0.0
        %1900 = vmatpush1.msra.mxu0 0.0
        %1901 = vmatprep.subr.mxu0 0.0
        %1902 = vmatpush1.msra.mxu0 0.0
        %1903 = vmatprep.subr.mxu0 0.0
        %1904 = vmatpush1.msra.mxu0 0.0
        %1905 = vmatprep.subr.mxu0 0.0
        %1906 = vmatpush1.msra.mxu0 0.0
        %1907 = vmatprep.subr.mxu0 0.0
        %1908 = vmatpush1.msra.mxu0 0.0
        %1909 = vmatprep.subr.mxu0 0.0
        %1910 = vmatpush1.msra.mxu0 0.0
        %1911 = vmatprep.subr.mxu0 0.0
        %1912 = vmatpush1.msra.mxu0 0.0
        %1913 = vmatprep.subr.mxu0 0.0
        %1914 = vmatpush1.msra.mxu0 0.0
        %1915 = vmatprep.subr.mxu0 0.0
        %1916 = vmatpush1.msra.mxu0 0.0
        %1917 = vmatprep.subr.mxu0 0.0
        %1918 = vmatpush1.msra.mxu0 %v1809
        %1919 = vmatprep.subr.mxu0 0.0
        %1920 = vmatpush2.msra.mxu0 0.0
        %1921 = vmatprep.subr.mxu0 0.0
        %1922 = vmatpush2.msra.mxu0 0.0
        %1923 = vmatprep.subr.mxu0 0.0
        %1924 = vmatpush2.msra.mxu0 0.0
        %1925 = vmatprep.subr.mxu0 0.0
        %1926 = vmatpush2.msra.mxu0 0.0
        %1927 = vmatprep.subr.mxu0 0.0
        %1928 = vmatpush2.msra.mxu0 0.0
        %1929 = vmatprep.subr.mxu0 0.0
        %1930 = vmatpush2.msra.mxu0 0.0
        %1931 = vmatprep.subr.mxu0 0.0
        %1932 = vmatpush2.msra.mxu0 0.0
        %1933 = vmatprep.subr.mxu0 0.0
        %1934 = vmatpush2.msra.mxu0 0.0
        %1935 = vmatprep.subr.mxu0 0.0
        %1936 = vmatpush2.msra.mxu0 0.0
        %1937 = vmatprep.subr.mxu0 0.0
        %1938 = vmatpush2.msra.mxu0 0.0
        %1939 = vmatprep.subr.mxu0 0.0
        %1940 = vmatpush2.msra.mxu0 0.0
        %1941 = vmatprep.subr.mxu0 0.0
        %1942 = vmatpush2.msra.mxu0 0.0
        %1943 = vmatprep.subr.mxu0 0.0
        %1944 = vmatpush2.msra.mxu0 0.0
        %1945 = vmatprep.subr.mxu0 0.0
        %1946 = vmatpush2.msra.mxu0 0.0
        %1947 = vmatprep.subr.mxu0 0.0
        %1948 = vmatpush2.msra.mxu0 0.0
        %1949 = vmatprep.subr.mxu0 0.0
        %1950 = vmatpush2.msra.mxu0 0.0
        %1951 = vmatprep.mubr.f32.mxu0 0.0
        %1952 = vmatmul.mubr.f32.gmra.mxu0 %v1814
        %v1953 = vpop.f32.mrf.mxu0
        %v1954 = vadd.f32 0.0, %v1953
        %v1955 = vpop.f32.mrf.mxu0
        %1956 = vdwg.mxu0
        %v1957 = vadd.f32 %v1793, %v1883
        %v1958 = vadd.f32 %v1794, %v1885
        %v1959 = vadd.f32 %v1795, %v1954
        %s1960 = scalar_lea.vmem %s1, 88
        %v1961 = vld [vmem:[%s1960] sm:$0xff]
        %1962 = vrot.lane.b32.xlu0 %v169, 79
        %v1963 = vpop.permute.xlu0 %1962
        %1964 = vrot.lane.b32.xlu0 %v170, 79
        %v1965 = vpop.permute.xlu0 %1964
        %1966 = vrot.lane.b32.xlu0 %v171, 79
        %v1967 = vpop.permute.xlu0 %1966
        %1968 = vrot.lane.b32.xlu0 %v172, 79
        %v1969 = vpop.permute.xlu0 %1968
        %vm1970 = vcmask 646144
        %v1971 = vsel %vm1970, %v1963, %v1965
        %v1972 = vsel %vm1970, %v1965, %v1967
        %v1973 = vsel %vm1970, %v1967, %v1969
        %v1978 = vsel %vm195, %v1961, 0
        %1980 = vmatprep.subr.mxu0 0.0
        %1981 = vmatpush1.msra.mxu0 0.0
        %1982 = vmatprep.subr.mxu0 0.0
        %1983 = vmatpush1.msra.mxu0 0.0
        %1984 = vmatprep.subr.mxu0 0.0
        %1985 = vmatpush1.msra.mxu0 0.0
        %1986 = vmatprep.subr.mxu0 0.0
        %1987 = vmatpush1.msra.mxu0 0.0
        %1988 = vmatprep.subr.mxu0 0.0
        %1989 = vmatpush1.msra.mxu0 0.0
        %1990 = vmatprep.subr.mxu0 0.0
        %1991 = vmatpush1.msra.mxu0 0.0
        %1992 = vmatprep.subr.mxu0 0.0
        %1993 = vmatpush1.msra.mxu0 0.0
        %1994 = vmatprep.subr.mxu0 0.0
        %1995 = vmatpush1.msra.mxu0 0.0
        %1996 = vmatprep.subr.mxu0 0.0
        %1997 = vmatpush1.msra.mxu0 0.0
        %1998 = vmatprep.subr.mxu0 0.0
        %1999 = vmatpush1.msra.mxu0 0.0
        %2000 = vmatprep.subr.mxu0 0.0
        %2001 = vmatpush1.msra.mxu0 0.0
        %2002 = vmatprep.subr.mxu0 0.0
        %2003 = vmatpush1.msra.mxu0 0.0
        %2004 = vmatprep.subr.mxu0 0.0
        %2005 = vmatpush1.msra.mxu0 0.0
        %2006 = vmatprep.subr.mxu0 0.0
        %2007 = vmatpush1.msra.mxu0 0.0
        %2008 = vmatprep.subr.mxu0 0.0
        %2009 = vmatpush1.msra.mxu0 0.0
        %2010 = vmatprep.subr.mxu0 %v1972
        %2011 = vmatpush1.msra.mxu0 %v1971
        %2012 = vmatprep.subr.mxu0 0.0
        %2013 = vmatpush2.msra.mxu0 0.0
        %2014 = vmatprep.subr.mxu0 0.0
        %2015 = vmatpush2.msra.mxu0 0.0
        %2016 = vmatprep.subr.mxu0 0.0
        %2017 = vmatpush2.msra.mxu0 0.0
        %2018 = vmatprep.subr.mxu0 0.0
        %2019 = vmatpush2.msra.mxu0 0.0
        %2020 = vmatprep.subr.mxu0 0.0
        %2021 = vmatpush2.msra.mxu0 0.0
        %2022 = vmatprep.subr.mxu0 0.0
        %2023 = vmatpush2.msra.mxu0 0.0
        %2024 = vmatprep.subr.mxu0 0.0
        %2025 = vmatpush2.msra.mxu0 0.0
        %2026 = vmatprep.subr.mxu0 0.0
        %2027 = vmatpush2.msra.mxu0 0.0
        %2028 = vmatprep.subr.mxu0 0.0
        %2029 = vmatpush2.msra.mxu0 0.0
        %2030 = vmatprep.subr.mxu0 0.0
        %2031 = vmatpush2.msra.mxu0 0.0
        %2032 = vmatprep.subr.mxu0 0.0
        %2033 = vmatpush2.msra.mxu0 0.0
        %2034 = vmatprep.subr.mxu0 0.0
        %2035 = vmatpush2.msra.mxu0 0.0
        %2036 = vmatprep.subr.mxu0 0.0
        %2037 = vmatpush2.msra.mxu0 0.0
        %2038 = vmatprep.subr.mxu0 0.0
        %2039 = vmatpush2.msra.mxu0 0.0
        %2040 = vmatprep.subr.mxu0 0.0
        %2041 = vmatpush2.msra.mxu0 0.0
        %2042 = vmatprep.subr.mxu0 0.0
        %2043 = vmatpush2.msra.mxu0 0.0
        %2044 = vmatprep.mubr.f32.mxu0 0.0
        %2045 = vmatmul.mubr.f32.gmra.mxu0 %v1978
        %v2046 = vpop.f32.mrf.mxu0
        %v2047 = vadd.f32 0.0, %v2046
        %v2048 = vpop.f32.mrf.mxu0
        %v2049 = vadd.f32 0.0, %v2048
        %2050 = vdwg.mxu0
        %2051 = vmatprep.subr.mxu0 0.0
        %2052 = vmatpush1.msra.mxu0 0.0
        %2053 = vmatprep.subr.mxu0 0.0
        %2054 = vmatpush1.msra.mxu0 0.0
        %2055 = vmatprep.subr.mxu0 0.0
        %2056 = vmatpush1.msra.mxu0 0.0
        %2057 = vmatprep.subr.mxu0 0.0
        %2058 = vmatpush1.msra.mxu0 0.0
        %2059 = vmatprep.subr.mxu0 0.0
        %2060 = vmatpush1.msra.mxu0 0.0
        %2061 = vmatprep.subr.mxu0 0.0
        %2062 = vmatpush1.msra.mxu0 0.0
        %2063 = vmatprep.subr.mxu0 0.0
        %2064 = vmatpush1.msra.mxu0 0.0
        %2065 = vmatprep.subr.mxu0 0.0
        %2066 = vmatpush1.msra.mxu0 0.0
        %2067 = vmatprep.subr.mxu0 0.0
        %2068 = vmatpush1.msra.mxu0 0.0
        %2069 = vmatprep.subr.mxu0 0.0
        %2070 = vmatpush1.msra.mxu0 0.0
        %2071 = vmatprep.subr.mxu0 0.0
        %2072 = vmatpush1.msra.mxu0 0.0
        %2073 = vmatprep.subr.mxu0 0.0
        %2074 = vmatpush1.msra.mxu0 0.0
        %2075 = vmatprep.subr.mxu0 0.0
        %2076 = vmatpush1.msra.mxu0 0.0
        %2077 = vmatprep.subr.mxu0 0.0
        %2078 = vmatpush1.msra.mxu0 0.0
        %2079 = vmatprep.subr.mxu0 0.0
        %2080 = vmatpush1.msra.mxu0 0.0
        %2081 = vmatprep.subr.mxu0 0.0
        %2082 = vmatpush1.msra.mxu0 %v1973
        %2083 = vmatprep.subr.mxu0 0.0
        %2084 = vmatpush2.msra.mxu0 0.0
        %2085 = vmatprep.subr.mxu0 0.0
        %2086 = vmatpush2.msra.mxu0 0.0
        %2087 = vmatprep.subr.mxu0 0.0
        %2088 = vmatpush2.msra.mxu0 0.0
        %2089 = vmatprep.subr.mxu0 0.0
        %2090 = vmatpush2.msra.mxu0 0.0
        %2091 = vmatprep.subr.mxu0 0.0
        %2092 = vmatpush2.msra.mxu0 0.0
        %2093 = vmatprep.subr.mxu0 0.0
        %2094 = vmatpush2.msra.mxu0 0.0
        %2095 = vmatprep.subr.mxu0 0.0
        %2096 = vmatpush2.msra.mxu0 0.0
        %2097 = vmatprep.subr.mxu0 0.0
        %2098 = vmatpush2.msra.mxu0 0.0
        %2099 = vmatprep.subr.mxu0 0.0
        %2100 = vmatpush2.msra.mxu0 0.0
        %2101 = vmatprep.subr.mxu0 0.0
        %2102 = vmatpush2.msra.mxu0 0.0
        %2103 = vmatprep.subr.mxu0 0.0
        %2104 = vmatpush2.msra.mxu0 0.0
        %2105 = vmatprep.subr.mxu0 0.0
        %2106 = vmatpush2.msra.mxu0 0.0
        %2107 = vmatprep.subr.mxu0 0.0
        %2108 = vmatpush2.msra.mxu0 0.0
        %2109 = vmatprep.subr.mxu0 0.0
        %2110 = vmatpush2.msra.mxu0 0.0
        %2111 = vmatprep.subr.mxu0 0.0
        %2112 = vmatpush2.msra.mxu0 0.0
        %2113 = vmatprep.subr.mxu0 0.0
        %2114 = vmatpush2.msra.mxu0 0.0
        %2115 = vmatprep.mubr.f32.mxu0 0.0
        %2116 = vmatmul.mubr.f32.gmra.mxu0 %v1978
        %v2117 = vpop.f32.mrf.mxu0
        %v2118 = vadd.f32 0.0, %v2117
        %v2119 = vpop.f32.mrf.mxu0
        %2120 = vdwg.mxu0
        %v2121 = vadd.f32 %v1957, %v2047
        %v2122 = vadd.f32 %v1958, %v2049
        %v2123 = vadd.f32 %v1959, %v2118
        %s2124 = scalar_lea.vmem %s1, 96
        %v2125 = vld [vmem:[%s2124] sm:$0xff]
        %2126 = vrot.lane.b32.xlu0 %v169, 78
        %v2127 = vpop.permute.xlu0 %2126
        %2128 = vrot.lane.b32.xlu0 %v170, 78
        %v2129 = vpop.permute.xlu0 %2128
        %2130 = vrot.lane.b32.xlu0 %v171, 78
        %v2131 = vpop.permute.xlu0 %2130
        %2132 = vrot.lane.b32.xlu0 %v172, 78
        %v2133 = vpop.permute.xlu0 %2132
        %vm2134 = vcmask 637952
        %v2135 = vsel %vm2134, %v2127, %v2129
        %v2136 = vsel %vm2134, %v2129, %v2131
        %v2137 = vsel %vm2134, %v2131, %v2133
        %v2142 = vsel %vm195, %v2125, 0
        %2144 = vmatprep.subr.mxu0 0.0
        %2145 = vmatpush1.msra.mxu0 0.0
        %2146 = vmatprep.subr.mxu0 0.0
        %2147 = vmatpush1.msra.mxu0 0.0
        %2148 = vmatprep.subr.mxu0 0.0
        %2149 = vmatpush1.msra.mxu0 0.0
        %2150 = vmatprep.subr.mxu0 0.0
        %2151 = vmatpush1.msra.mxu0 0.0
        %2152 = vmatprep.subr.mxu0 0.0
        %2153 = vmatpush1.msra.mxu0 0.0
        %2154 = vmatprep.subr.mxu0 0.0
        %2155 = vmatpush1.msra.mxu0 0.0
        %2156 = vmatprep.subr.mxu0 0.0
        %2157 = vmatpush1.msra.mxu0 0.0
        %2158 = vmatprep.subr.mxu0 0.0
        %2159 = vmatpush1.msra.mxu0 0.0
        %2160 = vmatprep.subr.mxu0 0.0
        %2161 = vmatpush1.msra.mxu0 0.0
        %2162 = vmatprep.subr.mxu0 0.0
        %2163 = vmatpush1.msra.mxu0 0.0
        %2164 = vmatprep.subr.mxu0 0.0
        %2165 = vmatpush1.msra.mxu0 0.0
        %2166 = vmatprep.subr.mxu0 0.0
        %2167 = vmatpush1.msra.mxu0 0.0
        %2168 = vmatprep.subr.mxu0 0.0
        %2169 = vmatpush1.msra.mxu0 0.0
        %2170 = vmatprep.subr.mxu0 0.0
        %2171 = vmatpush1.msra.mxu0 0.0
        %2172 = vmatprep.subr.mxu0 0.0
        %2173 = vmatpush1.msra.mxu0 0.0
        %2174 = vmatprep.subr.mxu0 %v2136
        %2175 = vmatpush1.msra.mxu0 %v2135
        %2176 = vmatprep.subr.mxu0 0.0
        %2177 = vmatpush2.msra.mxu0 0.0
        %2178 = vmatprep.subr.mxu0 0.0
        %2179 = vmatpush2.msra.mxu0 0.0
        %2180 = vmatprep.subr.mxu0 0.0
        %2181 = vmatpush2.msra.mxu0 0.0
        %2182 = vmatprep.subr.mxu0 0.0
        %2183 = vmatpush2.msra.mxu0 0.0
        %2184 = vmatprep.subr.mxu0 0.0
        %2185 = vmatpush2.msra.mxu0 0.0
        %2186 = vmatprep.subr.mxu0 0.0
        %2187 = vmatpush2.msra.mxu0 0.0
        %2188 = vmatprep.subr.mxu0 0.0
        %2189 = vmatpush2.msra.mxu0 0.0
        %2190 = vmatprep.subr.mxu0 0.0
        %2191 = vmatpush2.msra.mxu0 0.0
        %2192 = vmatprep.subr.mxu0 0.0
        %2193 = vmatpush2.msra.mxu0 0.0
        %2194 = vmatprep.subr.mxu0 0.0
        %2195 = vmatpush2.msra.mxu0 0.0
        %2196 = vmatprep.subr.mxu0 0.0
        %2197 = vmatpush2.msra.mxu0 0.0
        %2198 = vmatprep.subr.mxu0 0.0
        %2199 = vmatpush2.msra.mxu0 0.0
        %2200 = vmatprep.subr.mxu0 0.0
        %2201 = vmatpush2.msra.mxu0 0.0
        %2202 = vmatprep.subr.mxu0 0.0
        %2203 = vmatpush2.msra.mxu0 0.0
        %2204 = vmatprep.subr.mxu0 0.0
        %2205 = vmatpush2.msra.mxu0 0.0
        %2206 = vmatprep.subr.mxu0 0.0
        %2207 = vmatpush2.msra.mxu0 0.0
        %2208 = vmatprep.mubr.f32.mxu0 0.0
        %2209 = vmatmul.mubr.f32.gmra.mxu0 %v2142
        %v2210 = vpop.f32.mrf.mxu0
        %v2211 = vadd.f32 0.0, %v2210
        %v2212 = vpop.f32.mrf.mxu0
        %v2213 = vadd.f32 0.0, %v2212
        %2214 = vdwg.mxu0
        %2215 = vmatprep.subr.mxu0 0.0
        %2216 = vmatpush1.msra.mxu0 0.0
        %2217 = vmatprep.subr.mxu0 0.0
        %2218 = vmatpush1.msra.mxu0 0.0
        %2219 = vmatprep.subr.mxu0 0.0
        %2220 = vmatpush1.msra.mxu0 0.0
        %2221 = vmatprep.subr.mxu0 0.0
        %2222 = vmatpush1.msra.mxu0 0.0
        %2223 = vmatprep.subr.mxu0 0.0
        %2224 = vmatpush1.msra.mxu0 0.0
        %2225 = vmatprep.subr.mxu0 0.0
        %2226 = vmatpush1.msra.mxu0 0.0
        %2227 = vmatprep.subr.mxu0 0.0
        %2228 = vmatpush1.msra.mxu0 0.0
        %2229 = vmatprep.subr.mxu0 0.0
        %2230 = vmatpush1.msra.mxu0 0.0
        %2231 = vmatprep.subr.mxu0 0.0
        %2232 = vmatpush1.msra.mxu0 0.0
        %2233 = vmatprep.subr.mxu0 0.0
        %2234 = vmatpush1.msra.mxu0 0.0
        %2235 = vmatprep.subr.mxu0 0.0
        %2236 = vmatpush1.msra.mxu0 0.0
        %2237 = vmatprep.subr.mxu0 0.0
        %2238 = vmatpush1.msra.mxu0 0.0
        %2239 = vmatprep.subr.mxu0 0.0
        %2240 = vmatpush1.msra.mxu0 0.0
        %2241 = vmatprep.subr.mxu0 0.0
        %2242 = vmatpush1.msra.mxu0 0.0
        %2243 = vmatprep.subr.mxu0 0.0
        %2244 = vmatpush1.msra.mxu0 0.0
        %2245 = vmatprep.subr.mxu0 0.0
        %2246 = vmatpush1.msra.mxu0 %v2137
        %2247 = vmatprep.subr.mxu0 0.0
        %2248 = vmatpush2.msra.mxu0 0.0
        %2249 = vmatprep.subr.mxu0 0.0
        %2250 = vmatpush2.msra.mxu0 0.0
        %2251 = vmatprep.subr.mxu0 0.0
        %2252 = vmatpush2.msra.mxu0 0.0
        %2253 = vmatprep.subr.mxu0 0.0
        %2254 = vmatpush2.msra.mxu0 0.0
        %2255 = vmatprep.subr.mxu0 0.0
        %2256 = vmatpush2.msra.mxu0 0.0
        %2257 = vmatprep.subr.mxu0 0.0
        %2258 = vmatpush2.msra.mxu0 0.0
        %2259 = vmatprep.subr.mxu0 0.0
        %2260 = vmatpush2.msra.mxu0 0.0
        %2261 = vmatprep.subr.mxu0 0.0
        %2262 = vmatpush2.msra.mxu0 0.0
        %2263 = vmatprep.subr.mxu0 0.0
        %2264 = vmatpush2.msra.mxu0 0.0
        %2265 = vmatprep.subr.mxu0 0.0
        %2266 = vmatpush2.msra.mxu0 0.0
        %2267 = vmatprep.subr.mxu0 0.0
        %2268 = vmatpush2.msra.mxu0 0.0
        %2269 = vmatprep.subr.mxu0 0.0
        %2270 = vmatpush2.msra.mxu0 0.0
        %2271 = vmatprep.subr.mxu0 0.0
        %2272 = vmatpush2.msra.mxu0 0.0
        %2273 = vmatprep.subr.mxu0 0.0
        %2274 = vmatpush2.msra.mxu0 0.0
        %2275 = vmatprep.subr.mxu0 0.0
        %2276 = vmatpush2.msra.mxu0 0.0
        %2277 = vmatprep.subr.mxu0 0.0
        %2278 = vmatpush2.msra.mxu0 0.0
        %2279 = vmatprep.mubr.f32.mxu0 0.0
        %2280 = vmatmul.mubr.f32.gmra.mxu0 %v2142
        %v2281 = vpop.f32.mrf.mxu0
        %v2282 = vadd.f32 0.0, %v2281
        %v2283 = vpop.f32.mrf.mxu0
        %2284 = vdwg.mxu0
        %v2285 = vadd.f32 %v2121, %v2211
        %v2286 = vadd.f32 %v2122, %v2213
        %v2287 = vadd.f32 %v2123, %v2282
        %s2288 = scalar_lea.vmem %s1, 104
        %v2289 = vld [vmem:[%s2288] sm:$0xff]
        %2290 = vrot.lane.b32.xlu0 %v169, 77
        %v2291 = vpop.permute.xlu0 %2290
        %2292 = vrot.lane.b32.xlu0 %v170, 77
        %v2293 = vpop.permute.xlu0 %2292
        %2294 = vrot.lane.b32.xlu0 %v171, 77
        %v2295 = vpop.permute.xlu0 %2294
        %2296 = vrot.lane.b32.xlu0 %v172, 77
        %v2297 = vpop.permute.xlu0 %2296
        %vm2298 = vcmask 629760
        %v2299 = vsel %vm2298, %v2291, %v2293
        %v2300 = vsel %vm2298, %v2293, %v2295
        %v2301 = vsel %vm2298, %v2295, %v2297
        %v2306 = vsel %vm195, %v2289, 0
        %2308 = vmatprep.subr.mxu0 0.0
        %2309 = vmatpush1.msra.mxu0 0.0
        %2310 = vmatprep.subr.mxu0 0.0
        %2311 = vmatpush1.msra.mxu0 0.0
        %2312 = vmatprep.subr.mxu0 0.0
        %2313 = vmatpush1.msra.mxu0 0.0
        %2314 = vmatprep.subr.mxu0 0.0
        %2315 = vmatpush1.msra.mxu0 0.0
        %2316 = vmatprep.subr.mxu0 0.0
        %2317 = vmatpush1.msra.mxu0 0.0
        %2318 = vmatprep.subr.mxu0 0.0
        %2319 = vmatpush1.msra.mxu0 0.0
        %2320 = vmatprep.subr.mxu0 0.0
        %2321 = vmatpush1.msra.mxu0 0.0
        %2322 = vmatprep.subr.mxu0 0.0
        %2323 = vmatpush1.msra.mxu0 0.0
        %2324 = vmatprep.subr.mxu0 0.0
        %2325 = vmatpush1.msra.mxu0 0.0
        %2326 = vmatprep.subr.mxu0 0.0
        %2327 = vmatpush1.msra.mxu0 0.0
        %2328 = vmatprep.subr.mxu0 0.0
        %2329 = vmatpush1.msra.mxu0 0.0
        %2330 = vmatprep.subr.mxu0 0.0
        %2331 = vmatpush1.msra.mxu0 0.0
        %2332 = vmatprep.subr.mxu0 0.0
        %2333 = vmatpush1.msra.mxu0 0.0
        %2334 = vmatprep.subr.mxu0 0.0
        %2335 = vmatpush1.msra.mxu0 0.0
        %2336 = vmatprep.subr.mxu0 0.0
        %2337 = vmatpush1.msra.mxu0 0.0
        %2338 = vmatprep.subr.mxu0 %v2300
        %2339 = vmatpush1.msra.mxu0 %v2299
        %2340 = vmatprep.subr.mxu0 0.0
        %2341 = vmatpush2.msra.mxu0 0.0
        %2342 = vmatprep.subr.mxu0 0.0
        %2343 = vmatpush2.msra.mxu0 0.0
        %2344 = vmatprep.subr.mxu0 0.0
        %2345 = vmatpush2.msra.mxu0 0.0
        %2346 = vmatprep.subr.mxu0 0.0
        %2347 = vmatpush2.msra.mxu0 0.0
        %2348 = vmatprep.subr.mxu0 0.0
        %2349 = vmatpush2.msra.mxu0 0.0
        %2350 = vmatprep.subr.mxu0 0.0
        %2351 = vmatpush2.msra.mxu0 0.0
        %2352 = vmatprep.subr.mxu0 0.0
        %2353 = vmatpush2.msra.mxu0 0.0
        %2354 = vmatprep.subr.mxu0 0.0
        %2355 = vmatpush2.msra.mxu0 0.0
        %2356 = vmatprep.subr.mxu0 0.0
        %2357 = vmatpush2.msra.mxu0 0.0
        %2358 = vmatprep.subr.mxu0 0.0
        %2359 = vmatpush2.msra.mxu0 0.0
        %2360 = vmatprep.subr.mxu0 0.0
        %2361 = vmatpush2.msra.mxu0 0.0
        %2362 = vmatprep.subr.mxu0 0.0
        %2363 = vmatpush2.msra.mxu0 0.0
        %2364 = vmatprep.subr.mxu0 0.0
        %2365 = vmatpush2.msra.mxu0 0.0
        %2366 = vmatprep.subr.mxu0 0.0
        %2367 = vmatpush2.msra.mxu0 0.0
        %2368 = vmatprep.subr.mxu0 0.0
        %2369 = vmatpush2.msra.mxu0 0.0
        %2370 = vmatprep.subr.mxu0 0.0
        %2371 = vmatpush2.msra.mxu0 0.0
        %2372 = vmatprep.mubr.f32.mxu0 0.0
        %2373 = vmatmul.mubr.f32.gmra.mxu0 %v2306
        %v2374 = vpop.f32.mrf.mxu0
        %v2375 = vadd.f32 0.0, %v2374
        %v2376 = vpop.f32.mrf.mxu0
        %v2377 = vadd.f32 0.0, %v2376
        %2378 = vdwg.mxu0
        %2379 = vmatprep.subr.mxu0 0.0
        %2380 = vmatpush1.msra.mxu0 0.0
        %2381 = vmatprep.subr.mxu0 0.0
        %2382 = vmatpush1.msra.mxu0 0.0
        %2383 = vmatprep.subr.mxu0 0.0
        %2384 = vmatpush1.msra.mxu0 0.0
        %2385 = vmatprep.subr.mxu0 0.0
        %2386 = vmatpush1.msra.mxu0 0.0
        %2387 = vmatprep.subr.mxu0 0.0
        %2388 = vmatpush1.msra.mxu0 0.0
        %2389 = vmatprep.subr.mxu0 0.0
        %2390 = vmatpush1.msra.mxu0 0.0
        %2391 = vmatprep.subr.mxu0 0.0
        %2392 = vmatpush1.msra.mxu0 0.0
        %2393 = vmatprep.subr.mxu0 0.0
        %2394 = vmatpush1.msra.mxu0 0.0
        %2395 = vmatprep.subr.mxu0 0.0
        %2396 = vmatpush1.msra.mxu0 0.0
        %2397 = vmatprep.subr.mxu0 0.0
        %2398 = vmatpush1.msra.mxu0 0.0
        %2399 = vmatprep.subr.mxu0 0.0
        %2400 = vmatpush1.msra.mxu0 0.0
        %2401 = vmatprep.subr.mxu0 0.0
        %2402 = vmatpush1.msra.mxu0 0.0
        %2403 = vmatprep.subr.mxu0 0.0
        %2404 = vmatpush1.msra.mxu0 0.0
        %2405 = vmatprep.subr.mxu0 0.0
        %2406 = vmatpush1.msra.mxu0 0.0
        %2407 = vmatprep.subr.mxu0 0.0
        %2408 = vmatpush1.msra.mxu0 0.0
        %2409 = vmatprep.subr.mxu0 0.0
        %2410 = vmatpush1.msra.mxu0 %v2301
        %2411 = vmatprep.subr.mxu0 0.0
        %2412 = vmatpush2.msra.mxu0 0.0
        %2413 = vmatprep.subr.mxu0 0.0
        %2414 = vmatpush2.msra.mxu0 0.0
        %2415 = vmatprep.subr.mxu0 0.0
        %2416 = vmatpush2.msra.mxu0 0.0
        %2417 = vmatprep.subr.mxu0 0.0
        %2418 = vmatpush2.msra.mxu0 0.0
        %2419 = vmatprep.subr.mxu0 0.0
        %2420 = vmatpush2.msra.mxu0 0.0
        %2421 = vmatprep.subr.mxu0 0.0
        %2422 = vmatpush2.msra.mxu0 0.0
        %2423 = vmatprep.subr.mxu0 0.0
        %2424 = vmatpush2.msra.mxu0 0.0
        %2425 = vmatprep.subr.mxu0 0.0
        %2426 = vmatpush2.msra.mxu0 0.0
        %2427 = vmatprep.subr.mxu0 0.0
        %2428 = vmatpush2.msra.mxu0 0.0
        %2429 = vmatprep.subr.mxu0 0.0
        %2430 = vmatpush2.msra.mxu0 0.0
        %2431 = vmatprep.subr.mxu0 0.0
        %2432 = vmatpush2.msra.mxu0 0.0
        %2433 = vmatprep.subr.mxu0 0.0
        %2434 = vmatpush2.msra.mxu0 0.0
        %2435 = vmatprep.subr.mxu0 0.0
        %2436 = vmatpush2.msra.mxu0 0.0
        %2437 = vmatprep.subr.mxu0 0.0
        %2438 = vmatpush2.msra.mxu0 0.0
        %2439 = vmatprep.subr.mxu0 0.0
        %2440 = vmatpush2.msra.mxu0 0.0
        %2441 = vmatprep.subr.mxu0 0.0
        %2442 = vmatpush2.msra.mxu0 0.0
        %2443 = vmatprep.mubr.f32.mxu0 0.0
        %2444 = vmatmul.mubr.f32.gmra.mxu0 %v2306
        %v2445 = vpop.f32.mrf.mxu0
        %v2446 = vadd.f32 0.0, %v2445
        %v2447 = vpop.f32.mrf.mxu0
        %2448 = vdwg.mxu0
        %v2449 = vadd.f32 %v2285, %v2375
        %v2450 = vadd.f32 %v2286, %v2377
        %v2451 = vadd.f32 %v2287, %v2446
        %s2452 = scalar_lea.vmem %s1, 112
        %v2453 = vld [vmem:[%s2452] sm:$0xff]
        %2454 = vrot.lane.b32.xlu0 %v169, 76
        %v2455 = vpop.permute.xlu0 %2454
        %2456 = vrot.lane.b32.xlu0 %v170, 76
        %v2457 = vpop.permute.xlu0 %2456
        %2458 = vrot.lane.b32.xlu0 %v171, 76
        %v2459 = vpop.permute.xlu0 %2458
        %2460 = vrot.lane.b32.xlu0 %v172, 76
        %v2461 = vpop.permute.xlu0 %2460
        %vm2462 = vcmask 621568
        %v2463 = vsel %vm2462, %v2455, %v2457
        %v2464 = vsel %vm2462, %v2457, %v2459
        %v2465 = vsel %vm2462, %v2459, %v2461
        %v2470 = vsel %vm195, %v2453, 0
        %2472 = vmatprep.subr.mxu0 0.0
        %2473 = vmatpush1.msra.mxu0 0.0
        %2474 = vmatprep.subr.mxu0 0.0
        %2475 = vmatpush1.msra.mxu0 0.0
        %2476 = vmatprep.subr.mxu0 0.0
        %2477 = vmatpush1.msra.mxu0 0.0
        %2478 = vmatprep.subr.mxu0 0.0
        %2479 = vmatpush1.msra.mxu0 0.0
        %2480 = vmatprep.subr.mxu0 0.0
        %2481 = vmatpush1.msra.mxu0 0.0
        %2482 = vmatprep.subr.mxu0 0.0
        %2483 = vmatpush1.msra.mxu0 0.0
        %2484 = vmatprep.subr.mxu0 0.0
        %2485 = vmatpush1.msra.mxu0 0.0
        %2486 = vmatprep.subr.mxu0 0.0
        %2487 = vmatpush1.msra.mxu0 0.0
        %2488 = vmatprep.subr.mxu0 0.0
        %2489 = vmatpush1.msra.mxu0 0.0
        %2490 = vmatprep.subr.mxu0 0.0
        %2491 = vmatpush1.msra.mxu0 0.0
        %2492 = vmatprep.subr.mxu0 0.0
        %2493 = vmatpush1.msra.mxu0 0.0
        %2494 = vmatprep.subr.mxu0 0.0
        %2495 = vmatpush1.msra.mxu0 0.0
        %2496 = vmatprep.subr.mxu0 0.0
        %2497 = vmatpush1.msra.mxu0 0.0
        %2498 = vmatprep.subr.mxu0 0.0
        %2499 = vmatpush1.msra.mxu0 0.0
        %2500 = vmatprep.subr.mxu0 0.0
        %2501 = vmatpush1.msra.mxu0 0.0
        %2502 = vmatprep.subr.mxu0 %v2464
        %2503 = vmatpush1.msra.mxu0 %v2463
        %2504 = vmatprep.subr.mxu0 0.0
        %2505 = vmatpush2.msra.mxu0 0.0
        %2506 = vmatprep.subr.mxu0 0.0
        %2507 = vmatpush2.msra.mxu0 0.0
        %2508 = vmatprep.subr.mxu0 0.0
        %2509 = vmatpush2.msra.mxu0 0.0
        %2510 = vmatprep.subr.mxu0 0.0
        %2511 = vmatpush2.msra.mxu0 0.0
        %2512 = vmatprep.subr.mxu0 0.0
        %2513 = vmatpush2.msra.mxu0 0.0
        %2514 = vmatprep.subr.mxu0 0.0
        %2515 = vmatpush2.msra.mxu0 0.0
        %2516 = vmatprep.subr.mxu0 0.0
        %2517 = vmatpush2.msra.mxu0 0.0
        %2518 = vmatprep.subr.mxu0 0.0
        %2519 = vmatpush2.msra.mxu0 0.0
        %2520 = vmatprep.subr.mxu0 0.0
        %2521 = vmatpush2.msra.mxu0 0.0
        %2522 = vmatprep.subr.mxu0 0.0
        %2523 = vmatpush2.msra.mxu0 0.0
        %2524 = vmatprep.subr.mxu0 0.0
        %2525 = vmatpush2.msra.mxu0 0.0
        %2526 = vmatprep.subr.mxu0 0.0
        %2527 = vmatpush2.msra.mxu0 0.0
        %2528 = vmatprep.subr.mxu0 0.0
        %2529 = vmatpush2.msra.mxu0 0.0
        %2530 = vmatprep.subr.mxu0 0.0
        %2531 = vmatpush2.msra.mxu0 0.0
        %2532 = vmatprep.subr.mxu0 0.0
        %2533 = vmatpush2.msra.mxu0 0.0
        %2534 = vmatprep.subr.mxu0 0.0
        %2535 = vmatpush2.msra.mxu0 0.0
        %2536 = vmatprep.mubr.f32.mxu0 0.0
        %2537 = vmatmul.mubr.f32.gmra.mxu0 %v2470
        %v2538 = vpop.f32.mrf.mxu0
        %v2539 = vadd.f32 0.0, %v2538
        %v2540 = vpop.f32.mrf.mxu0
        %v2541 = vadd.f32 0.0, %v2540
        %2542 = vdwg.mxu0
        %2543 = vmatprep.subr.mxu0 0.0
        %2544 = vmatpush1.msra.mxu0 0.0
        %2545 = vmatprep.subr.mxu0 0.0
        %2546 = vmatpush1.msra.mxu0 0.0
        %2547 = vmatprep.subr.mxu0 0.0
        %2548 = vmatpush1.msra.mxu0 0.0
        %2549 = vmatprep.subr.mxu0 0.0
        %2550 = vmatpush1.msra.mxu0 0.0
        %2551 = vmatprep.subr.mxu0 0.0
        %2552 = vmatpush1.msra.mxu0 0.0
        %2553 = vmatprep.subr.mxu0 0.0
        %2554 = vmatpush1.msra.mxu0 0.0
        %2555 = vmatprep.subr.mxu0 0.0
        %2556 = vmatpush1.msra.mxu0 0.0
        %2557 = vmatprep.subr.mxu0 0.0
        %2558 = vmatpush1.msra.mxu0 0.0
        %2559 = vmatprep.subr.mxu0 0.0
        %2560 = vmatpush1.msra.mxu0 0.0
        %2561 = vmatprep.subr.mxu0 0.0
        %2562 = vmatpush1.msra.mxu0 0.0
        %2563 = vmatprep.subr.mxu0 0.0
        %2564 = vmatpush1.msra.mxu0 0.0
        %2565 = vmatprep.subr.mxu0 0.0
        %2566 = vmatpush1.msra.mxu0 0.0
        %2567 = vmatprep.subr.mxu0 0.0
        %2568 = vmatpush1.msra.mxu0 0.0
        %2569 = vmatprep.subr.mxu0 0.0
        %2570 = vmatpush1.msra.mxu0 0.0
        %2571 = vmatprep.subr.mxu0 0.0
        %2572 = vmatpush1.msra.mxu0 0.0
        %2573 = vmatprep.subr.mxu0 0.0
        %2574 = vmatpush1.msra.mxu0 %v2465
        %2575 = vmatprep.subr.mxu0 0.0
        %2576 = vmatpush2.msra.mxu0 0.0
        %2577 = vmatprep.subr.mxu0 0.0
        %2578 = vmatpush2.msra.mxu0 0.0
        %2579 = vmatprep.subr.mxu0 0.0
        %2580 = vmatpush2.msra.mxu0 0.0
        %2581 = vmatprep.subr.mxu0 0.0
        %2582 = vmatpush2.msra.mxu0 0.0
        %2583 = vmatprep.subr.mxu0 0.0
        %2584 = vmatpush2.msra.mxu0 0.0
        %2585 = vmatprep.subr.mxu0 0.0
        %2586 = vmatpush2.msra.mxu0 0.0
        %2587 = vmatprep.subr.mxu0 0.0
        %2588 = vmatpush2.msra.mxu0 0.0
        %2589 = vmatprep.subr.mxu0 0.0
        %2590 = vmatpush2.msra.mxu0 0.0
        %2591 = vmatprep.subr.mxu0 0.0
        %2592 = vmatpush2.msra.mxu0 0.0
        %2593 = vmatprep.subr.mxu0 0.0
        %2594 = vmatpush2.msra.mxu0 0.0
        %2595 = vmatprep.subr.mxu0 0.0
        %2596 = vmatpush2.msra.mxu0 0.0
        %2597 = vmatprep.subr.mxu0 0.0
        %2598 = vmatpush2.msra.mxu0 0.0
        %2599 = vmatprep.subr.mxu0 0.0
        %2600 = vmatpush2.msra.mxu0 0.0
        %2601 = vmatprep.subr.mxu0 0.0
        %2602 = vmatpush2.msra.mxu0 0.0
        %2603 = vmatprep.subr.mxu0 0.0
        %2604 = vmatpush2.msra.mxu0 0.0
        %2605 = vmatprep.subr.mxu0 0.0
        %2606 = vmatpush2.msra.mxu0 0.0
        %2607 = vmatprep.mubr.f32.mxu0 0.0
        %2608 = vmatmul.mubr.f32.gmra.mxu0 %v2470
        %v2609 = vpop.f32.mrf.mxu0
        %v2610 = vadd.f32 0.0, %v2609
        %v2611 = vpop.f32.mrf.mxu0
        %2612 = vdwg.mxu0
        %v2613 = vadd.f32 %v2449, %v2539
        %v2614 = vadd.f32 %v2450, %v2541
        %v2615 = vadd.f32 %v2451, %v2610
        %s2616 = scalar_lea.vmem %s1, 120
        %v2617 = vld [vmem:[%s2616] sm:$0xff]
        %2618 = vrot.lane.b32.xlu0 %v169, 56
        %v2619 = vpop.permute.xlu0 %2618
        %2620 = vrot.lane.b32.xlu0 %v170, 56
        %v2621 = vpop.permute.xlu0 %2620
        %2622 = vrot.lane.b32.xlu0 %v171, 56
        %v2623 = vpop.permute.xlu0 %2622
        %2624 = vrot.lane.b32.xlu0 %v172, 56
        %v2625 = vpop.permute.xlu0 %2624
        %vm2626 = vcmask 457728
        %v2627 = vsel %vm2626, %v2619, %v2621
        %v2628 = vsel %vm2626, %v2621, %v2623
        %v2629 = vsel %vm2626, %v2623, %v2625
        %v2634 = vsel %vm195, %v2617, 0
        %2636 = vmatprep.subr.mxu0 0.0
        %2637 = vmatpush1.msra.mxu0 0.0
        %2638 = vmatprep.subr.mxu0 0.0
        %2639 = vmatpush1.msra.mxu0 0.0
        %2640 = vmatprep.subr.mxu0 0.0
        %2641 = vmatpush1.msra.mxu0 0.0
        %2642 = vmatprep.subr.mxu0 0.0
        %2643 = vmatpush1.msra.mxu0 0.0
        %2644 = vmatprep.subr.mxu0 0.0
        %2645 = vmatpush1.msra.mxu0 0.0
        %2646 = vmatprep.subr.mxu0 0.0
        %2647 = vmatpush1.msra.mxu0 0.0
        %2648 = vmatprep.subr.mxu0 0.0
        %2649 = vmatpush1.msra.mxu0 0.0
        %2650 = vmatprep.subr.mxu0 0.0
        %2651 = vmatpush1.msra.mxu0 0.0
        %2652 = vmatprep.subr.mxu0 0.0
        %2653 = vmatpush1.msra.mxu0 0.0
        %2654 = vmatprep.subr.mxu0 0.0
        %2655 = vmatpush1.msra.mxu0 0.0
        %2656 = vmatprep.subr.mxu0 0.0
        %2657 = vmatpush1.msra.mxu0 0.0
        %2658 = vmatprep.subr.mxu0 0.0
        %2659 = vmatpush1.msra.mxu0 0.0
        %2660 = vmatprep.subr.mxu0 0.0
        %2661 = vmatpush1.msra.mxu0 0.0
        %2662 = vmatprep.subr.mxu0 0.0
        %2663 = vmatpush1.msra.mxu0 0.0
        %2664 = vmatprep.subr.mxu0 0.0
        %2665 = vmatpush1.msra.mxu0 0.0
        %2666 = vmatprep.subr.mxu0 %v2628
        %2667 = vmatpush1.msra.mxu0 %v2627
        %2668 = vmatprep.subr.mxu0 0.0
        %2669 = vmatpush2.msra.mxu0 0.0
        %2670 = vmatprep.subr.mxu0 0.0
        %2671 = vmatpush2.msra.mxu0 0.0
        %2672 = vmatprep.subr.mxu0 0.0
        %2673 = vmatpush2.msra.mxu0 0.0
        %2674 = vmatprep.subr.mxu0 0.0
        %2675 = vmatpush2.msra.mxu0 0.0
        %2676 = vmatprep.subr.mxu0 0.0
        %2677 = vmatpush2.msra.mxu0 0.0
        %2678 = vmatprep.subr.mxu0 0.0
        %2679 = vmatpush2.msra.mxu0 0.0
        %2680 = vmatprep.subr.mxu0 0.0
        %2681 = vmatpush2.msra.mxu0 0.0
        %2682 = vmatprep.subr.mxu0 0.0
        %2683 = vmatpush2.msra.mxu0 0.0
        %2684 = vmatprep.subr.mxu0 0.0
        %2685 = vmatpush2.msra.mxu0 0.0
        %2686 = vmatprep.subr.mxu0 0.0
        %2687 = vmatpush2.msra.mxu0 0.0
        %2688 = vmatprep.subr.mxu0 0.0
        %2689 = vmatpush2.msra.mxu0 0.0
        %2690 = vmatprep.subr.mxu0 0.0
        %2691 = vmatpush2.msra.mxu0 0.0
        %2692 = vmatprep.subr.mxu0 0.0
        %2693 = vmatpush2.msra.mxu0 0.0
        %2694 = vmatprep.subr.mxu0 0.0
        %2695 = vmatpush2.msra.mxu0 0.0
        %2696 = vmatprep.subr.mxu0 0.0
        %2697 = vmatpush2.msra.mxu0 0.0
        %2698 = vmatprep.subr.mxu0 0.0
        %2699 = vmatpush2.msra.mxu0 0.0
        %2700 = vmatprep.mubr.f32.mxu0 0.0
        %2701 = vmatmul.mubr.f32.gmra.mxu0 %v2634
        %v2702 = vpop.f32.mrf.mxu0
        %v2703 = vadd.f32 0.0, %v2702
        %v2704 = vpop.f32.mrf.mxu0
        %v2705 = vadd.f32 0.0, %v2704
        %2706 = vdwg.mxu0
        %2707 = vmatprep.subr.mxu0 0.0
        %2708 = vmatpush1.msra.mxu0 0.0
        %2709 = vmatprep.subr.mxu0 0.0
        %2710 = vmatpush1.msra.mxu0 0.0
        %2711 = vmatprep.subr.mxu0 0.0
        %2712 = vmatpush1.msra.mxu0 0.0
        %2713 = vmatprep.subr.mxu0 0.0
        %2714 = vmatpush1.msra.mxu0 0.0
        %2715 = vmatprep.subr.mxu0 0.0
        %2716 = vmatpush1.msra.mxu0 0.0
        %2717 = vmatprep.subr.mxu0 0.0
        %2718 = vmatpush1.msra.mxu0 0.0
        %2719 = vmatprep.subr.mxu0 0.0
        %2720 = vmatpush1.msra.mxu0 0.0
        %2721 = vmatprep.subr.mxu0 0.0
        %2722 = vmatpush1.msra.mxu0 0.0
        %2723 = vmatprep.subr.mxu0 0.0
        %2724 = vmatpush1.msra.mxu0 0.0
        %2725 = vmatprep.subr.mxu0 0.0
        %2726 = vmatpush1.msra.mxu0 0.0
        %2727 = vmatprep.subr.mxu0 0.0
        %2728 = vmatpush1.msra.mxu0 0.0
        %2729 = vmatprep.subr.mxu0 0.0
        %2730 = vmatpush1.msra.mxu0 0.0
        %2731 = vmatprep.subr.mxu0 0.0
        %2732 = vmatpush1.msra.mxu0 0.0
        %2733 = vmatprep.subr.mxu0 0.0
        %2734 = vmatpush1.msra.mxu0 0.0
        %2735 = vmatprep.subr.mxu0 0.0
        %2736 = vmatpush1.msra.mxu0 0.0
        %2737 = vmatprep.subr.mxu0 0.0
        %2738 = vmatpush1.msra.mxu0 %v2629
        %2739 = vmatprep.subr.mxu0 0.0
        %2740 = vmatpush2.msra.mxu0 0.0
        %2741 = vmatprep.subr.mxu0 0.0
        %2742 = vmatpush2.msra.mxu0 0.0
        %2743 = vmatprep.subr.mxu0 0.0
        %2744 = vmatpush2.msra.mxu0 0.0
        %2745 = vmatprep.subr.mxu0 0.0
        %2746 = vmatpush2.msra.mxu0 0.0
        %2747 = vmatprep.subr.mxu0 0.0
        %2748 = vmatpush2.msra.mxu0 0.0
        %2749 = vmatprep.subr.mxu0 0.0
        %2750 = vmatpush2.msra.mxu0 0.0
        %2751 = vmatprep.subr.mxu0 0.0
        %2752 = vmatpush2.msra.mxu0 0.0
        %2753 = vmatprep.subr.mxu0 0.0
        %2754 = vmatpush2.msra.mxu0 0.0
        %2755 = vmatprep.subr.mxu0 0.0
        %2756 = vmatpush2.msra.mxu0 0.0
        %2757 = vmatprep.subr.mxu0 0.0
        %2758 = vmatpush2.msra.mxu0 0.0
        %2759 = vmatprep.subr.mxu0 0.0
        %2760 = vmatpush2.msra.mxu0 0.0
        %2761 = vmatprep.subr.mxu0 0.0
        %2762 = vmatpush2.msra.mxu0 0.0
        %2763 = vmatprep.subr.mxu0 0.0
        %2764 = vmatpush2.msra.mxu0 0.0
        %2765 = vmatprep.subr.mxu0 0.0
        %2766 = vmatpush2.msra.mxu0 0.0
        %2767 = vmatprep.subr.mxu0 0.0
        %2768 = vmatpush2.msra.mxu0 0.0
        %2769 = vmatprep.subr.mxu0 0.0
        %2770 = vmatpush2.msra.mxu0 0.0
        %2771 = vmatprep.mubr.f32.mxu0 0.0
        %2772 = vmatmul.mubr.f32.gmra.mxu0 %v2634
        %v2773 = vpop.f32.mrf.mxu0
        %v2774 = vadd.f32 0.0, %v2773
        %v2775 = vpop.f32.mrf.mxu0
        %2776 = vdwg.mxu0
        %v2777 = vadd.f32 %v2613, %v2703
        %v2778 = vadd.f32 %v2614, %v2705
        %v2779 = vadd.f32 %v2615, %v2774
        %s2780 = scalar_lea.vmem %s1, 128
        %v2781 = vld [vmem:[%s2780] sm:$0xff]
        %2782 = vrot.lane.b32.xlu0 %v169, 55
        %v2783 = vpop.permute.xlu0 %2782
        %2784 = vrot.lane.b32.xlu0 %v170, 55
        %v2785 = vpop.permute.xlu0 %2784
        %2786 = vrot.lane.b32.xlu0 %v171, 55
        %v2787 = vpop.permute.xlu0 %2786
        %2788 = vrot.lane.b32.xlu0 %v172, 55
        %v2789 = vpop.permute.xlu0 %2788
        %vm2790 = vcmask 449536
        %v2791 = vsel %vm2790, %v2783, %v2785
        %v2792 = vsel %vm2790, %v2785, %v2787
        %v2793 = vsel %vm2790, %v2787, %v2789
        %v2798 = vsel %vm195, %v2781, 0
        %2800 = vmatprep.subr.mxu0 0.0
        %2801 = vmatpush1.msra.mxu0 0.0
        %2802 = vmatprep.subr.mxu0 0.0
        %2803 = vmatpush1.msra.mxu0 0.0
        %2804 = vmatprep.subr.mxu0 0.0
        %2805 = vmatpush1.msra.mxu0 0.0
        %2806 = vmatprep.subr.mxu0 0.0
        %2807 = vmatpush1.msra.mxu0 0.0
        %2808 = vmatprep.subr.mxu0 0.0
        %2809 = vmatpush1.msra.mxu0 0.0
        %2810 = vmatprep.subr.mxu0 0.0
        %2811 = vmatpush1.msra.mxu0 0.0
        %2812 = vmatprep.subr.mxu0 0.0
        %2813 = vmatpush1.msra.mxu0 0.0
        %2814 = vmatprep.subr.mxu0 0.0
        %2815 = vmatpush1.msra.mxu0 0.0
        %2816 = vmatprep.subr.mxu0 0.0
        %2817 = vmatpush1.msra.mxu0 0.0
        %2818 = vmatprep.subr.mxu0 0.0
        %2819 = vmatpush1.msra.mxu0 0.0
        %2820 = vmatprep.subr.mxu0 0.0
        %2821 = vmatpush1.msra.mxu0 0.0
        %2822 = vmatprep.subr.mxu0 0.0
        %2823 = vmatpush1.msra.mxu0 0.0
        %2824 = vmatprep.subr.mxu0 0.0
        %2825 = vmatpush1.msra.mxu0 0.0
        %2826 = vmatprep.subr.mxu0 0.0
        %2827 = vmatpush1.msra.mxu0 0.0
        %2828 = vmatprep.subr.mxu0 0.0
        %2829 = vmatpush1.msra.mxu0 0.0
        %2830 = vmatprep.subr.mxu0 %v2792
        %2831 = vmatpush1.msra.mxu0 %v2791
        %2832 = vmatprep.subr.mxu0 0.0
        %2833 = vmatpush2.msra.mxu0 0.0
        %2834 = vmatprep.subr.mxu0 0.0
        %2835 = vmatpush2.msra.mxu0 0.0
        %2836 = vmatprep.subr.mxu0 0.0
        %2837 = vmatpush2.msra.mxu0 0.0
        %2838 = vmatprep.subr.mxu0 0.0
        %2839 = vmatpush2.msra.mxu0 0.0
        %2840 = vmatprep.subr.mxu0 0.0
        %2841 = vmatpush2.msra.mxu0 0.0
        %2842 = vmatprep.subr.mxu0 0.0
        %2843 = vmatpush2.msra.mxu0 0.0
        %2844 = vmatprep.subr.mxu0 0.0
        %2845 = vmatpush2.msra.mxu0 0.0
        %2846 = vmatprep.subr.mxu0 0.0
        %2847 = vmatpush2.msra.mxu0 0.0
        %2848 = vmatprep.subr.mxu0 0.0
        %2849 = vmatpush2.msra.mxu0 0.0
        %2850 = vmatprep.subr.mxu0 0.0
        %2851 = vmatpush2.msra.mxu0 0.0
        %2852 = vmatprep.subr.mxu0 0.0
        %2853 = vmatpush2.msra.mxu0 0.0
        %2854 = vmatprep.subr.mxu0 0.0
        %2855 = vmatpush2.msra.mxu0 0.0
        %2856 = vmatprep.subr.mxu0 0.0
        %2857 = vmatpush2.msra.mxu0 0.0
        %2858 = vmatprep.subr.mxu0 0.0
        %2859 = vmatpush2.msra.mxu0 0.0
        %2860 = vmatprep.subr.mxu0 0.0
        %2861 = vmatpush2.msra.mxu0 0.0
        %2862 = vmatprep.subr.mxu0 0.0
        %2863 = vmatpush2.msra.mxu0 0.0
        %2864 = vmatprep.mubr.f32.mxu0 0.0
        %2865 = vmatmul.mubr.f32.gmra.mxu0 %v2798
        %v2866 = vpop.f32.mrf.mxu0
        %v2867 = vadd.f32 0.0, %v2866
        %v2868 = vpop.f32.mrf.mxu0
        %v2869 = vadd.f32 0.0, %v2868
        %2870 = vdwg.mxu0
        %2871 = vmatprep.subr.mxu0 0.0
        %2872 = vmatpush1.msra.mxu0 0.0
        %2873 = vmatprep.subr.mxu0 0.0
        %2874 = vmatpush1.msra.mxu0 0.0
        %2875 = vmatprep.subr.mxu0 0.0
        %2876 = vmatpush1.msra.mxu0 0.0
        %2877 = vmatprep.subr.mxu0 0.0
        %2878 = vmatpush1.msra.mxu0 0.0
        %2879 = vmatprep.subr.mxu0 0.0
        %2880 = vmatpush1.msra.mxu0 0.0
        %2881 = vmatprep.subr.mxu0 0.0
        %2882 = vmatpush1.msra.mxu0 0.0
        %2883 = vmatprep.subr.mxu0 0.0
        %2884 = vmatpush1.msra.mxu0 0.0
        %2885 = vmatprep.subr.mxu0 0.0
        %2886 = vmatpush1.msra.mxu0 0.0
        %2887 = vmatprep.subr.mxu0 0.0
        %2888 = vmatpush1.msra.mxu0 0.0
        %2889 = vmatprep.subr.mxu0 0.0
        %2890 = vmatpush1.msra.mxu0 0.0
        %2891 = vmatprep.subr.mxu0 0.0
        %2892 = vmatpush1.msra.mxu0 0.0
        %2893 = vmatprep.subr.mxu0 0.0
        %2894 = vmatpush1.msra.mxu0 0.0
        %2895 = vmatprep.subr.mxu0 0.0
        %2896 = vmatpush1.msra.mxu0 0.0
        %2897 = vmatprep.subr.mxu0 0.0
        %2898 = vmatpush1.msra.mxu0 0.0
        %2899 = vmatprep.subr.mxu0 0.0
        %2900 = vmatpush1.msra.mxu0 0.0
        %2901 = vmatprep.subr.mxu0 0.0
        %2902 = vmatpush1.msra.mxu0 %v2793
        %2903 = vmatprep.subr.mxu0 0.0
        %2904 = vmatpush2.msra.mxu0 0.0
        %2905 = vmatprep.subr.mxu0 0.0
        %2906 = vmatpush2.msra.mxu0 0.0
        %2907 = vmatprep.subr.mxu0 0.0
        %2908 = vmatpush2.msra.mxu0 0.0
        %2909 = vmatprep.subr.mxu0 0.0
        %2910 = vmatpush2.msra.mxu0 0.0
        %2911 = vmatprep.subr.mxu0 0.0
        %2912 = vmatpush2.msra.mxu0 0.0
        %2913 = vmatprep.subr.mxu0 0.0
        %2914 = vmatpush2.msra.mxu0 0.0
        %2915 = vmatprep.subr.mxu0 0.0
        %2916 = vmatpush2.msra.mxu0 0.0
        %2917 = vmatprep.subr.mxu0 0.0
        %2918 = vmatpush2.msra.mxu0 0.0
        %2919 = vmatprep.subr.mxu0 0.0
        %2920 = vmatpush2.msra.mxu0 0.0
        %2921 = vmatprep.subr.mxu0 0.0
        %2922 = vmatpush2.msra.mxu0 0.0
        %2923 = vmatprep.subr.mxu0 0.0
        %2924 = vmatpush2.msra.mxu0 0.0
        %2925 = vmatprep.subr.mxu0 0.0
        %2926 = vmatpush2.msra.mxu0 0.0
        %2927 = vmatprep.subr.mxu0 0.0
        %2928 = vmatpush2.msra.mxu0 0.0
        %2929 = vmatprep.subr.mxu0 0.0
        %2930 = vmatpush2.msra.mxu0 0.0
        %2931 = vmatprep.subr.mxu0 0.0
        %2932 = vmatpush2.msra.mxu0 0.0
        %2933 = vmatprep.subr.mxu0 0.0
        %2934 = vmatpush2.msra.mxu0 0.0
        %2935 = vmatprep.mubr.f32.mxu0 0.0
        %2936 = vmatmul.mubr.f32.gmra.mxu0 %v2798
        %v2937 = vpop.f32.mrf.mxu0
        %v2938 = vadd.f32 0.0, %v2937
        %v2939 = vpop.f32.mrf.mxu0
        %2940 = vdwg.mxu0
        %v2941 = vadd.f32 %v2777, %v2867
        %v2942 = vadd.f32 %v2778, %v2869
        %v2943 = vadd.f32 %v2779, %v2938
        %s2944 = scalar_lea.vmem %s1, 136
        %v2945 = vld [vmem:[%s2944] sm:$0xff]
        %2946 = vrot.lane.b32.xlu0 %v169, 54
        %v2947 = vpop.permute.xlu0 %2946
        %2948 = vrot.lane.b32.xlu0 %v170, 54
        %v2949 = vpop.permute.xlu0 %2948
        %2950 = vrot.lane.b32.xlu0 %v171, 54
        %v2951 = vpop.permute.xlu0 %2950
        %2952 = vrot.lane.b32.xlu0 %v172, 54
        %v2953 = vpop.permute.xlu0 %2952
        %vm2954 = vcmask 441344
        %v2955 = vsel %vm2954, %v2947, %v2949
        %v2956 = vsel %vm2954, %v2949, %v2951
        %v2957 = vsel %vm2954, %v2951, %v2953
        %v2962 = vsel %vm195, %v2945, 0
        %2964 = vmatprep.subr.mxu0 0.0
        %2965 = vmatpush1.msra.mxu0 0.0
        %2966 = vmatprep.subr.mxu0 0.0
        %2967 = vmatpush1.msra.mxu0 0.0
        %2968 = vmatprep.subr.mxu0 0.0
        %2969 = vmatpush1.msra.mxu0 0.0
        %2970 = vmatprep.subr.mxu0 0.0
        %2971 = vmatpush1.msra.mxu0 0.0
        %2972 = vmatprep.subr.mxu0 0.0
        %2973 = vmatpush1.msra.mxu0 0.0
        %2974 = vmatprep.subr.mxu0 0.0
        %2975 = vmatpush1.msra.mxu0 0.0
        %2976 = vmatprep.subr.mxu0 0.0
        %2977 = vmatpush1.msra.mxu0 0.0
        %2978 = vmatprep.subr.mxu0 0.0
        %2979 = vmatpush1.msra.mxu0 0.0
        %2980 = vmatprep.subr.mxu0 0.0
        %2981 = vmatpush1.msra.mxu0 0.0
        %2982 = vmatprep.subr.mxu0 0.0
        %2983 = vmatpush1.msra.mxu0 0.0
        %2984 = vmatprep.subr.mxu0 0.0
        %2985 = vmatpush1.msra.mxu0 0.0
        %2986 = vmatprep.subr.mxu0 0.0
        %2987 = vmatpush1.msra.mxu0 0.0
        %2988 = vmatprep.subr.mxu0 0.0
        %2989 = vmatpush1.msra.mxu0 0.0
        %2990 = vmatprep.subr.mxu0 0.0
        %2991 = vmatpush1.msra.mxu0 0.0
        %2992 = vmatprep.subr.mxu0 0.0
        %2993 = vmatpush1.msra.mxu0 0.0
        %2994 = vmatprep.subr.mxu0 %v2956
        %2995 = vmatpush1.msra.mxu0 %v2955
        %2996 = vmatprep.subr.mxu0 0.0
        %2997 = vmatpush2.msra.mxu0 0.0
        %2998 = vmatprep.subr.mxu0 0.0
        %2999 = vmatpush2.msra.mxu0 0.0
        %3000 = vmatprep.subr.mxu0 0.0
        %3001 = vmatpush2.msra.mxu0 0.0
        %3002 = vmatprep.subr.mxu0 0.0
        %3003 = vmatpush2.msra.mxu0 0.0
        %3004 = vmatprep.subr.mxu0 0.0
        %3005 = vmatpush2.msra.mxu0 0.0
        %3006 = vmatprep.subr.mxu0 0.0
        %3007 = vmatpush2.msra.mxu0 0.0
        %3008 = vmatprep.subr.mxu0 0.0
        %3009 = vmatpush2.msra.mxu0 0.0
        %3010 = vmatprep.subr.mxu0 0.0
        %3011 = vmatpush2.msra.mxu0 0.0
        %3012 = vmatprep.subr.mxu0 0.0
        %3013 = vmatpush2.msra.mxu0 0.0
        %3014 = vmatprep.subr.mxu0 0.0
        %3015 = vmatpush2.msra.mxu0 0.0
        %3016 = vmatprep.subr.mxu0 0.0
        %3017 = vmatpush2.msra.mxu0 0.0
        %3018 = vmatprep.subr.mxu0 0.0
        %3019 = vmatpush2.msra.mxu0 0.0
        %3020 = vmatprep.subr.mxu0 0.0
        %3021 = vmatpush2.msra.mxu0 0.0
        %3022 = vmatprep.subr.mxu0 0.0
        %3023 = vmatpush2.msra.mxu0 0.0
        %3024 = vmatprep.subr.mxu0 0.0
        %3025 = vmatpush2.msra.mxu0 0.0
        %3026 = vmatprep.subr.mxu0 0.0
        %3027 = vmatpush2.msra.mxu0 0.0
        %3028 = vmatprep.mubr.f32.mxu0 0.0
        %3029 = vmatmul.mubr.f32.gmra.mxu0 %v2962
        %v3030 = vpop.f32.mrf.mxu0
        %v3031 = vadd.f32 0.0, %v3030
        %v3032 = vpop.f32.mrf.mxu0
        %v3033 = vadd.f32 0.0, %v3032
        %3034 = vdwg.mxu0
        %3035 = vmatprep.subr.mxu0 0.0
        %3036 = vmatpush1.msra.mxu0 0.0
        %3037 = vmatprep.subr.mxu0 0.0
        %3038 = vmatpush1.msra.mxu0 0.0
        %3039 = vmatprep.subr.mxu0 0.0
        %3040 = vmatpush1.msra.mxu0 0.0
        %3041 = vmatprep.subr.mxu0 0.0
        %3042 = vmatpush1.msra.mxu0 0.0
        %3043 = vmatprep.subr.mxu0 0.0
        %3044 = vmatpush1.msra.mxu0 0.0
        %3045 = vmatprep.subr.mxu0 0.0
        %3046 = vmatpush1.msra.mxu0 0.0
        %3047 = vmatprep.subr.mxu0 0.0
        %3048 = vmatpush1.msra.mxu0 0.0
        %3049 = vmatprep.subr.mxu0 0.0
        %3050 = vmatpush1.msra.mxu0 0.0
        %3051 = vmatprep.subr.mxu0 0.0
        %3052 = vmatpush1.msra.mxu0 0.0
        %3053 = vmatprep.subr.mxu0 0.0
        %3054 = vmatpush1.msra.mxu0 0.0
        %3055 = vmatprep.subr.mxu0 0.0
        %3056 = vmatpush1.msra.mxu0 0.0
        %3057 = vmatprep.subr.mxu0 0.0
        %3058 = vmatpush1.msra.mxu0 0.0
        %3059 = vmatprep.subr.mxu0 0.0
        %3060 = vmatpush1.msra.mxu0 0.0
        %3061 = vmatprep.subr.mxu0 0.0
        %3062 = vmatpush1.msra.mxu0 0.0
        %3063 = vmatprep.subr.mxu0 0.0
        %3064 = vmatpush1.msra.mxu0 0.0
        %3065 = vmatprep.subr.mxu0 0.0
        %3066 = vmatpush1.msra.mxu0 %v2957
        %3067 = vmatprep.subr.mxu0 0.0
        %3068 = vmatpush2.msra.mxu0 0.0
        %3069 = vmatprep.subr.mxu0 0.0
        %3070 = vmatpush2.msra.mxu0 0.0
        %3071 = vmatprep.subr.mxu0 0.0
        %3072 = vmatpush2.msra.mxu0 0.0
        %3073 = vmatprep.subr.mxu0 0.0
        %3074 = vmatpush2.msra.mxu0 0.0
        %3075 = vmatprep.subr.mxu0 0.0
        %3076 = vmatpush2.msra.mxu0 0.0
        %3077 = vmatprep.subr.mxu0 0.0
        %3078 = vmatpush2.msra.mxu0 0.0
        %3079 = vmatprep.subr.mxu0 0.0
        %3080 = vmatpush2.msra.mxu0 0.0
        %3081 = vmatprep.subr.mxu0 0.0
        %3082 = vmatpush2.msra.mxu0 0.0
        %3083 = vmatprep.subr.mxu0 0.0
        %3084 = vmatpush2.msra.mxu0 0.0
        %3085 = vmatprep.subr.mxu0 0.0
        %3086 = vmatpush2.msra.mxu0 0.0
        %3087 = vmatprep.subr.mxu0 0.0
        %3088 = vmatpush2.msra.mxu0 0.0
        %3089 = vmatprep.subr.mxu0 0.0
        %3090 = vmatpush2.msra.mxu0 0.0
        %3091 = vmatprep.subr.mxu0 0.0
        %3092 = vmatpush2.msra.mxu0 0.0
        %3093 = vmatprep.subr.mxu0 0.0
        %3094 = vmatpush2.msra.mxu0 0.0
        %3095 = vmatprep.subr.mxu0 0.0
        %3096 = vmatpush2.msra.mxu0 0.0
        %3097 = vmatprep.subr.mxu0 0.0
        %3098 = vmatpush2.msra.mxu0 0.0
        %3099 = vmatprep.mubr.f32.mxu0 0.0
        %3100 = vmatmul.mubr.f32.gmra.mxu0 %v2962
        %v3101 = vpop.f32.mrf.mxu0
        %v3102 = vadd.f32 0.0, %v3101
        %v3103 = vpop.f32.mrf.mxu0
        %3104 = vdwg.mxu0
        %v3105 = vadd.f32 %v2941, %v3031
        %v3106 = vadd.f32 %v2942, %v3033
        %v3107 = vadd.f32 %v2943, %v3102
        %s3108 = scalar_lea.vmem %s1, 144
        %v3109 = vld [vmem:[%s3108] sm:$0xff]
        %3110 = vrot.lane.b32.xlu0 %v169, 53
        %v3111 = vpop.permute.xlu0 %3110
        %3112 = vrot.lane.b32.xlu0 %v170, 53
        %v3113 = vpop.permute.xlu0 %3112
        %3114 = vrot.lane.b32.xlu0 %v171, 53
        %v3115 = vpop.permute.xlu0 %3114
        %3116 = vrot.lane.b32.xlu0 %v172, 53
        %v3117 = vpop.permute.xlu0 %3116
        %vm3118 = vcmask 433152
        %v3119 = vsel %vm3118, %v3111, %v3113
        %v3120 = vsel %vm3118, %v3113, %v3115
        %v3121 = vsel %vm3118, %v3115, %v3117
        %v3126 = vsel %vm195, %v3109, 0
        %3128 = vmatprep.subr.mxu0 0.0
        %3129 = vmatpush1.msra.mxu0 0.0
        %3130 = vmatprep.subr.mxu0 0.0
        %3131 = vmatpush1.msra.mxu0 0.0
        %3132 = vmatprep.subr.mxu0 0.0
        %3133 = vmatpush1.msra.mxu0 0.0
        %3134 = vmatprep.subr.mxu0 0.0
        %3135 = vmatpush1.msra.mxu0 0.0
        %3136 = vmatprep.subr.mxu0 0.0
        %3137 = vmatpush1.msra.mxu0 0.0
        %3138 = vmatprep.subr.mxu0 0.0
        %3139 = vmatpush1.msra.mxu0 0.0
        %3140 = vmatprep.subr.mxu0 0.0
        %3141 = vmatpush1.msra.mxu0 0.0
        %3142 = vmatprep.subr.mxu0 0.0
        %3143 = vmatpush1.msra.mxu0 0.0
        %3144 = vmatprep.subr.mxu0 0.0
        %3145 = vmatpush1.msra.mxu0 0.0
        %3146 = vmatprep.subr.mxu0 0.0
        %3147 = vmatpush1.msra.mxu0 0.0
        %3148 = vmatprep.subr.mxu0 0.0
        %3149 = vmatpush1.msra.mxu0 0.0
        %3150 = vmatprep.subr.mxu0 0.0
        %3151 = vmatpush1.msra.mxu0 0.0
        %3152 = vmatprep.subr.mxu0 0.0
        %3153 = vmatpush1.msra.mxu0 0.0
        %3154 = vmatprep.subr.mxu0 0.0
        %3155 = vmatpush1.msra.mxu0 0.0
        %3156 = vmatprep.subr.mxu0 0.0
        %3157 = vmatpush1.msra.mxu0 0.0
        %3158 = vmatprep.subr.mxu0 %v3120
        %3159 = vmatpush1.msra.mxu0 %v3119
        %3160 = vmatprep.subr.mxu0 0.0
        %3161 = vmatpush2.msra.mxu0 0.0
        %3162 = vmatprep.subr.mxu0 0.0
        %3163 = vmatpush2.msra.mxu0 0.0
        %3164 = vmatprep.subr.mxu0 0.0
        %3165 = vmatpush2.msra.mxu0 0.0
        %3166 = vmatprep.subr.mxu0 0.0
        %3167 = vmatpush2.msra.mxu0 0.0
        %3168 = vmatprep.subr.mxu0 0.0
        %3169 = vmatpush2.msra.mxu0 0.0
        %3170 = vmatprep.subr.mxu0 0.0
        %3171 = vmatpush2.msra.mxu0 0.0
        %3172 = vmatprep.subr.mxu0 0.0
        %3173 = vmatpush2.msra.mxu0 0.0
        %3174 = vmatprep.subr.mxu0 0.0
        %3175 = vmatpush2.msra.mxu0 0.0
        %3176 = vmatprep.subr.mxu0 0.0
        %3177 = vmatpush2.msra.mxu0 0.0
        %3178 = vmatprep.subr.mxu0 0.0
        %3179 = vmatpush2.msra.mxu0 0.0
        %3180 = vmatprep.subr.mxu0 0.0
        %3181 = vmatpush2.msra.mxu0 0.0
        %3182 = vmatprep.subr.mxu0 0.0
        %3183 = vmatpush2.msra.mxu0 0.0
        %3184 = vmatprep.subr.mxu0 0.0
        %3185 = vmatpush2.msra.mxu0 0.0
        %3186 = vmatprep.subr.mxu0 0.0
        %3187 = vmatpush2.msra.mxu0 0.0
        %3188 = vmatprep.subr.mxu0 0.0
        %3189 = vmatpush2.msra.mxu0 0.0
        %3190 = vmatprep.subr.mxu0 0.0
        %3191 = vmatpush2.msra.mxu0 0.0
        %3192 = vmatprep.mubr.f32.mxu0 0.0
        %3193 = vmatmul.mubr.f32.gmra.mxu0 %v3126
        %v3194 = vpop.f32.mrf.mxu0
        %v3195 = vadd.f32 0.0, %v3194
        %v3196 = vpop.f32.mrf.mxu0
        %v3197 = vadd.f32 0.0, %v3196
        %3198 = vdwg.mxu0
        %3199 = vmatprep.subr.mxu0 0.0
        %3200 = vmatpush1.msra.mxu0 0.0
        %3201 = vmatprep.subr.mxu0 0.0
        %3202 = vmatpush1.msra.mxu0 0.0
        %3203 = vmatprep.subr.mxu0 0.0
        %3204 = vmatpush1.msra.mxu0 0.0
        %3205 = vmatprep.subr.mxu0 0.0
        %3206 = vmatpush1.msra.mxu0 0.0
        %3207 = vmatprep.subr.mxu0 0.0
        %3208 = vmatpush1.msra.mxu0 0.0
        %3209 = vmatprep.subr.mxu0 0.0
        %3210 = vmatpush1.msra.mxu0 0.0
        %3211 = vmatprep.subr.mxu0 0.0
        %3212 = vmatpush1.msra.mxu0 0.0
        %3213 = vmatprep.subr.mxu0 0.0
        %3214 = vmatpush1.msra.mxu0 0.0
        %3215 = vmatprep.subr.mxu0 0.0
        %3216 = vmatpush1.msra.mxu0 0.0
        %3217 = vmatprep.subr.mxu0 0.0
        %3218 = vmatpush1.msra.mxu0 0.0
        %3219 = vmatprep.subr.mxu0 0.0
        %3220 = vmatpush1.msra.mxu0 0.0
        %3221 = vmatprep.subr.mxu0 0.0
        %3222 = vmatpush1.msra.mxu0 0.0
        %3223 = vmatprep.subr.mxu0 0.0
        %3224 = vmatpush1.msra.mxu0 0.0
        %3225 = vmatprep.subr.mxu0 0.0
        %3226 = vmatpush1.msra.mxu0 0.0
        %3227 = vmatprep.subr.mxu0 0.0
        %3228 = vmatpush1.msra.mxu0 0.0
        %3229 = vmatprep.subr.mxu0 0.0
        %3230 = vmatpush1.msra.mxu0 %v3121
        %3231 = vmatprep.subr.mxu0 0.0
        %3232 = vmatpush2.msra.mxu0 0.0
        %3233 = vmatprep.subr.mxu0 0.0
        %3234 = vmatpush2.msra.mxu0 0.0
        %3235 = vmatprep.subr.mxu0 0.0
        %3236 = vmatpush2.msra.mxu0 0.0
        %3237 = vmatprep.subr.mxu0 0.0
        %3238 = vmatpush2.msra.mxu0 0.0
        %3239 = vmatprep.subr.mxu0 0.0
        %3240 = vmatpush2.msra.mxu0 0.0
        %3241 = vmatprep.subr.mxu0 0.0
        %3242 = vmatpush2.msra.mxu0 0.0
        %3243 = vmatprep.subr.mxu0 0.0
        %3244 = vmatpush2.msra.mxu0 0.0
        %3245 = vmatprep.subr.mxu0 0.0
        %3246 = vmatpush2.msra.mxu0 0.0
        %3247 = vmatprep.subr.mxu0 0.0
        %3248 = vmatpush2.msra.mxu0 0.0
        %3249 = vmatprep.subr.mxu0 0.0
        %3250 = vmatpush2.msra.mxu0 0.0
        %3251 = vmatprep.subr.mxu0 0.0
        %3252 = vmatpush2.msra.mxu0 0.0
        %3253 = vmatprep.subr.mxu0 0.0
        %3254 = vmatpush2.msra.mxu0 0.0
        %3255 = vmatprep.subr.mxu0 0.0
        %3256 = vmatpush2.msra.mxu0 0.0
        %3257 = vmatprep.subr.mxu0 0.0
        %3258 = vmatpush2.msra.mxu0 0.0
        %3259 = vmatprep.subr.mxu0 0.0
        %3260 = vmatpush2.msra.mxu0 0.0
        %3261 = vmatprep.subr.mxu0 0.0
        %3262 = vmatpush2.msra.mxu0 0.0
        %3263 = vmatprep.mubr.f32.mxu0 0.0
        %3264 = vmatmul.mubr.f32.gmra.mxu0 %v3126
        %v3265 = vpop.f32.mrf.mxu0
        %v3266 = vadd.f32 0.0, %v3265
        %v3267 = vpop.f32.mrf.mxu0
        %3268 = vdwg.mxu0
        %v3269 = vadd.f32 %v3105, %v3195
        %v3270 = vadd.f32 %v3106, %v3197
        %v3271 = vadd.f32 %v3107, %v3266
        %s3272 = scalar_lea.vmem %s1, 152
        %v3273 = vld [vmem:[%s3272] sm:$0xff]
        %3274 = vrot.lane.b32.xlu0 %v169, 52
        %v3275 = vpop.permute.xlu0 %3274
        %3276 = vrot.lane.b32.xlu0 %v170, 52
        %v3277 = vpop.permute.xlu0 %3276
        %3278 = vrot.lane.b32.xlu0 %v171, 52
        %v3279 = vpop.permute.xlu0 %3278
        %3280 = vrot.lane.b32.xlu0 %v172, 52
        %v3281 = vpop.permute.xlu0 %3280
        %vm3282 = vcmask 424960
        %v3283 = vsel %vm3282, %v3275, %v3277
        %v3284 = vsel %vm3282, %v3277, %v3279
        %v3285 = vsel %vm3282, %v3279, %v3281
        %v3290 = vsel %vm195, %v3273, 0
        %3292 = vmatprep.subr.mxu0 0.0
        %3293 = vmatpush1.msra.mxu0 0.0
        %3294 = vmatprep.subr.mxu0 0.0
        %3295 = vmatpush1.msra.mxu0 0.0
        %3296 = vmatprep.subr.mxu0 0.0
        %3297 = vmatpush1.msra.mxu0 0.0
        %3298 = vmatprep.subr.mxu0 0.0
        %3299 = vmatpush1.msra.mxu0 0.0
        %3300 = vmatprep.subr.mxu0 0.0
        %3301 = vmatpush1.msra.mxu0 0.0
        %3302 = vmatprep.subr.mxu0 0.0
        %3303 = vmatpush1.msra.mxu0 0.0
        %3304 = vmatprep.subr.mxu0 0.0
        %3305 = vmatpush1.msra.mxu0 0.0
        %3306 = vmatprep.subr.mxu0 0.0
        %3307 = vmatpush1.msra.mxu0 0.0
        %3308 = vmatprep.subr.mxu0 0.0
        %3309 = vmatpush1.msra.mxu0 0.0
        %3310 = vmatprep.subr.mxu0 0.0
        %3311 = vmatpush1.msra.mxu0 0.0
        %3312 = vmatprep.subr.mxu0 0.0
        %3313 = vmatpush1.msra.mxu0 0.0
        %3314 = vmatprep.subr.mxu0 0.0
        %3315 = vmatpush1.msra.mxu0 0.0
        %3316 = vmatprep.subr.mxu0 0.0
        %3317 = vmatpush1.msra.mxu0 0.0
        %3318 = vmatprep.subr.mxu0 0.0
        %3319 = vmatpush1.msra.mxu0 0.0
        %3320 = vmatprep.subr.mxu0 0.0
        %3321 = vmatpush1.msra.mxu0 0.0
        %3322 = vmatprep.subr.mxu0 %v3284
        %3323 = vmatpush1.msra.mxu0 %v3283
        %3324 = vmatprep.subr.mxu0 0.0
        %3325 = vmatpush2.msra.mxu0 0.0
        %3326 = vmatprep.subr.mxu0 0.0
        %3327 = vmatpush2.msra.mxu0 0.0
        %3328 = vmatprep.subr.mxu0 0.0
        %3329 = vmatpush2.msra.mxu0 0.0
        %3330 = vmatprep.subr.mxu0 0.0
        %3331 = vmatpush2.msra.mxu0 0.0
        %3332 = vmatprep.subr.mxu0 0.0
        %3333 = vmatpush2.msra.mxu0 0.0
        %3334 = vmatprep.subr.mxu0 0.0
        %3335 = vmatpush2.msra.mxu0 0.0
        %3336 = vmatprep.subr.mxu0 0.0
        %3337 = vmatpush2.msra.mxu0 0.0
        %3338 = vmatprep.subr.mxu0 0.0
        %3339 = vmatpush2.msra.mxu0 0.0
        %3340 = vmatprep.subr.mxu0 0.0
        %3341 = vmatpush2.msra.mxu0 0.0
        %3342 = vmatprep.subr.mxu0 0.0
        %3343 = vmatpush2.msra.mxu0 0.0
        %3344 = vmatprep.subr.mxu0 0.0
        %3345 = vmatpush2.msra.mxu0 0.0
        %3346 = vmatprep.subr.mxu0 0.0
        %3347 = vmatpush2.msra.mxu0 0.0
        %3348 = vmatprep.subr.mxu0 0.0
        %3349 = vmatpush2.msra.mxu0 0.0
        %3350 = vmatprep.subr.mxu0 0.0
        %3351 = vmatpush2.msra.mxu0 0.0
        %3352 = vmatprep.subr.mxu0 0.0
        %3353 = vmatpush2.msra.mxu0 0.0
        %3354 = vmatprep.subr.mxu0 0.0
        %3355 = vmatpush2.msra.mxu0 0.0
        %3356 = vmatprep.mubr.f32.mxu0 0.0
        %3357 = vmatmul.mubr.f32.gmra.mxu0 %v3290
        %v3358 = vpop.f32.mrf.mxu0
        %v3359 = vadd.f32 0.0, %v3358
        %v3360 = vpop.f32.mrf.mxu0
        %v3361 = vadd.f32 0.0, %v3360
        %3362 = vdwg.mxu0
        %3363 = vmatprep.subr.mxu0 0.0
        %3364 = vmatpush1.msra.mxu0 0.0
        %3365 = vmatprep.subr.mxu0 0.0
        %3366 = vmatpush1.msra.mxu0 0.0
        %3367 = vmatprep.subr.mxu0 0.0
        %3368 = vmatpush1.msra.mxu0 0.0
        %3369 = vmatprep.subr.mxu0 0.0
        %3370 = vmatpush1.msra.mxu0 0.0
        %3371 = vmatprep.subr.mxu0 0.0
        %3372 = vmatpush1.msra.mxu0 0.0
        %3373 = vmatprep.subr.mxu0 0.0
        %3374 = vmatpush1.msra.mxu0 0.0
        %3375 = vmatprep.subr.mxu0 0.0
        %3376 = vmatpush1.msra.mxu0 0.0
        %3377 = vmatprep.subr.mxu0 0.0
        %3378 = vmatpush1.msra.mxu0 0.0
        %3379 = vmatprep.subr.mxu0 0.0
        %3380 = vmatpush1.msra.mxu0 0.0
        %3381 = vmatprep.subr.mxu0 0.0
        %3382 = vmatpush1.msra.mxu0 0.0
        %3383 = vmatprep.subr.mxu0 0.0
        %3384 = vmatpush1.msra.mxu0 0.0
        %3385 = vmatprep.subr.mxu0 0.0
        %3386 = vmatpush1.msra.mxu0 0.0
        %3387 = vmatprep.subr.mxu0 0.0
        %3388 = vmatpush1.msra.mxu0 0.0
        %3389 = vmatprep.subr.mxu0 0.0
        %3390 = vmatpush1.msra.mxu0 0.0
        %3391 = vmatprep.subr.mxu0 0.0
        %3392 = vmatpush1.msra.mxu0 0.0
        %3393 = vmatprep.subr.mxu0 0.0
        %3394 = vmatpush1.msra.mxu0 %v3285
        %3395 = vmatprep.subr.mxu0 0.0
        %3396 = vmatpush2.msra.mxu0 0.0
        %3397 = vmatprep.subr.mxu0 0.0
        %3398 = vmatpush2.msra.mxu0 0.0
        %3399 = vmatprep.subr.mxu0 0.0
        %3400 = vmatpush2.msra.mxu0 0.0
        %3401 = vmatprep.subr.mxu0 0.0
        %3402 = vmatpush2.msra.mxu0 0.0
        %3403 = vmatprep.subr.mxu0 0.0
        %3404 = vmatpush2.msra.mxu0 0.0
        %3405 = vmatprep.subr.mxu0 0.0
        %3406 = vmatpush2.msra.mxu0 0.0
        %3407 = vmatprep.subr.mxu0 0.0
        %3408 = vmatpush2.msra.mxu0 0.0
        %3409 = vmatprep.subr.mxu0 0.0
        %3410 = vmatpush2.msra.mxu0 0.0
        %3411 = vmatprep.subr.mxu0 0.0
        %3412 = vmatpush2.msra.mxu0 0.0
        %3413 = vmatprep.subr.mxu0 0.0
        %3414 = vmatpush2.msra.mxu0 0.0
        %3415 = vmatprep.subr.mxu0 0.0
        %3416 = vmatpush2.msra.mxu0 0.0
        %3417 = vmatprep.subr.mxu0 0.0
        %3418 = vmatpush2.msra.mxu0 0.0
        %3419 = vmatprep.subr.mxu0 0.0
        %3420 = vmatpush2.msra.mxu0 0.0
        %3421 = vmatprep.subr.mxu0 0.0
        %3422 = vmatpush2.msra.mxu0 0.0
        %3423 = vmatprep.subr.mxu0 0.0
        %3424 = vmatpush2.msra.mxu0 0.0
        %3425 = vmatprep.subr.mxu0 0.0
        %3426 = vmatpush2.msra.mxu0 0.0
        %3427 = vmatprep.mubr.f32.mxu0 0.0
        %3428 = vmatmul.mubr.f32.gmra.mxu0 %v3290
        %v3429 = vpop.f32.mrf.mxu0
        %v3430 = vadd.f32 0.0, %v3429
        %v3431 = vpop.f32.mrf.mxu0
        %3432 = vdwg.mxu0
        %v3433 = vadd.f32 %v3269, %v3359
        %v3434 = vadd.f32 %v3270, %v3361
        %v3435 = vadd.f32 %v3271, %v3430
        %s3436 = scalar_lea.vmem %s1, 160
        %v3437 = vld [vmem:[%s3436] sm:$0xff]
        %3438 = vrot.lane.b32.xlu0 %v169, 32
        %v3439 = vpop.permute.xlu0 %3438
        %3440 = vrot.lane.b32.xlu0 %v170, 32
        %v3441 = vpop.permute.xlu0 %3440
        %3442 = vrot.lane.b32.xlu0 %v171, 32
        %v3443 = vpop.permute.xlu0 %3442
        %3444 = vrot.lane.b32.xlu0 %v172, 32
        %v3445 = vpop.permute.xlu0 %3444
        %vm3446 = vcmask 261120
        %v3447 = vsel %vm3446, %v3439, %v3441
        %v3448 = vsel %vm3446, %v3441, %v3443
        %v3449 = vsel %vm3446, %v3443, %v3445
        %v3454 = vsel %vm195, %v3437, 0
        %3456 = vmatprep.subr.mxu0 0.0
        %3457 = vmatpush1.msra.mxu0 0.0
        %3458 = vmatprep.subr.mxu0 0.0
        %3459 = vmatpush1.msra.mxu0 0.0
        %3460 = vmatprep.subr.mxu0 0.0
        %3461 = vmatpush1.msra.mxu0 0.0
        %3462 = vmatprep.subr.mxu0 0.0
        %3463 = vmatpush1.msra.mxu0 0.0
        %3464 = vmatprep.subr.mxu0 0.0
        %3465 = vmatpush1.msra.mxu0 0.0
        %3466 = vmatprep.subr.mxu0 0.0
        %3467 = vmatpush1.msra.mxu0 0.0
        %3468 = vmatprep.subr.mxu0 0.0
        %3469 = vmatpush1.msra.mxu0 0.0
        %3470 = vmatprep.subr.mxu0 0.0
        %3471 = vmatpush1.msra.mxu0 0.0
        %3472 = vmatprep.subr.mxu0 0.0
        %3473 = vmatpush1.msra.mxu0 0.0
        %3474 = vmatprep.subr.mxu0 0.0
        %3475 = vmatpush1.msra.mxu0 0.0
        %3476 = vmatprep.subr.mxu0 0.0
        %3477 = vmatpush1.msra.mxu0 0.0
        %3478 = vmatprep.subr.mxu0 0.0
        %3479 = vmatpush1.msra.mxu0 0.0
        %3480 = vmatprep.subr.mxu0 0.0
        %3481 = vmatpush1.msra.mxu0 0.0
        %3482 = vmatprep.subr.mxu0 0.0
        %3483 = vmatpush1.msra.mxu0 0.0
        %3484 = vmatprep.subr.mxu0 0.0
        %3485 = vmatpush1.msra.mxu0 0.0
        %3486 = vmatprep.subr.mxu0 %v3448
        %3487 = vmatpush1.msra.mxu0 %v3447
        %3488 = vmatprep.subr.mxu0 0.0
        %3489 = vmatpush2.msra.mxu0 0.0
        %3490 = vmatprep.subr.mxu0 0.0
        %3491 = vmatpush2.msra.mxu0 0.0
        %3492 = vmatprep.subr.mxu0 0.0
        %3493 = vmatpush2.msra.mxu0 0.0
        %3494 = vmatprep.subr.mxu0 0.0
        %3495 = vmatpush2.msra.mxu0 0.0
        %3496 = vmatprep.subr.mxu0 0.0
        %3497 = vmatpush2.msra.mxu0 0.0
        %3498 = vmatprep.subr.mxu0 0.0
        %3499 = vmatpush2.msra.mxu0 0.0
        %3500 = vmatprep.subr.mxu0 0.0
        %3501 = vmatpush2.msra.mxu0 0.0
        %3502 = vmatprep.subr.mxu0 0.0
        %3503 = vmatpush2.msra.mxu0 0.0
        %3504 = vmatprep.subr.mxu0 0.0
        %3505 = vmatpush2.msra.mxu0 0.0
        %3506 = vmatprep.subr.mxu0 0.0
        %3507 = vmatpush2.msra.mxu0 0.0
        %3508 = vmatprep.subr.mxu0 0.0
        %3509 = vmatpush2.msra.mxu0 0.0
        %3510 = vmatprep.subr.mxu0 0.0
        %3511 = vmatpush2.msra.mxu0 0.0
        %3512 = vmatprep.subr.mxu0 0.0
        %3513 = vmatpush2.msra.mxu0 0.0
        %3514 = vmatprep.subr.mxu0 0.0
        %3515 = vmatpush2.msra.mxu0 0.0
        %3516 = vmatprep.subr.mxu0 0.0
        %3517 = vmatpush2.msra.mxu0 0.0
        %3518 = vmatprep.subr.mxu0 0.0
        %3519 = vmatpush2.msra.mxu0 0.0
        %3520 = vmatprep.mubr.f32.mxu0 0.0
        %3521 = vmatmul.mubr.f32.gmra.mxu0 %v3454
        %v3522 = vpop.f32.mrf.mxu0
        %v3523 = vadd.f32 0.0, %v3522
        %v3524 = vpop.f32.mrf.mxu0
        %v3525 = vadd.f32 0.0, %v3524
        %3526 = vdwg.mxu0
        %3527 = vmatprep.subr.mxu0 0.0
        %3528 = vmatpush1.msra.mxu0 0.0
        %3529 = vmatprep.subr.mxu0 0.0
        %3530 = vmatpush1.msra.mxu0 0.0
        %3531 = vmatprep.subr.mxu0 0.0
        %3532 = vmatpush1.msra.mxu0 0.0
        %3533 = vmatprep.subr.mxu0 0.0
        %3534 = vmatpush1.msra.mxu0 0.0
        %3535 = vmatprep.subr.mxu0 0.0
        %3536 = vmatpush1.msra.mxu0 0.0
        %3537 = vmatprep.subr.mxu0 0.0
        %3538 = vmatpush1.msra.mxu0 0.0
        %3539 = vmatprep.subr.mxu0 0.0
        %3540 = vmatpush1.msra.mxu0 0.0
        %3541 = vmatprep.subr.mxu0 0.0
        %3542 = vmatpush1.msra.mxu0 0.0
        %3543 = vmatprep.subr.mxu0 0.0
        %3544 = vmatpush1.msra.mxu0 0.0
        %3545 = vmatprep.subr.mxu0 0.0
        %3546 = vmatpush1.msra.mxu0 0.0
        %3547 = vmatprep.subr.mxu0 0.0
        %3548 = vmatpush1.msra.mxu0 0.0
        %3549 = vmatprep.subr.mxu0 0.0
        %3550 = vmatpush1.msra.mxu0 0.0
        %3551 = vmatprep.subr.mxu0 0.0
        %3552 = vmatpush1.msra.mxu0 0.0
        %3553 = vmatprep.subr.mxu0 0.0
        %3554 = vmatpush1.msra.mxu0 0.0
        %3555 = vmatprep.subr.mxu0 0.0
        %3556 = vmatpush1.msra.mxu0 0.0
        %3557 = vmatprep.subr.mxu0 0.0
        %3558 = vmatpush1.msra.mxu0 %v3449
        %3559 = vmatprep.subr.mxu0 0.0
        %3560 = vmatpush2.msra.mxu0 0.0
        %3561 = vmatprep.subr.mxu0 0.0
        %3562 = vmatpush2.msra.mxu0 0.0
        %3563 = vmatprep.subr.mxu0 0.0
        %3564 = vmatpush2.msra.mxu0 0.0
        %3565 = vmatprep.subr.mxu0 0.0
        %3566 = vmatpush2.msra.mxu0 0.0
        %3567 = vmatprep.subr.mxu0 0.0
        %3568 = vmatpush2.msra.mxu0 0.0
        %3569 = vmatprep.subr.mxu0 0.0
        %3570 = vmatpush2.msra.mxu0 0.0
        %3571 = vmatprep.subr.mxu0 0.0
        %3572 = vmatpush2.msra.mxu0 0.0
        %3573 = vmatprep.subr.mxu0 0.0
        %3574 = vmatpush2.msra.mxu0 0.0
        %3575 = vmatprep.subr.mxu0 0.0
        %3576 = vmatpush2.msra.mxu0 0.0
        %3577 = vmatprep.subr.mxu0 0.0
        %3578 = vmatpush2.msra.mxu0 0.0
        %3579 = vmatprep.subr.mxu0 0.0
        %3580 = vmatpush2.msra.mxu0 0.0
        %3581 = vmatprep.subr.mxu0 0.0
        %3582 = vmatpush2.msra.mxu0 0.0
        %3583 = vmatprep.subr.mxu0 0.0
        %3584 = vmatpush2.msra.mxu0 0.0
        %3585 = vmatprep.subr.mxu0 0.0
        %3586 = vmatpush2.msra.mxu0 0.0
        %3587 = vmatprep.subr.mxu0 0.0
        %3588 = vmatpush2.msra.mxu0 0.0
        %3589 = vmatprep.subr.mxu0 0.0
        %3590 = vmatpush2.msra.mxu0 0.0
        %3591 = vmatprep.mubr.f32.mxu0 0.0
        %3592 = vmatmul.mubr.f32.gmra.mxu0 %v3454
        %v3593 = vpop.f32.mrf.mxu0
        %v3594 = vadd.f32 0.0, %v3593
        %v3595 = vpop.f32.mrf.mxu0
        %3596 = vdwg.mxu0
        %v3597 = vadd.f32 %v3433, %v3523
        %v3598 = vadd.f32 %v3434, %v3525
        %v3599 = vadd.f32 %v3435, %v3594
        %s3600 = scalar_lea.vmem %s1, 168
        %v3601 = vld [vmem:[%s3600] sm:$0xff]
        %3602 = vrot.lane.b32.xlu0 %v169, 31
        %v3603 = vpop.permute.xlu0 %3602
        %3604 = vrot.lane.b32.xlu0 %v170, 31
        %v3605 = vpop.permute.xlu0 %3604
        %3606 = vrot.lane.b32.xlu0 %v171, 31
        %v3607 = vpop.permute.xlu0 %3606
        %3608 = vrot.lane.b32.xlu0 %v172, 31
        %v3609 = vpop.permute.xlu0 %3608
        %vm3610 = vcmask 252928
        %v3611 = vsel %vm3610, %v3603, %v3605
        %v3612 = vsel %vm3610, %v3605, %v3607
        %v3613 = vsel %vm3610, %v3607, %v3609
        %v3618 = vsel %vm195, %v3601, 0
        %3620 = vmatprep.subr.mxu0 0.0
        %3621 = vmatpush1.msra.mxu0 0.0
        %3622 = vmatprep.subr.mxu0 0.0
        %3623 = vmatpush1.msra.mxu0 0.0
        %3624 = vmatprep.subr.mxu0 0.0
        %3625 = vmatpush1.msra.mxu0 0.0
        %3626 = vmatprep.subr.mxu0 0.0
        %3627 = vmatpush1.msra.mxu0 0.0
        %3628 = vmatprep.subr.mxu0 0.0
        %3629 = vmatpush1.msra.mxu0 0.0
        %3630 = vmatprep.subr.mxu0 0.0
        %3631 = vmatpush1.msra.mxu0 0.0
        %3632 = vmatprep.subr.mxu0 0.0
        %3633 = vmatpush1.msra.mxu0 0.0
        %3634 = vmatprep.subr.mxu0 0.0
        %3635 = vmatpush1.msra.mxu0 0.0
        %3636 = vmatprep.subr.mxu0 0.0
        %3637 = vmatpush1.msra.mxu0 0.0
        %3638 = vmatprep.subr.mxu0 0.0
        %3639 = vmatpush1.msra.mxu0 0.0
        %3640 = vmatprep.subr.mxu0 0.0
        %3641 = vmatpush1.msra.mxu0 0.0
        %3642 = vmatprep.subr.mxu0 0.0
        %3643 = vmatpush1.msra.mxu0 0.0
        %3644 = vmatprep.subr.mxu0 0.0
        %3645 = vmatpush1.msra.mxu0 0.0
        %3646 = vmatprep.subr.mxu0 0.0
        %3647 = vmatpush1.msra.mxu0 0.0
        %3648 = vmatprep.subr.mxu0 0.0
        %3649 = vmatpush1.msra.mxu0 0.0
        %3650 = vmatprep.subr.mxu0 %v3612
        %3651 = vmatpush1.msra.mxu0 %v3611
        %3652 = vmatprep.subr.mxu0 0.0
        %3653 = vmatpush2.msra.mxu0 0.0
        %3654 = vmatprep.subr.mxu0 0.0
        %3655 = vmatpush2.msra.mxu0 0.0
        %3656 = vmatprep.subr.mxu0 0.0
        %3657 = vmatpush2.msra.mxu0 0.0
        %3658 = vmatprep.subr.mxu0 0.0
        %3659 = vmatpush2.msra.mxu0 0.0
        %3660 = vmatprep.subr.mxu0 0.0
        %3661 = vmatpush2.msra.mxu0 0.0
        %3662 = vmatprep.subr.mxu0 0.0
        %3663 = vmatpush2.msra.mxu0 0.0
        %3664 = vmatprep.subr.mxu0 0.0
        %3665 = vmatpush2.msra.mxu0 0.0
        %3666 = vmatprep.subr.mxu0 0.0
        %3667 = vmatpush2.msra.mxu0 0.0
        %3668 = vmatprep.subr.mxu0 0.0
        %3669 = vmatpush2.msra.mxu0 0.0
        %3670 = vmatprep.subr.mxu0 0.0
        %3671 = vmatpush2.msra.mxu0 0.0
        %3672 = vmatprep.subr.mxu0 0.0
        %3673 = vmatpush2.msra.mxu0 0.0
        %3674 = vmatprep.subr.mxu0 0.0
        %3675 = vmatpush2.msra.mxu0 0.0
        %3676 = vmatprep.subr.mxu0 0.0
        %3677 = vmatpush2.msra.mxu0 0.0
        %3678 = vmatprep.subr.mxu0 0.0
        %3679 = vmatpush2.msra.mxu0 0.0
        %3680 = vmatprep.subr.mxu0 0.0
        %3681 = vmatpush2.msra.mxu0 0.0
        %3682 = vmatprep.subr.mxu0 0.0
        %3683 = vmatpush2.msra.mxu0 0.0
        %3684 = vmatprep.mubr.f32.mxu0 0.0
        %3685 = vmatmul.mubr.f32.gmra.mxu0 %v3618
        %v3686 = vpop.f32.mrf.mxu0
        %v3687 = vadd.f32 0.0, %v3686
        %v3688 = vpop.f32.mrf.mxu0
        %v3689 = vadd.f32 0.0, %v3688
        %3690 = vdwg.mxu0
        %3691 = vmatprep.subr.mxu0 0.0
        %3692 = vmatpush1.msra.mxu0 0.0
        %3693 = vmatprep.subr.mxu0 0.0
        %3694 = vmatpush1.msra.mxu0 0.0
        %3695 = vmatprep.subr.mxu0 0.0
        %3696 = vmatpush1.msra.mxu0 0.0
        %3697 = vmatprep.subr.mxu0 0.0
        %3698 = vmatpush1.msra.mxu0 0.0
        %3699 = vmatprep.subr.mxu0 0.0
        %3700 = vmatpush1.msra.mxu0 0.0
        %3701 = vmatprep.subr.mxu0 0.0
        %3702 = vmatpush1.msra.mxu0 0.0
        %3703 = vmatprep.subr.mxu0 0.0
        %3704 = vmatpush1.msra.mxu0 0.0
        %3705 = vmatprep.subr.mxu0 0.0
        %3706 = vmatpush1.msra.mxu0 0.0
        %3707 = vmatprep.subr.mxu0 0.0
        %3708 = vmatpush1.msra.mxu0 0.0
        %3709 = vmatprep.subr.mxu0 0.0
        %3710 = vmatpush1.msra.mxu0 0.0
        %3711 = vmatprep.subr.mxu0 0.0
        %3712 = vmatpush1.msra.mxu0 0.0
        %3713 = vmatprep.subr.mxu0 0.0
        %3714 = vmatpush1.msra.mxu0 0.0
        %3715 = vmatprep.subr.mxu0 0.0
        %3716 = vmatpush1.msra.mxu0 0.0
        %3717 = vmatprep.subr.mxu0 0.0
        %3718 = vmatpush1.msra.mxu0 0.0
        %3719 = vmatprep.subr.mxu0 0.0
        %3720 = vmatpush1.msra.mxu0 0.0
        %3721 = vmatprep.subr.mxu0 0.0
        %3722 = vmatpush1.msra.mxu0 %v3613
        %3723 = vmatprep.subr.mxu0 0.0
        %3724 = vmatpush2.msra.mxu0 0.0
        %3725 = vmatprep.subr.mxu0 0.0
        %3726 = vmatpush2.msra.mxu0 0.0
        %3727 = vmatprep.subr.mxu0 0.0
        %3728 = vmatpush2.msra.mxu0 0.0
        %3729 = vmatprep.subr.mxu0 0.0
        %3730 = vmatpush2.msra.mxu0 0.0
        %3731 = vmatprep.subr.mxu0 0.0
        %3732 = vmatpush2.msra.mxu0 0.0
        %3733 = vmatprep.subr.mxu0 0.0
        %3734 = vmatpush2.msra.mxu0 0.0
        %3735 = vmatprep.subr.mxu0 0.0
        %3736 = vmatpush2.msra.mxu0 0.0
        %3737 = vmatprep.subr.mxu0 0.0
        %3738 = vmatpush2.msra.mxu0 0.0
        %3739 = vmatprep.subr.mxu0 0.0
        %3740 = vmatpush2.msra.mxu0 0.0
        %3741 = vmatprep.subr.mxu0 0.0
        %3742 = vmatpush2.msra.mxu0 0.0
        %3743 = vmatprep.subr.mxu0 0.0
        %3744 = vmatpush2.msra.mxu0 0.0
        %3745 = vmatprep.subr.mxu0 0.0
        %3746 = vmatpush2.msra.mxu0 0.0
        %3747 = vmatprep.subr.mxu0 0.0
        %3748 = vmatpush2.msra.mxu0 0.0
        %3749 = vmatprep.subr.mxu0 0.0
        %3750 = vmatpush2.msra.mxu0 0.0
        %3751 = vmatprep.subr.mxu0 0.0
        %3752 = vmatpush2.msra.mxu0 0.0
        %3753 = vmatprep.subr.mxu0 0.0
        %3754 = vmatpush2.msra.mxu0 0.0
        %3755 = vmatprep.mubr.f32.mxu0 0.0
        %3756 = vmatmul.mubr.f32.gmra.mxu0 %v3618
        %v3757 = vpop.f32.mrf.mxu0
        %v3758 = vadd.f32 0.0, %v3757
        %v3759 = vpop.f32.mrf.mxu0
        %3760 = vdwg.mxu0
        %v3761 = vadd.f32 %v3597, %v3687
        %v3762 = vadd.f32 %v3598, %v3689
        %v3763 = vadd.f32 %v3599, %v3758
        %s3764 = scalar_lea.vmem %s1, 176
        %v3765 = vld [vmem:[%s3764] sm:$0xff]
        %3766 = vrot.lane.b32.xlu0 %v169, 30
        %v3767 = vpop.permute.xlu0 %3766
        %3768 = vrot.lane.b32.xlu0 %v170, 30
        %v3769 = vpop.permute.xlu0 %3768
        %3770 = vrot.lane.b32.xlu0 %v171, 30
        %v3771 = vpop.permute.xlu0 %3770
        %3772 = vrot.lane.b32.xlu0 %v172, 30
        %v3773 = vpop.permute.xlu0 %3772
        %vm3774 = vcmask 244736
        %v3775 = vsel %vm3774, %v3767, %v3769
        %v3776 = vsel %vm3774, %v3769, %v3771
        %v3777 = vsel %vm3774, %v3771, %v3773
        %v3782 = vsel %vm195, %v3765, 0
        %3784 = vmatprep.subr.mxu0 0.0
        %3785 = vmatpush1.msra.mxu0 0.0
        %3786 = vmatprep.subr.mxu0 0.0
        %3787 = vmatpush1.msra.mxu0 0.0
        %3788 = vmatprep.subr.mxu0 0.0
        %3789 = vmatpush1.msra.mxu0 0.0
        %3790 = vmatprep.subr.mxu0 0.0
        %3791 = vmatpush1.msra.mxu0 0.0
        %3792 = vmatprep.subr.mxu0 0.0
        %3793 = vmatpush1.msra.mxu0 0.0
        %3794 = vmatprep.subr.mxu0 0.0
        %3795 = vmatpush1.msra.mxu0 0.0
        %3796 = vmatprep.subr.mxu0 0.0
        %3797 = vmatpush1.msra.mxu0 0.0
        %3798 = vmatprep.subr.mxu0 0.0
        %3799 = vmatpush1.msra.mxu0 0.0
        %3800 = vmatprep.subr.mxu0 0.0
        %3801 = vmatpush1.msra.mxu0 0.0
        %3802 = vmatprep.subr.mxu0 0.0
        %3803 = vmatpush1.msra.mxu0 0.0
        %3804 = vmatprep.subr.mxu0 0.0
        %3805 = vmatpush1.msra.mxu0 0.0
        %3806 = vmatprep.subr.mxu0 0.0
        %3807 = vmatpush1.msra.mxu0 0.0
        %3808 = vmatprep.subr.mxu0 0.0
        %3809 = vmatpush1.msra.mxu0 0.0
        %3810 = vmatprep.subr.mxu0 0.0
        %3811 = vmatpush1.msra.mxu0 0.0
        %3812 = vmatprep.subr.mxu0 0.0
        %3813 = vmatpush1.msra.mxu0 0.0
        %3814 = vmatprep.subr.mxu0 %v3776
        %3815 = vmatpush1.msra.mxu0 %v3775
        %3816 = vmatprep.subr.mxu0 0.0
        %3817 = vmatpush2.msra.mxu0 0.0
        %3818 = vmatprep.subr.mxu0 0.0
        %3819 = vmatpush2.msra.mxu0 0.0
        %3820 = vmatprep.subr.mxu0 0.0
        %3821 = vmatpush2.msra.mxu0 0.0
        %3822 = vmatprep.subr.mxu0 0.0
        %3823 = vmatpush2.msra.mxu0 0.0
        %3824 = vmatprep.subr.mxu0 0.0
        %3825 = vmatpush2.msra.mxu0 0.0
        %3826 = vmatprep.subr.mxu0 0.0
        %3827 = vmatpush2.msra.mxu0 0.0
        %3828 = vmatprep.subr.mxu0 0.0
        %3829 = vmatpush2.msra.mxu0 0.0
        %3830 = vmatprep.subr.mxu0 0.0
        %3831 = vmatpush2.msra.mxu0 0.0
        %3832 = vmatprep.subr.mxu0 0.0
        %3833 = vmatpush2.msra.mxu0 0.0
        %3834 = vmatprep.subr.mxu0 0.0
        %3835 = vmatpush2.msra.mxu0 0.0
        %3836 = vmatprep.subr.mxu0 0.0
        %3837 = vmatpush2.msra.mxu0 0.0
        %3838 = vmatprep.subr.mxu0 0.0
        %3839 = vmatpush2.msra.mxu0 0.0
        %3840 = vmatprep.subr.mxu0 0.0
        %3841 = vmatpush2.msra.mxu0 0.0
        %3842 = vmatprep.subr.mxu0 0.0
        %3843 = vmatpush2.msra.mxu0 0.0
        %3844 = vmatprep.subr.mxu0 0.0
        %3845 = vmatpush2.msra.mxu0 0.0
        %3846 = vmatprep.subr.mxu0 0.0
        %3847 = vmatpush2.msra.mxu0 0.0
        %3848 = vmatprep.mubr.f32.mxu0 0.0
        %3849 = vmatmul.mubr.f32.gmra.mxu0 %v3782
        %v3850 = vpop.f32.mrf.mxu0
        %v3851 = vadd.f32 0.0, %v3850
        %v3852 = vpop.f32.mrf.mxu0
        %v3853 = vadd.f32 0.0, %v3852
        %3854 = vdwg.mxu0
        %3855 = vmatprep.subr.mxu0 0.0
        %3856 = vmatpush1.msra.mxu0 0.0
        %3857 = vmatprep.subr.mxu0 0.0
        %3858 = vmatpush1.msra.mxu0 0.0
        %3859 = vmatprep.subr.mxu0 0.0
        %3860 = vmatpush1.msra.mxu0 0.0
        %3861 = vmatprep.subr.mxu0 0.0
        %3862 = vmatpush1.msra.mxu0 0.0
        %3863 = vmatprep.subr.mxu0 0.0
        %3864 = vmatpush1.msra.mxu0 0.0
        %3865 = vmatprep.subr.mxu0 0.0
        %3866 = vmatpush1.msra.mxu0 0.0
        %3867 = vmatprep.subr.mxu0 0.0
        %3868 = vmatpush1.msra.mxu0 0.0
        %3869 = vmatprep.subr.mxu0 0.0
        %3870 = vmatpush1.msra.mxu0 0.0
        %3871 = vmatprep.subr.mxu0 0.0
        %3872 = vmatpush1.msra.mxu0 0.0
        %3873 = vmatprep.subr.mxu0 0.0
        %3874 = vmatpush1.msra.mxu0 0.0
        %3875 = vmatprep.subr.mxu0 0.0
        %3876 = vmatpush1.msra.mxu0 0.0
        %3877 = vmatprep.subr.mxu0 0.0
        %3878 = vmatpush1.msra.mxu0 0.0
        %3879 = vmatprep.subr.mxu0 0.0
        %3880 = vmatpush1.msra.mxu0 0.0
        %3881 = vmatprep.subr.mxu0 0.0
        %3882 = vmatpush1.msra.mxu0 0.0
        %3883 = vmatprep.subr.mxu0 0.0
        %3884 = vmatpush1.msra.mxu0 0.0
        %3885 = vmatprep.subr.mxu0 0.0
        %3886 = vmatpush1.msra.mxu0 %v3777
        %3887 = vmatprep.subr.mxu0 0.0
        %3888 = vmatpush2.msra.mxu0 0.0
        %3889 = vmatprep.subr.mxu0 0.0
        %3890 = vmatpush2.msra.mxu0 0.0
        %3891 = vmatprep.subr.mxu0 0.0
        %3892 = vmatpush2.msra.mxu0 0.0
        %3893 = vmatprep.subr.mxu0 0.0
        %3894 = vmatpush2.msra.mxu0 0.0
        %3895 = vmatprep.subr.mxu0 0.0
        %3896 = vmatpush2.msra.mxu0 0.0
        %3897 = vmatprep.subr.mxu0 0.0
        %3898 = vmatpush2.msra.mxu0 0.0
        %3899 = vmatprep.subr.mxu0 0.0
        %3900 = vmatpush2.msra.mxu0 0.0
        %3901 = vmatprep.subr.mxu0 0.0
        %3902 = vmatpush2.msra.mxu0 0.0
        %3903 = vmatprep.subr.mxu0 0.0
        %3904 = vmatpush2.msra.mxu0 0.0
        %3905 = vmatprep.subr.mxu0 0.0
        %3906 = vmatpush2.msra.mxu0 0.0
        %3907 = vmatprep.subr.mxu0 0.0
        %3908 = vmatpush2.msra.mxu0 0.0
        %3909 = vmatprep.subr.mxu0 0.0
        %3910 = vmatpush2.msra.mxu0 0.0
        %3911 = vmatprep.subr.mxu0 0.0
        %3912 = vmatpush2.msra.mxu0 0.0
        %3913 = vmatprep.subr.mxu0 0.0
        %3914 = vmatpush2.msra.mxu0 0.0
        %3915 = vmatprep.subr.mxu0 0.0
        %3916 = vmatpush2.msra.mxu0 0.0
        %3917 = vmatprep.subr.mxu0 0.0
        %3918 = vmatpush2.msra.mxu0 0.0
        %3919 = vmatprep.mubr.f32.mxu0 0.0
        %3920 = vmatmul.mubr.f32.gmra.mxu0 %v3782
        %v3921 = vpop.f32.mrf.mxu0
        %v3922 = vadd.f32 0.0, %v3921
        %v3923 = vpop.f32.mrf.mxu0
        %3924 = vdwg.mxu0
        %v3925 = vadd.f32 %v3761, %v3851
        %v3926 = vadd.f32 %v3762, %v3853
        %v3927 = vadd.f32 %v3763, %v3922
        %s3928 = scalar_lea.vmem %s1, 184
        %v3929 = vld [vmem:[%s3928] sm:$0xff]
        %3930 = vrot.lane.b32.xlu0 %v169, 29
        %v3931 = vpop.permute.xlu0 %3930
        %3932 = vrot.lane.b32.xlu0 %v170, 29
        %v3933 = vpop.permute.xlu0 %3932
        %3934 = vrot.lane.b32.xlu0 %v171, 29
        %v3935 = vpop.permute.xlu0 %3934
        %3936 = vrot.lane.b32.xlu0 %v172, 29
        %v3937 = vpop.permute.xlu0 %3936
        %vm3938 = vcmask 236544
        %v3939 = vsel %vm3938, %v3931, %v3933
        %v3940 = vsel %vm3938, %v3933, %v3935
        %v3941 = vsel %vm3938, %v3935, %v3937
        %v3946 = vsel %vm195, %v3929, 0
        %3948 = vmatprep.subr.mxu0 0.0
        %3949 = vmatpush1.msra.mxu0 0.0
        %3950 = vmatprep.subr.mxu0 0.0
        %3951 = vmatpush1.msra.mxu0 0.0
        %3952 = vmatprep.subr.mxu0 0.0
        %3953 = vmatpush1.msra.mxu0 0.0
        %3954 = vmatprep.subr.mxu0 0.0
        %3955 = vmatpush1.msra.mxu0 0.0
        %3956 = vmatprep.subr.mxu0 0.0
        %3957 = vmatpush1.msra.mxu0 0.0
        %3958 = vmatprep.subr.mxu0 0.0
        %3959 = vmatpush1.msra.mxu0 0.0
        %3960 = vmatprep.subr.mxu0 0.0
        %3961 = vmatpush1.msra.mxu0 0.0
        %3962 = vmatprep.subr.mxu0 0.0
        %3963 = vmatpush1.msra.mxu0 0.0
        %3964 = vmatprep.subr.mxu0 0.0
        %3965 = vmatpush1.msra.mxu0 0.0
        %3966 = vmatprep.subr.mxu0 0.0
        %3967 = vmatpush1.msra.mxu0 0.0
        %3968 = vmatprep.subr.mxu0 0.0
        %3969 = vmatpush1.msra.mxu0 0.0
        %3970 = vmatprep.subr.mxu0 0.0
        %3971 = vmatpush1.msra.mxu0 0.0
        %3972 = vmatprep.subr.mxu0 0.0
        %3973 = vmatpush1.msra.mxu0 0.0
        %3974 = vmatprep.subr.mxu0 0.0
        %3975 = vmatpush1.msra.mxu0 0.0
        %3976 = vmatprep.subr.mxu0 0.0
        %3977 = vmatpush1.msra.mxu0 0.0
        %3978 = vmatprep.subr.mxu0 %v3940
        %3979 = vmatpush1.msra.mxu0 %v3939
        %3980 = vmatprep.subr.mxu0 0.0
        %3981 = vmatpush2.msra.mxu0 0.0
        %3982 = vmatprep.subr.mxu0 0.0
        %3983 = vmatpush2.msra.mxu0 0.0
        %3984 = vmatprep.subr.mxu0 0.0
        %3985 = vmatpush2.msra.mxu0 0.0
        %3986 = vmatprep.subr.mxu0 0.0
        %3987 = vmatpush2.msra.mxu0 0.0
        %3988 = vmatprep.subr.mxu0 0.0
        %3989 = vmatpush2.msra.mxu0 0.0
        %3990 = vmatprep.subr.mxu0 0.0
        %3991 = vmatpush2.msra.mxu0 0.0
        %3992 = vmatprep.subr.mxu0 0.0
        %3993 = vmatpush2.msra.mxu0 0.0
        %3994 = vmatprep.subr.mxu0 0.0
        %3995 = vmatpush2.msra.mxu0 0.0
        %3996 = vmatprep.subr.mxu0 0.0
        %3997 = vmatpush2.msra.mxu0 0.0
        %3998 = vmatprep.subr.mxu0 0.0
        %3999 = vmatpush2.msra.mxu0 0.0
        %4000 = vmatprep.subr.mxu0 0.0
        %4001 = vmatpush2.msra.mxu0 0.0
        %4002 = vmatprep.subr.mxu0 0.0
        %4003 = vmatpush2.msra.mxu0 0.0
        %4004 = vmatprep.subr.mxu0 0.0
        %4005 = vmatpush2.msra.mxu0 0.0
        %4006 = vmatprep.subr.mxu0 0.0
        %4007 = vmatpush2.msra.mxu0 0.0
        %4008 = vmatprep.subr.mxu0 0.0
        %4009 = vmatpush2.msra.mxu0 0.0
        %4010 = vmatprep.subr.mxu0 0.0
        %4011 = vmatpush2.msra.mxu0 0.0
        %4012 = vmatprep.mubr.f32.mxu0 0.0
        %4013 = vmatmul.mubr.f32.gmra.mxu0 %v3946
        %v4014 = vpop.f32.mrf.mxu0
        %v4015 = vadd.f32 0.0, %v4014
        %v4016 = vpop.f32.mrf.mxu0
        %v4017 = vadd.f32 0.0, %v4016
        %4018 = vdwg.mxu0
        %4019 = vmatprep.subr.mxu0 0.0
        %4020 = vmatpush1.msra.mxu0 0.0
        %4021 = vmatprep.subr.mxu0 0.0
        %4022 = vmatpush1.msra.mxu0 0.0
        %4023 = vmatprep.subr.mxu0 0.0
        %4024 = vmatpush1.msra.mxu0 0.0
        %4025 = vmatprep.subr.mxu0 0.0
        %4026 = vmatpush1.msra.mxu0 0.0
        %4027 = vmatprep.subr.mxu0 0.0
        %4028 = vmatpush1.msra.mxu0 0.0
        %4029 = vmatprep.subr.mxu0 0.0
        %4030 = vmatpush1.msra.mxu0 0.0
        %4031 = vmatprep.subr.mxu0 0.0
        %4032 = vmatpush1.msra.mxu0 0.0
        %4033 = vmatprep.subr.mxu0 0.0
        %4034 = vmatpush1.msra.mxu0 0.0
        %4035 = vmatprep.subr.mxu0 0.0
        %4036 = vmatpush1.msra.mxu0 0.0
        %4037 = vmatprep.subr.mxu0 0.0
        %4038 = vmatpush1.msra.mxu0 0.0
        %4039 = vmatprep.subr.mxu0 0.0
        %4040 = vmatpush1.msra.mxu0 0.0
        %4041 = vmatprep.subr.mxu0 0.0
        %4042 = vmatpush1.msra.mxu0 0.0
        %4043 = vmatprep.subr.mxu0 0.0
        %4044 = vmatpush1.msra.mxu0 0.0
        %4045 = vmatprep.subr.mxu0 0.0
        %4046 = vmatpush1.msra.mxu0 0.0
        %4047 = vmatprep.subr.mxu0 0.0
        %4048 = vmatpush1.msra.mxu0 0.0
        %4049 = vmatprep.subr.mxu0 0.0
        %4050 = vmatpush1.msra.mxu0 %v3941
        %4051 = vmatprep.subr.mxu0 0.0
        %4052 = vmatpush2.msra.mxu0 0.0
        %4053 = vmatprep.subr.mxu0 0.0
        %4054 = vmatpush2.msra.mxu0 0.0
        %4055 = vmatprep.subr.mxu0 0.0
        %4056 = vmatpush2.msra.mxu0 0.0
        %4057 = vmatprep.subr.mxu0 0.0
        %4058 = vmatpush2.msra.mxu0 0.0
        %4059 = vmatprep.subr.mxu0 0.0
        %4060 = vmatpush2.msra.mxu0 0.0
        %4061 = vmatprep.subr.mxu0 0.0
        %4062 = vmatpush2.msra.mxu0 0.0
        %4063 = vmatprep.subr.mxu0 0.0
        %4064 = vmatpush2.msra.mxu0 0.0
        %4065 = vmatprep.subr.mxu0 0.0
        %4066 = vmatpush2.msra.mxu0 0.0
        %4067 = vmatprep.subr.mxu0 0.0
        %4068 = vmatpush2.msra.mxu0 0.0
        %4069 = vmatprep.subr.mxu0 0.0
        %4070 = vmatpush2.msra.mxu0 0.0
        %4071 = vmatprep.subr.mxu0 0.0
        %4072 = vmatpush2.msra.mxu0 0.0
        %4073 = vmatprep.subr.mxu0 0.0
        %4074 = vmatpush2.msra.mxu0 0.0
        %4075 = vmatprep.subr.mxu0 0.0
        %4076 = vmatpush2.msra.mxu0 0.0
        %4077 = vmatprep.subr.mxu0 0.0
        %4078 = vmatpush2.msra.mxu0 0.0
        %4079 = vmatprep.subr.mxu0 0.0
        %4080 = vmatpush2.msra.mxu0 0.0
        %4081 = vmatprep.subr.mxu0 0.0
        %4082 = vmatpush2.msra.mxu0 0.0
        %4083 = vmatprep.mubr.f32.mxu0 0.0
        %4084 = vmatmul.mubr.f32.gmra.mxu0 %v3946
        %v4085 = vpop.f32.mrf.mxu0
        %v4086 = vadd.f32 0.0, %v4085
        %v4087 = vpop.f32.mrf.mxu0
        %4088 = vdwg.mxu0
        %v4089 = vadd.f32 %v3925, %v4015
        %v4090 = vadd.f32 %v3926, %v4017
        %v4091 = vadd.f32 %v3927, %v4086
        %s4092 = scalar_lea.vmem %s1, 192
        %v4093 = vld [vmem:[%s4092] sm:$0xff]
        %4094 = vrot.lane.b32.xlu0 %v169, 28
        %v4095 = vpop.permute.xlu0 %4094
        %4096 = vrot.lane.b32.xlu0 %v170, 28
        %v4097 = vpop.permute.xlu0 %4096
        %4098 = vrot.lane.b32.xlu0 %v171, 28
        %v4099 = vpop.permute.xlu0 %4098
        %4100 = vrot.lane.b32.xlu0 %v172, 28
        %v4101 = vpop.permute.xlu0 %4100
        %vm4102 = vcmask 228352
        %v4103 = vsel %vm4102, %v4095, %v4097
        %v4104 = vsel %vm4102, %v4097, %v4099
        %v4105 = vsel %vm4102, %v4099, %v4101
        %v4110 = vsel %vm195, %v4093, 0
        %4112 = vmatprep.subr.mxu0 0.0
        %4113 = vmatpush1.msra.mxu0 0.0
        %4114 = vmatprep.subr.mxu0 0.0
        %4115 = vmatpush1.msra.mxu0 0.0
        %4116 = vmatprep.subr.mxu0 0.0
        %4117 = vmatpush1.msra.mxu0 0.0
        %4118 = vmatprep.subr.mxu0 0.0
        %4119 = vmatpush1.msra.mxu0 0.0
        %4120 = vmatprep.subr.mxu0 0.0
        %4121 = vmatpush1.msra.mxu0 0.0
        %4122 = vmatprep.subr.mxu0 0.0
        %4123 = vmatpush1.msra.mxu0 0.0
        %4124 = vmatprep.subr.mxu0 0.0
        %4125 = vmatpush1.msra.mxu0 0.0
        %4126 = vmatprep.subr.mxu0 0.0
        %4127 = vmatpush1.msra.mxu0 0.0
        %4128 = vmatprep.subr.mxu0 0.0
        %4129 = vmatpush1.msra.mxu0 0.0
        %4130 = vmatprep.subr.mxu0 0.0
        %4131 = vmatpush1.msra.mxu0 0.0
        %4132 = vmatprep.subr.mxu0 0.0
        %4133 = vmatpush1.msra.mxu0 0.0
        %4134 = vmatprep.subr.mxu0 0.0
        %4135 = vmatpush1.msra.mxu0 0.0
        %4136 = vmatprep.subr.mxu0 0.0
        %4137 = vmatpush1.msra.mxu0 0.0
        %4138 = vmatprep.subr.mxu0 0.0
        %4139 = vmatpush1.msra.mxu0 0.0
        %4140 = vmatprep.subr.mxu0 0.0
        %4141 = vmatpush1.msra.mxu0 0.0
        %4142 = vmatprep.subr.mxu0 %v4104
        %4143 = vmatpush1.msra.mxu0 %v4103
        %4144 = vmatprep.subr.mxu0 0.0
        %4145 = vmatpush2.msra.mxu0 0.0
        %4146 = vmatprep.subr.mxu0 0.0
        %4147 = vmatpush2.msra.mxu0 0.0
        %4148 = vmatprep.subr.mxu0 0.0
        %4149 = vmatpush2.msra.mxu0 0.0
        %4150 = vmatprep.subr.mxu0 0.0
        %4151 = vmatpush2.msra.mxu0 0.0
        %4152 = vmatprep.subr.mxu0 0.0
        %4153 = vmatpush2.msra.mxu0 0.0
        %4154 = vmatprep.subr.mxu0 0.0
        %4155 = vmatpush2.msra.mxu0 0.0
        %4156 = vmatprep.subr.mxu0 0.0
        %4157 = vmatpush2.msra.mxu0 0.0
        %4158 = vmatprep.subr.mxu0 0.0
        %4159 = vmatpush2.msra.mxu0 0.0
        %4160 = vmatprep.subr.mxu0 0.0
        %4161 = vmatpush2.msra.mxu0 0.0
        %4162 = vmatprep.subr.mxu0 0.0
        %4163 = vmatpush2.msra.mxu0 0.0
        %4164 = vmatprep.subr.mxu0 0.0
        %4165 = vmatpush2.msra.mxu0 0.0
        %4166 = vmatprep.subr.mxu0 0.0
        %4167 = vmatpush2.msra.mxu0 0.0
        %4168 = vmatprep.subr.mxu0 0.0
        %4169 = vmatpush2.msra.mxu0 0.0
        %4170 = vmatprep.subr.mxu0 0.0
        %4171 = vmatpush2.msra.mxu0 0.0
        %4172 = vmatprep.subr.mxu0 0.0
        %4173 = vmatpush2.msra.mxu0 0.0
        %4174 = vmatprep.subr.mxu0 0.0
        %4175 = vmatpush2.msra.mxu0 0.0
        %4176 = vmatprep.mubr.f32.mxu0 0.0
        %4177 = vmatmul.mubr.f32.gmra.mxu0 %v4110
        %v4178 = vpop.f32.mrf.mxu0
        %v4179 = vadd.f32 0.0, %v4178
        %v4180 = vpop.f32.mrf.mxu0
        %v4181 = vadd.f32 0.0, %v4180
        %4182 = vdwg.mxu0
        %4183 = vmatprep.subr.mxu0 0.0
        %4184 = vmatpush1.msra.mxu0 0.0
        %4185 = vmatprep.subr.mxu0 0.0
        %4186 = vmatpush1.msra.mxu0 0.0
        %4187 = vmatprep.subr.mxu0 0.0
        %4188 = vmatpush1.msra.mxu0 0.0
        %4189 = vmatprep.subr.mxu0 0.0
        %4190 = vmatpush1.msra.mxu0 0.0
        %4191 = vmatprep.subr.mxu0 0.0
        %4192 = vmatpush1.msra.mxu0 0.0
        %4193 = vmatprep.subr.mxu0 0.0
        %4194 = vmatpush1.msra.mxu0 0.0
        %4195 = vmatprep.subr.mxu0 0.0
        %4196 = vmatpush1.msra.mxu0 0.0
        %4197 = vmatprep.subr.mxu0 0.0
        %4198 = vmatpush1.msra.mxu0 0.0
        %4199 = vmatprep.subr.mxu0 0.0
        %4200 = vmatpush1.msra.mxu0 0.0
        %4201 = vmatprep.subr.mxu0 0.0
        %4202 = vmatpush1.msra.mxu0 0.0
        %4203 = vmatprep.subr.mxu0 0.0
        %4204 = vmatpush1.msra.mxu0 0.0
        %4205 = vmatprep.subr.mxu0 0.0
        %4206 = vmatpush1.msra.mxu0 0.0
        %4207 = vmatprep.subr.mxu0 0.0
        %4208 = vmatpush1.msra.mxu0 0.0
        %4209 = vmatprep.subr.mxu0 0.0
        %4210 = vmatpush1.msra.mxu0 0.0
        %4211 = vmatprep.subr.mxu0 0.0
        %4212 = vmatpush1.msra.mxu0 0.0
        %4213 = vmatprep.subr.mxu0 0.0
        %4214 = vmatpush1.msra.mxu0 %v4105
        %4215 = vmatprep.subr.mxu0 0.0
        %4216 = vmatpush2.msra.mxu0 0.0
        %4217 = vmatprep.subr.mxu0 0.0
        %4218 = vmatpush2.msra.mxu0 0.0
        %4219 = vmatprep.subr.mxu0 0.0
        %4220 = vmatpush2.msra.mxu0 0.0
        %4221 = vmatprep.subr.mxu0 0.0
        %4222 = vmatpush2.msra.mxu0 0.0
        %4223 = vmatprep.subr.mxu0 0.0
        %4224 = vmatpush2.msra.mxu0 0.0
        %4225 = vmatprep.subr.mxu0 0.0
        %4226 = vmatpush2.msra.mxu0 0.0
        %4227 = vmatprep.subr.mxu0 0.0
        %4228 = vmatpush2.msra.mxu0 0.0
        %4229 = vmatprep.subr.mxu0 0.0
        %4230 = vmatpush2.msra.mxu0 0.0
        %4231 = vmatprep.subr.mxu0 0.0
        %4232 = vmatpush2.msra.mxu0 0.0
        %4233 = vmatprep.subr.mxu0 0.0
        %4234 = vmatpush2.msra.mxu0 0.0
        %4235 = vmatprep.subr.mxu0 0.0
        %4236 = vmatpush2.msra.mxu0 0.0
        %4237 = vmatprep.subr.mxu0 0.0
        %4238 = vmatpush2.msra.mxu0 0.0
        %4239 = vmatprep.subr.mxu0 0.0
        %4240 = vmatpush2.msra.mxu0 0.0
        %4241 = vmatprep.subr.mxu0 0.0
        %4242 = vmatpush2.msra.mxu0 0.0
        %4243 = vmatprep.subr.mxu0 0.0
        %4244 = vmatpush2.msra.mxu0 0.0
        %4245 = vmatprep.subr.mxu0 0.0
        %4246 = vmatpush2.msra.mxu0 0.0
        %4247 = vmatprep.mubr.f32.mxu0 0.0
        %4248 = vmatmul.mubr.f32.gmra.mxu0 %v4110
        %v4249 = vpop.f32.mrf.mxu0
        %v4250 = vadd.f32 0.0, %v4249
        %v4251 = vpop.f32.mrf.mxu0
        %4252 = vdwg.mxu0
        %v4253 = vadd.f32 %v4089, %v4179
        %v4254 = vadd.f32 %v4090, %v4181
        %v4255 = vadd.f32 %v4091, %v4250
        %v4256 = vld [vmem:[%s2] sm:$0xff]
        %4258 = vset.pattern.permute.xlu0 0
        %4259 = vperm.xlu0 %4258, %v4256
        %v4260 = vpop.permute.xlu0 %4259
        %v4262 = vadd.f32 %v4253, %v4260
        %v4263 = vadd.f32 %v4254, %v4260
        %v4264 = vadd.f32 %v4255, %v4260
        %4265 = vst [vmem:[%s163] sm:$0xff] %v4262
        %4266 = vst [vmem:[%s163 + $0x8] sm:$0xff] %v4263
        %4267 = vst [vmem:[%s163 + $0x10] sm:$0xff] %v4264
        %s4268 = sand.u32 %s93, 1
        %s4269 = scalar_lea.sflag [#allocation3], %s4268
        %s4270 = sand.u32 %s93, 1
        %s4271 = smul.addr %s4270, 24
        %s4272 = scalar_lea.vmem [#allocation2], %s4271
        // Predicated region
        $region33: #{tpu_custom_call.1} parent=31 // pred_check
          %p4273 = pneg %p103
        $region34: #{tpu_custom_call.1} parent=31 // pred_check_branch
          %4275 = sbr.rel (%p4273) target = $region36
        $region35: #{tpu_custom_call.1} parent=31 // pred_region
          %s4277 = ssub.s32 384, 384
          %4278 = vsyncadd %s4269, %s4277
          %s4279 = smul.addr %s17, 3
          %s4280 = smul.addr %s4279, 128
          %s4281 = scalar_lea.hbm %s3, %s4280
          %s4283 = sshll.u32 %s4272, 4
          %s4284 = int_to_ptr.vmem [resolvable:$true] %s4283
          %4286 = dma.vmem_to_hbm [thread:$0]  %s4284, 384, %s4281, %s4269
        $region36: #{tpu_custom_call.1} parent=31 // pred_fallthru
          _
      $region32: #{tpu_custom_call.1} parent=5 // pred_fallthru
        _
      %p4287 = scmp.le.s32.totalorder 2, %s12
      // Predicated region
      $region37: #{tpu_custom_call.1} parent=5 // pred_check
        %p4288 = pneg %p4287
      $region38: #{tpu_custom_call.1} parent=5 // pred_check_branch
        %4290 = sbr.rel (%p4288) target = $region40
      $region39: #{tpu_custom_call.1} parent=5 // pred_region
        %s4291 = ssub.s32 %s12, 2
        // Predicated region
        $region41: #{tpu_custom_call.1} parent=39 // pred_check
          %p4292 = pneg %p109
        $region42: #{tpu_custom_call.1} parent=39 // pred_check_branch
          %4294 = sbr.rel (%p4292) target = $region44
        $region43: #{tpu_custom_call.1} parent=39 // pred_region
          %s4295 = sand.u32 %s94, 1
          %s4296 = scalar_lea.sflag [#allocation3], %s4295
          %s4297 = sand.u32 %s94, 1
          %s4298 = smul.addr %s4297, 24
          %s4299 = scalar_lea.vmem [#allocation2], %s4298
          %4300 = dma.done %s4296, 384
        $region44: #{tpu_custom_call.1} parent=39 // pred_fallthru
          _
      $region40: #{tpu_custom_call.1} parent=5 // pred_fallthru
        _
    $region6: #{tpu_custom_call.1} parent=1 // loop_footer
      %s16 = sadd.s32 1, %s12
    $region7: #{tpu_custom_call.1} parent=1 // loop_footer_branch
      %11 = sbr.rel target = $region3
    $region8: #{tpu_custom_call.1} parent=1 // loop_exit
      _
    %4301 = vsyncpa [#allocation3], 1
    %s4302 = scalar_lea.sflag [#allocation3], 1
    %4303 = vsyncpa %s4302, 1

</llo_original>
